<compile_context>
chip_gen: v6e
topology: v6e:2x2x1
jax: 0.10.0
libtpu: 0.0.40
codegen_flags: <defaults>
</compile_context>

<pallas_src>
import jax
import jax.numpy as jnp
import numpy as np
from jax.experimental import pallas as pl
from jax.experimental.pallas import tpu as pltpu


def _silu(x):
    # sigmoid's reciprocal rides the EUP slot instead of the (saturating) VPU.
    return x * jax.nn.sigmoid(x)


# ----------------------- fused GSConv kernel (per (batch, H-tile)) -----------------
def _make_gsconv_kernel(TH, W, C1, Cc):
    a = (Cc + 1) // 2                                   # x1 channels in first half
    if Cc % 2 == 0:
        x2_first, x2_second = (0, a), (a, Cc)
    else:
        x2_first, x2_second = (a, Cc), (0, a)

    def kernel(xc_ref, xt_ref, xb_ref, w1_ref, b1_ref, w2_ref, b2_ref,
               o_ref, x1pad_ref):
        ht = pl.program_id(1)
        nht = pl.num_programs(1)

        w1 = w1_ref[...]                                # (C1, Cc)
        b1 = b1_ref[...]                                # (1, Cc)

        def cv1(v):                                     # 1x1 conv + BN + SiLU (MXU)
            rows = v.shape[0]
            h = jnp.dot(v.reshape(rows * W, C1), w1,
                        preferred_element_type=jnp.float32) + b1
            return _silu(h).reshape(rows, W, Cc)

        x1_ctr = cv1(xc_ref[0])                         # (TH, W, Cc) tile interior
        x1_top = cv1(xt_ref[0])                         # (2, W, Cc)  halo above
        x1_bot = cv1(xb_ref[0])                         # (2, W, Cc)  halo below

        # ---- zero-padded x1 tile in VMEM scratch (5x5 halo handled in-kernel) ----
        x1pad_ref[0:2, 2:2 + W, :] = x1_top
        x1pad_ref[2:2 + TH, 2:2 + W, :] = x1_ctr
        x1pad_ref[TH + 2:TH + 4, 2:2 + W, :] = x1_bot
        zc = jnp.zeros((TH + 4, 2, Cc), jnp.float32)
        x1pad_ref[:, 0:2, :] = zc                       # left W padding
        x1pad_ref[:, W + 2:W + 4, :] = zc               # right W padding

        @pl.when(ht == 0)                               # top image border
        def _():
            x1pad_ref[0:2, :, :] = jnp.zeros((2, W + 4, Cc), jnp.float32)

        @pl.when(ht == nht - 1)                         # bottom image border
        def _():
            x1pad_ref[TH + 2:TH + 4, :, :] = jnp.zeros((2, W + 4, Cc), jnp.float32)

        xp = x1pad_ref[...]                             # (TH+4, W+4, Cc)

        # ---- cv2: depthwise 5x5 + BN + SiLU on the tile (VPU) ----
        w2 = w2_ref[...]                                # (5, 5, Cc)
        b2 = b2_ref[...].reshape(1, 1, Cc)
        acc = jnp.zeros((TH, W, Cc), jnp.float32)
        for di in range(5):
            for dj in range(5):
                acc = acc + xp[di:di + TH, dj:dj + W, :] * w2[di, dj, :].reshape(1, 1, Cc)
        x2_t = _silu(acc + b2)                          # (TH, W, Cc)
        x1_t = x1_ctr                                   # (TH, W, Cc)

        # ---- fused concat + channel shuffle: the shuffle permutation was folded
        #      into the weights, so the output is 4 contiguous channel slabs.
        def put(lo, hi, v):
            if hi > lo:                                 # static widths
                o_ref[:, :, :, lo:hi] = v[None].astype(o_ref.dtype)

        put(0, a, x1_t[..., 0:a])
        f0, f1 = x2_first
        put(a, a + (f1 - f0), x2_t[..., f0:f1])
        put(Cc, Cc + (Cc - a), x1_t[..., a:Cc])
        s0, s1 = x2_second
        put(2 * Cc - (s1 - s0), 2 * Cc, x2_t[..., s0:s1])

    return kernel


# ------------------------------- parameter setup -----------------------------------
def init_gsconv_params(key, c1, c2, eps=1e-3):
    """Deterministic synthetic params: conv weights + BN(gamma, beta, mean, var),
    folded (eval mode) into per-kernel weight/bias."""
    c_ = c2 // 2
    ks = jax.random.split(key, 10)
    # cv1: Conv2d(c1, c_, 1, 1, 0, bias=False) + BN(c_) + SiLU
    w1 = jax.random.normal(ks[0], (c_, c1, 1, 1), jnp.float32) * 0.2
    g1 = 1.0 + 0.1 * jax.random.normal(ks[1], (c_,), jnp.float32)
    be1 = 0.1 * jax.random.normal(ks[2], (c_,), jnp.float32)
    m1 = 0.1 * jax.random.normal(ks[3], (c_,), jnp.float32)
    v1 = jnp.abs(jax.random.normal(ks[4], (c_,), jnp.float32)) + 0.5
    # cv2: Conv2d(c_, c_, 5, 1, 2, groups=c_, bias=False) + BN(c_) + SiLU
    w2 = jax.random.normal(ks[5], (c_, 1, 5, 5), jnp.float32) * 0.2
    g2 = 1.0 + 0.1 * jax.random.normal(ks[6], (c_,), jnp.float32)
    be2 = 0.1 * jax.random.normal(ks[7], (c_,), jnp.float32)
    m2 = 0.1 * jax.random.normal(ks[8], (c_,), jnp.float32)
    v2 = jnp.abs(jax.random.normal(ks[9], (c_,), jnp.float32)) + 0.5

    s1 = g1 / jnp.sqrt(v1 + eps)
    s2 = g2 / jnp.sqrt(v2 + eps)
    w1f = (w1[:, :, 0, 0] * s1[:, None]).T                        # (c1, c_)
    b1f = (be1 - m1 * s1)[None, :]                                # (1, c_)
    w2f = jnp.transpose(w2[:, 0], (1, 2, 0)) * s2[None, None, :]  # (5, 5, c_)
    b2f = (be2 - m2 * s2)[None, None, :]                          # (1, 1, c_)
    return w1f, b1f, w2f, b2f


# --------------------------------- GSConv forward ----------------------------------
def gsconv_forward(x_nchw, params):
    w1f, b1f, w2f, b2f = params
    B, C1, H, W = x_nchw.shape
    Cc = w1f.shape[1]
    if H % 2 != 0:
        raise NotImplementedError("GSConv Pallas kernel requires even H")

    # Fold the GSConv channel shuffle into the folded-BN weights: even-first
    # permutation of cv1's output channels and of cv2's per-channel filters.
    # (One-time, tiny; lets the kernel write contiguous output channel slabs.)
    perm = np.concatenate([np.arange(0, Cc, 2), np.arange(1, Cc, 2)])
    w1p = w1f[:, perm]                    # (C1, Cc)
    b1p = b1f[:, perm]                    # (1, Cc)
    w2p = w2f[:, :, perm]                 # (5, 5, Cc)
    b2p = b2f[0][:, perm]                 # (1, Cc)

    # Row-tile selection: multiple tiles for pipelining / parallel sharding.
    TH = H
    for cand in (16, 8):
        if H % cand == 0 and H // cand >= 2:
            TH = cand
            break
    nht = H // TH
    half = TH // 2

    x_nhwc = jnp.transpose(x_nchw, (0, 2, 3, 1))        # NCHW -> NHWC (channels on lanes)

    kernel = _make_gsconv_kernel(TH, W, C1, Cc)

    in_specs = [
        # the tile itself
        pl.BlockSpec((1, TH, W, C1), lambda b, h: (b, h, 0, 0)),
        # 2-row halo above (clamped at the border; masked to zero in-kernel)
        pl.BlockSpec((1, 2, W, C1),
                     lambda b, h: (b, jnp.maximum(h * half - 1, 0), 0, 0)),
        # 2-row halo below (clamped at the border; masked to zero in-kernel)
        pl.BlockSpec((1, 2, W, C1),
                     lambda b, h: (b, jnp.minimum((h + 1) * half, H // 2 - 1), 0, 0)),
        pl.BlockSpec((C1, Cc), lambda b, h: (0, 0)),
        pl.BlockSpec((1, Cc), lambda b, h: (0, 0)),
        pl.BlockSpec((5, 5, Cc), lambda b, h: (0, 0, 0)),
        pl.BlockSpec((1, Cc), lambda b, h: (0, 0)),
    ]
    out_specs = pl.BlockSpec((1, TH, W, 2 * Cc), lambda b, h: (b, h, 0, 0))

    # VMEM budget from the chosen tiles (double-buffered blocks + scratch) + headroom.
    blk_bytes = 4 * (TH * W * C1 + 2 * (2 * W * C1) + TH * W * 2 * Cc)
    wt_bytes = 4 * (C1 * Cc + 27 * Cc)
    scratch_bytes = 4 * (TH + 4) * (W + 4) * Cc
    vmem_limit = int(min(max(4 * (blk_bytes + wt_bytes) + 2 * scratch_bytes,
                             16 * 1024 * 1024),
                         64 * 1024 * 1024))

    out_nhwc = pl.pallas_call(
        kernel,
        out_shape=jax.ShapeDtypeStruct((B, H, W, 2 * Cc), jnp.float32),
        grid_spec=pltpu.PrefetchScalarGridSpec(
            num_scalar_prefetch=0,
            grid=(B, nht),
            in_specs=in_specs,
            out_specs=out_specs,
            scratch_shapes=[pltpu.VMEM((TH + 4, W + 4, Cc), jnp.float32)],
        ),
        compiler_params=pltpu.CompilerParams(
            dimension_semantics=("parallel", "parallel"),
            vmem_limit_bytes=vmem_limit,
        ),
    )(x_nhwc, x_nhwc, x_nhwc, w1p, b1p, w2p, b2p)

    return jnp.transpose(out_nhwc, (0, 3, 1, 2))        # back to NCHW


# ----------------------------- pure-JAX reference (check) --------------------------
def gsconv_ref(x, params):
    w1f, b1f, w2f, b2f = params
    c_ = w1f.shape[1]
    w1 = jnp.transpose(w1f, (1, 0))[:, :, None, None]             # (c_, c1, 1, 1)
    y1 = jax.lax.conv_general_dilated(
        x, w1, (1, 1), 'VALID', dimension_numbers=('NCHW', 'OIHW', 'NCHW'))
    y1 = y1 + b1f[0][None, :, None, None]
    y1 = y1 * jax.nn.sigmoid(y1)
    w2 = jnp.transpose(w2f, (2, 0, 1))[:, None]                   # (c_, 1, 5, 5)
    y2 = jax.lax.conv_general_dilated(
        y1, w2, (1, 1), ((2, 2), (2, 2)),
        dimension_numbers=('NCHW', 'OIHW', 'NCHW'), feature_group_count=c_)
    y2 = y2 + b2f[0, 0][None, :, None, None]
    y2 = y2 * jax.nn.sigmoid(y2)
    x2 = jnp.concatenate([y1, y2], axis=1)
    b, n, h, w = x2.shape
    y = x2.reshape(b * n // 2, 2, h * w).transpose(1, 0, 2).reshape(2, b, n // 2, h, w)
    return jnp.concatenate([y[0], y[1]], axis=1)


if __name__ == "__main__":
    key = jax.random.PRNGKey(0)
    kx, kp = jax.random.split(key)
    c1, c2 = 4, 8
    x = jax.random.normal(kx, (2, c1, 16, 16), jnp.float32)
    params = init_gsconv_params(kp, c1, c2)

    out = gsconv_forward(x, params)
    out = jax.block_until_ready(out)

    ref = gsconv_ref(x, params)
    assert out.shape == (2, c2, 16, 16), out.shape
    err = float(jnp.max(jnp.abs(out - ref)))
    assert jnp.allclose(out, ref, atol=2e-3, rtol=2e-3), err
    print("KERNEL_OK")
</pallas_src>

<mosaic_0001>
module attributes {stable_mosaic.version = 11 : i64} {
  func.func @kernel(%arg0: i32, %arg1: i32, %arg2: memref<1x8x16x4xf32, #tpu.memory_space<vmem>>, %arg3: memref<1x2x16x4xf32, #tpu.memory_space<vmem>>, %arg4: memref<1x2x16x4xf32, #tpu.memory_space<vmem>>, %arg5: memref<4x4xf32, #tpu.memory_space<vmem>>, %arg6: memref<1x4xf32, #tpu.memory_space<vmem>>, %arg7: memref<5x5x4xf32, #tpu.memory_space<vmem>>, %arg8: memref<1x4xf32, #tpu.memory_space<vmem>>, %arg9: memref<1x8x16x8xf32, #tpu.memory_space<vmem>>, %arg10: memref<12x20x4xf32, #tpu.memory_space<vmem>>) attributes {dimension_semantics = [#tpu.dimension_semantics<parallel>, #tpu.dimension_semantics<parallel>], iteration_bounds = array<i64: 2, 2>, scalar_prefetch = 0 : i64, scratch_operands = 1 : i64, tpu.core_type = #tpu.core_type<tc>, window_params = [{transform_indices = @transform_0, window_bounds = array<i64: 1, 8, 16, 4>}, {transform_indices = @transform_1, window_bounds = array<i64: 1, 2, 16, 4>}, {transform_indices = @transform_2, window_bounds = array<i64: 1, 2, 16, 4>}, {pipeline_mode = #tpu.pipeline_mode<synchronous>, transform_indices = @transform_3, window_bounds = array<i64: 4, 4>}, {pipeline_mode = #tpu.pipeline_mode<synchronous>, transform_indices = @transform_4, window_bounds = array<i64: 1, 4>}, {pipeline_mode = #tpu.pipeline_mode<synchronous>, transform_indices = @transform_5, window_bounds = array<i64: 5, 5, 4>}, {pipeline_mode = #tpu.pipeline_mode<synchronous>, transform_indices = @transform_6, window_bounds = array<i64: 1, 4>}, {transform_indices = @transform_7, window_bounds = array<i64: 1, 8, 16, 8>}]} {
    %c0 = arith.constant 0 : index
    %c0_0 = arith.constant 0 : index
    %0 = vector.load %arg5[%c0, %c0_0] : memref<4x4xf32, #tpu.memory_space<vmem>>, vector<4x4xf32>
    %c0_1 = arith.constant 0 : index
    %c0_2 = arith.constant 0 : index
    %1 = vector.load %arg6[%c0_1, %c0_2] : memref<1x4xf32, #tpu.memory_space<vmem>>, vector<1x4xf32>
    %c0_3 = arith.constant 0 : index
    %c0_4 = arith.constant 0 : index
    %c0_5 = arith.constant 0 : index
    %c0_6 = arith.constant 0 : index
    %2 = vector.load %arg2[%c0_3, %c0_4, %c0_5, %c0_6] : memref<1x8x16x4xf32, #tpu.memory_space<vmem>>, vector<1x8x16x4xf32>
    %3 = vector.shape_cast %2 : vector<1x8x16x4xf32> to vector<8x16x4xf32>
    %4 = vector.shape_cast %3 : vector<8x16x4xf32> to vector<128x4xf32>
    %cst = arith.constant dense<0.000000e+00> : vector<128x4xf32>
    %5 = tpu.matmul %4, %0, %cst {dimension_numbers = #tpu.dot_dimension_numbers<[1], [0], [0], [1], [0, 0, 1, 1], [], []>} : vector<128x4xf32>, vector<4x4xf32>, vector<128x4xf32> -> vector<128x4xf32>
    %6 = vector.broadcast %1 : vector<1x4xf32> to vector<128x4xf32>
    %7 = arith.addf %5, %6 : vector<128x4xf32>
    %8 = arith.negf %7 : vector<128x4xf32>
    %9 = math.exp %8 : vector<128x4xf32>
    %cst_7 = arith.constant 1.000000e+00 : f32
    %10 = vector.broadcast %cst_7 : f32 to vector<128x4xf32>
    %11 = arith.addf %10, %9 : vector<128x4xf32>
    %12 = arith.divf %10, %11 : vector<128x4xf32>
    %13 = arith.mulf %7, %12 : vector<128x4xf32>
    %14 = vector.shape_cast %13 : vector<128x4xf32> to vector<8x16x4xf32>
    %c0_8 = arith.constant 0 : index
    %c0_9 = arith.constant 0 : index
    %c0_10 = arith.constant 0 : index
    %c0_11 = arith.constant 0 : index
    %15 = vector.load %arg3[%c0_8, %c0_9, %c0_10, %c0_11] : memref<1x2x16x4xf32, #tpu.memory_space<vmem>>, vector<1x2x16x4xf32>
    %16 = vector.shape_cast %15 : vector<1x2x16x4xf32> to vector<2x16x4xf32>
    %17 = vector.shape_cast %16 : vector<2x16x4xf32> to vector<32x4xf32>
    %cst_12 = arith.constant dense<0.000000e+00> : vector<32x4xf32>
    %18 = tpu.matmul %17, %0, %cst_12 {dimension_numbers = #tpu.dot_dimension_numbers<[1], [0], [0], [1], [0, 0, 1, 1], [], []>} : vector<32x4xf32>, vector<4x4xf32>, vector<32x4xf32> -> vector<32x4xf32>
    %19 = vector.broadcast %1 : vector<1x4xf32> to vector<32x4xf32>
    %20 = arith.addf %18, %19 : vector<32x4xf32>
    %21 = arith.negf %20 : vector<32x4xf32>
    %22 = math.exp %21 : vector<32x4xf32>
    %cst_13 = arith.constant 1.000000e+00 : f32
    %23 = vector.broadcast %cst_13 : f32 to vector<32x4xf32>
    %24 = arith.addf %23, %22 : vector<32x4xf32>
    %25 = arith.divf %23, %24 : vector<32x4xf32>
    %26 = arith.mulf %20, %25 : vector<32x4xf32>
    %27 = vector.shape_cast %26 : vector<32x4xf32> to vector<2x16x4xf32>
    %c0_14 = arith.constant 0 : index
    %c0_15 = arith.constant 0 : index
    %c0_16 = arith.constant 0 : index
    %c0_17 = arith.constant 0 : index
    %28 = vector.load %arg4[%c0_14, %c0_15, %c0_16, %c0_17] : memref<1x2x16x4xf32, #tpu.memory_space<vmem>>, vector<1x2x16x4xf32>
    %29 = vector.shape_cast %28 : vector<1x2x16x4xf32> to vector<2x16x4xf32>
    %30 = vector.shape_cast %29 : vector<2x16x4xf32> to vector<32x4xf32>
    %cst_18 = arith.constant dense<0.000000e+00> : vector<32x4xf32>
    %31 = tpu.matmul %30, %0, %cst_18 {dimension_numbers = #tpu.dot_dimension_numbers<[1], [0], [0], [1], [0, 0, 1, 1], [], []>} : vector<32x4xf32>, vector<4x4xf32>, vector<32x4xf32> -> vector<32x4xf32>
    %32 = vector.broadcast %1 : vector<1x4xf32> to vector<32x4xf32>
    %33 = arith.addf %31, %32 : vector<32x4xf32>
    %34 = arith.negf %33 : vector<32x4xf32>
    %35 = math.exp %34 : vector<32x4xf32>
    %cst_19 = arith.constant 1.000000e+00 : f32
    %36 = vector.broadcast %cst_19 : f32 to vector<32x4xf32>
    %37 = arith.addf %36, %35 : vector<32x4xf32>
    %38 = arith.divf %36, %37 : vector<32x4xf32>
    %39 = arith.mulf %33, %38 : vector<32x4xf32>
    %40 = vector.shape_cast %39 : vector<32x4xf32> to vector<2x16x4xf32>
    %c0_20 = arith.constant 0 : index
    %c2 = arith.constant 2 : index
    %c0_21 = arith.constant 0 : index
    %41 = vector.load %arg10[%c0_20, %c2, %c0_21] : memref<12x20x4xf32, #tpu.memory_space<vmem>>, vector<2x16x4xf32>
    tpu.vector_store %arg10[%c0_20, %c2, %c0_21], %27 {strides = array<i32>} : memref<12x20x4xf32, #tpu.memory_space<vmem>>, vector<2x16x4xf32>,
    %c2_22 = arith.constant 2 : index
    %c2_23 = arith.constant 2 : index
    %c0_24 = arith.constant 0 : index
    %42 = vector.load %arg10[%c2_22, %c2_23, %c0_24] : memref<12x20x4xf32, #tpu.memory_space<vmem>>, vector<8x16x4xf32>
    tpu.vector_store %arg10[%c2_22, %c2_23, %c0_24], %14 {strides = array<i32>} : memref<12x20x4xf32, #tpu.memory_space<vmem>>, vector<8x16x4xf32>,
    %c10 = arith.constant 10 : index
    %c2_25 = arith.constant 2 : index
    %c0_26 = arith.constant 0 : index
    %43 = vector.load %arg10[%c10, %c2_25, %c0_26] : memref<12x20x4xf32, #tpu.memory_space<vmem>>, vector<2x16x4xf32>
    tpu.vector_store %arg10[%c10, %c2_25, %c0_26], %40 {strides = array<i32>} : memref<12x20x4xf32, #tpu.memory_space<vmem>>, vector<2x16x4xf32>,
    %cst_27 = arith.constant 0.000000e+00 : f32
    %44 = vector.broadcast %cst_27 : f32 to vector<12x2x4xf32>
    %c0_28 = arith.constant 0 : index
    %c0_29 = arith.constant 0 : index
    %c0_30 = arith.constant 0 : index
    %45 = vector.load %arg10[%c0_28, %c0_29, %c0_30] : memref<12x20x4xf32, #tpu.memory_space<vmem>>, vector<12x2x4xf32>
    tpu.vector_store %arg10[%c0_28, %c0_29, %c0_30], %44 {strides = array<i32>} : memref<12x20x4xf32, #tpu.memory_space<vmem>>, vector<12x2x4xf32>,
    %c0_31 = arith.constant 0 : index
    %c18 = arith.constant 18 : index
    %c0_32 = arith.constant 0 : index
    %46 = vector.load %arg10[%c0_31, %c18, %c0_32] : memref<12x20x4xf32, #tpu.memory_space<vmem>>, vector<12x2x4xf32>
    tpu.vector_store %arg10[%c0_31, %c18, %c0_32], %44 {strides = array<i32>} : memref<12x20x4xf32, #tpu.memory_space<vmem>>, vector<12x2x4xf32>,
    %c0_i32 = arith.constant 0 : i32
    %47 = arith.cmpi eq, %arg1, %c0_i32 : i32
    %48 = arith.extui %47 : i1 to i32
    %c0_i32_33 = arith.constant 0 : i32
    %49 = arith.cmpi ne, %48, %c0_i32_33 : i32
    scf.if %49 {
      %cst_59 = arith.constant 0.000000e+00 : f32
      %253 = vector.broadcast %cst_59 : f32 to vector<2x20x4xf32>
      %c0_60 = arith.constant 0 : index
      %c0_61 = arith.constant 0 : index
      %c0_62 = arith.constant 0 : index
      %254 = vector.load %arg10[%c0_60, %c0_61, %c0_62] : memref<12x20x4xf32, #tpu.memory_space<vmem>>, vector<2x20x4xf32>
      tpu.vector_store %arg10[%c0_60, %c0_61, %c0_62], %253 {strides = array<i32>} : memref<12x20x4xf32, #tpu.memory_space<vmem>>, vector<2x20x4xf32>,
    } else {
    }
    %c1_i32 = arith.constant 1 : i32
    %50 = arith.cmpi eq, %arg1, %c1_i32 : i32
    %51 = arith.extui %50 : i1 to i32
    %c0_i32_34 = arith.constant 0 : i32
    %52 = arith.cmpi ne, %51, %c0_i32_34 : i32
    scf.if %52 {
      %cst_59 = arith.constant 0.000000e+00 : f32
      %253 = vector.broadcast %cst_59 : f32 to vector<2x20x4xf32>
      %c10_60 = arith.constant 10 : index
      %c0_61 = arith.constant 0 : index
      %c0_62 = arith.constant 0 : index
      %254 = vector.load %arg10[%c10_60, %c0_61, %c0_62] : memref<12x20x4xf32, #tpu.memory_space<vmem>>, vector<2x20x4xf32>
      tpu.vector_store %arg10[%c10_60, %c0_61, %c0_62], %253 {strides = array<i32>} : memref<12x20x4xf32, #tpu.memory_space<vmem>>, vector<2x20x4xf32>,
    } else {
    }
    %c0_35 = arith.constant 0 : index
    %c0_36 = arith.constant 0 : index
    %c0_37 = arith.constant 0 : index
    %53 = vector.load %arg10[%c0_35, %c0_36, %c0_37] : memref<12x20x4xf32, #tpu.memory_space<vmem>>, vector<12x20x4xf32>
    %c0_38 = arith.constant 0 : index
    %c0_39 = arith.constant 0 : index
    %c0_40 = arith.constant 0 : index
    %54 = vector.load %arg7[%c0_38, %c0_39, %c0_40] : memref<5x5x4xf32, #tpu.memory_space<vmem>>, vector<5x5x4xf32>
    %c0_41 = arith.constant 0 : index
    %c0_42 = arith.constant 0 : index
    %55 = vector.load %arg8[%c0_41, %c0_42] : memref<1x4xf32, #tpu.memory_space<vmem>>, vector<1x4xf32>
    %56 = vector.shape_cast %55 : vector<1x4xf32> to vector<1x1x4xf32>
    %cst_43 = arith.constant 0.000000e+00 : f32
    %57 = vector.broadcast %cst_43 : f32 to vector<8x16x4xf32>
    %58 = vector.extract_strided_slice %53 {offsets = [0, 0, 0], sizes = [8, 16, 4], strides = [1, 1, 1]} : vector<12x20x4xf32> to vector<8x16x4xf32>
    %59 = vector.extract_strided_slice %54 {offsets = [0, 0, 0], sizes = [1, 1, 4], strides = [1, 1, 1]} : vector<5x5x4xf32> to vector<1x1x4xf32>
    %60 = vector.shape_cast %59 : vector<1x1x4xf32> to vector<4xf32>
    %61 = vector.shape_cast %60 : vector<4xf32> to vector<1x1x4xf32>
    %62 = vector.broadcast %61 : vector<1x1x4xf32> to vector<8x16x4xf32>
    %63 = arith.mulf %58, %62 : vector<8x16x4xf32>
    %64 = arith.addf %57, %63 : vector<8x16x4xf32>
    %65 = vector.extract_strided_slice %53 {offsets = [0, 1, 0], sizes = [8, 16, 4], strides = [1, 1, 1]} : vector<12x20x4xf32> to vector<8x16x4xf32>
    %66 = vector.extract_strided_slice %54 {offsets = [0, 1, 0], sizes = [1, 1, 4], strides = [1, 1, 1]} : vector<5x5x4xf32> to vector<1x1x4xf32>
    %67 = vector.shape_cast %66 : vector<1x1x4xf32> to vector<4xf32>
    %68 = vector.shape_cast %67 : vector<4xf32> to vector<1x1x4xf32>
    %69 = vector.broadcast %68 : vector<1x1x4xf32> to vector<8x16x4xf32>
    %70 = arith.mulf %65, %69 : vector<8x16x4xf32>
    %71 = arith.addf %64, %70 : vector<8x16x4xf32>
    %72 = vector.extract_strided_slice %53 {offsets = [0, 2, 0], sizes = [8, 16, 4], strides = [1, 1, 1]} : vector<12x20x4xf32> to vector<8x16x4xf32>
    %73 = vector.extract_strided_slice %54 {offsets = [0, 2, 0], sizes = [1, 1, 4], strides = [1, 1, 1]} : vector<5x5x4xf32> to vector<1x1x4xf32>
    %74 = vector.shape_cast %73 : vector<1x1x4xf32> to vector<4xf32>
    %75 = vector.shape_cast %74 : vector<4xf32> to vector<1x1x4xf32>
    %76 = vector.broadcast %75 : vector<1x1x4xf32> to vector<8x16x4xf32>
    %77 = arith.mulf %72, %76 : vector<8x16x4xf32>
    %78 = arith.addf %71, %77 : vector<8x16x4xf32>
    %79 = vector.extract_strided_slice %53 {offsets = [0, 3, 0], sizes = [8, 16, 4], strides = [1, 1, 1]} : vector<12x20x4xf32> to vector<8x16x4xf32>
    %80 = vector.extract_strided_slice %54 {offsets = [0, 3, 0], sizes = [1, 1, 4], strides = [1, 1, 1]} : vector<5x5x4xf32> to vector<1x1x4xf32>
    %81 = vector.shape_cast %80 : vector<1x1x4xf32> to vector<4xf32>
    %82 = vector.shape_cast %81 : vector<4xf32> to vector<1x1x4xf32>
    %83 = vector.broadcast %82 : vector<1x1x4xf32> to vector<8x16x4xf32>
    %84 = arith.mulf %79, %83 : vector<8x16x4xf32>
    %85 = arith.addf %78, %84 : vector<8x16x4xf32>
    %86 = vector.extract_strided_slice %53 {offsets = [0, 4, 0], sizes = [8, 16, 4], strides = [1, 1, 1]} : vector<12x20x4xf32> to vector<8x16x4xf32>
    %87 = vector.extract_strided_slice %54 {offsets = [0, 4, 0], sizes = [1, 1, 4], strides = [1, 1, 1]} : vector<5x5x4xf32> to vector<1x1x4xf32>
    %88 = vector.shape_cast %87 : vector<1x1x4xf32> to vector<4xf32>
    %89 = vector.shape_cast %88 : vector<4xf32> to vector<1x1x4xf32>
    %90 = vector.broadcast %89 : vector<1x1x4xf32> to vector<8x16x4xf32>
    %91 = arith.mulf %86, %90 : vector<8x16x4xf32>
    %92 = arith.addf %85, %91 : vector<8x16x4xf32>
    %93 = vector.extract_strided_slice %53 {offsets = [1, 0, 0], sizes = [8, 16, 4], strides = [1, 1, 1]} : vector<12x20x4xf32> to vector<8x16x4xf32>
    %94 = vector.extract_strided_slice %54 {offsets = [1, 0, 0], sizes = [1, 1, 4], strides = [1, 1, 1]} : vector<5x5x4xf32> to vector<1x1x4xf32>
    %95 = vector.shape_cast %94 : vector<1x1x4xf32> to vector<4xf32>
    %96 = vector.shape_cast %95 : vector<4xf32> to vector<1x1x4xf32>
    %97 = vector.broadcast %96 : vector<1x1x4xf32> to vector<8x16x4xf32>
    %98 = arith.mulf %93, %97 : vector<8x16x4xf32>
    %99 = arith.addf %92, %98 : vector<8x16x4xf32>
    %100 = vector.extract_strided_slice %53 {offsets = [1, 1, 0], sizes = [8, 16, 4], strides = [1, 1, 1]} : vector<12x20x4xf32> to vector<8x16x4xf32>
    %101 = vector.extract_strided_slice %54 {offsets = [1, 1, 0], sizes = [1, 1, 4], strides = [1, 1, 1]} : vector<5x5x4xf32> to vector<1x1x4xf32>
    %102 = vector.shape_cast %101 : vector<1x1x4xf32> to vector<4xf32>
    %103 = vector.shape_cast %102 : vector<4xf32> to vector<1x1x4xf32>
    %104 = vector.broadcast %103 : vector<1x1x4xf32> to vector<8x16x4xf32>
    %105 = arith.mulf %100, %104 : vector<8x16x4xf32>
    %106 = arith.addf %99, %105 : vector<8x16x4xf32>
    %107 = vector.extract_strided_slice %53 {offsets = [1, 2, 0], sizes = [8, 16, 4], strides = [1, 1, 1]} : vector<12x20x4xf32> to vector<8x16x4xf32>
    %108 = vector.extract_strided_slice %54 {offsets = [1, 2, 0], sizes = [1, 1, 4], strides = [1, 1, 1]} : vector<5x5x4xf32> to vector<1x1x4xf32>
    %109 = vector.shape_cast %108 : vector<1x1x4xf32> to vector<4xf32>
    %110 = vector.shape_cast %109 : vector<4xf32> to vector<1x1x4xf32>
    %111 = vector.broadcast %110 : vector<1x1x4xf32> to vector<8x16x4xf32>
    %112 = arith.mulf %107, %111 : vector<8x16x4xf32>
    %113 = arith.addf %106, %112 : vector<8x16x4xf32>
    %114 = vector.extract_strided_slice %53 {offsets = [1, 3, 0], sizes = [8, 16, 4], strides = [1, 1, 1]} : vector<12x20x4xf32> to vector<8x16x4xf32>
    %115 = vector.extract_strided_slice %54 {offsets = [1, 3, 0], sizes = [1, 1, 4], strides = [1, 1, 1]} : vector<5x5x4xf32> to vector<1x1x4xf32>
    %116 = vector.shape_cast %115 : vector<1x1x4xf32> to vector<4xf32>
    %117 = vector.shape_cast %116 : vector<4xf32> to vector<1x1x4xf32>
    %118 = vector.broadcast %117 : vector<1x1x4xf32> to vector<8x16x4xf32>
    %119 = arith.mulf %114, %118 : vector<8x16x4xf32>
    %120 = arith.addf %113, %119 : vector<8x16x4xf32>
    %121 = vector.extract_strided_slice %53 {offsets = [1, 4, 0], sizes = [8, 16, 4], strides = [1, 1, 1]} : vector<12x20x4xf32> to vector<8x16x4xf32>
    %122 = vector.extract_strided_slice %54 {offsets = [1, 4, 0], sizes = [1, 1, 4], strides = [1, 1, 1]} : vector<5x5x4xf32> to vector<1x1x4xf32>
    %123 = vector.shape_cast %122 : vector<1x1x4xf32> to vector<4xf32>
    %124 = vector.shape_cast %123 : vector<4xf32> to vector<1x1x4xf32>
    %125 = vector.broadcast %124 : vector<1x1x4xf32> to vector<8x16x4xf32>
    %126 = arith.mulf %121, %125 : vector<8x16x4xf32>
    %127 = arith.addf %120, %126 : vector<8x16x4xf32>
    %128 = vector.extract_strided_slice %53 {offsets = [2, 0, 0], sizes = [8, 16, 4], strides = [1, 1, 1]} : vector<12x20x4xf32> to vector<8x16x4xf32>
    %129 = vector.extract_strided_slice %54 {offsets = [2, 0, 0], sizes = [1, 1, 4], strides = [1, 1, 1]} : vector<5x5x4xf32> to vector<1x1x4xf32>
    %130 = vector.shape_cast %129 : vector<1x1x4xf32> to vector<4xf32>
    %131 = vector.shape_cast %130 : vector<4xf32> to vector<1x1x4xf32>
    %132 = vector.broadcast %131 : vector<1x1x4xf32> to vector<8x16x4xf32>
    %133 = arith.mulf %128, %132 : vector<8x16x4xf32>
    %134 = arith.addf %127, %133 : vector<8x16x4xf32>
    %135 = vector.extract_strided_slice %53 {offsets = [2, 1, 0], sizes = [8, 16, 4], strides = [1, 1, 1]} : vector<12x20x4xf32> to vector<8x16x4xf32>
    %136 = vector.extract_strided_slice %54 {offsets = [2, 1, 0], sizes = [1, 1, 4], strides = [1, 1, 1]} : vector<5x5x4xf32> to vector<1x1x4xf32>
    %137 = vector.shape_cast %136 : vector<1x1x4xf32> to vector<4xf32>
    %138 = vector.shape_cast %137 : vector<4xf32> to vector<1x1x4xf32>
    %139 = vector.broadcast %138 : vector<1x1x4xf32> to vector<8x16x4xf32>
    %140 = arith.mulf %135, %139 : vector<8x16x4xf32>
    %141 = arith.addf %134, %140 : vector<8x16x4xf32>
    %142 = vector.extract_strided_slice %53 {offsets = [2, 2, 0], sizes = [8, 16, 4], strides = [1, 1, 1]} : vector<12x20x4xf32> to vector<8x16x4xf32>
    %143 = vector.extract_strided_slice %54 {offsets = [2, 2, 0], sizes = [1, 1, 4], strides = [1, 1, 1]} : vector<5x5x4xf32> to vector<1x1x4xf32>
    %144 = vector.shape_cast %143 : vector<1x1x4xf32> to vector<4xf32>
    %145 = vector.shape_cast %144 : vector<4xf32> to vector<1x1x4xf32>
    %146 = vector.broadcast %145 : vector<1x1x4xf32> to vector<8x16x4xf32>
    %147 = arith.mulf %142, %146 : vector<8x16x4xf32>
    %148 = arith.addf %141, %147 : vector<8x16x4xf32>
    %149 = vector.extract_strided_slice %53 {offsets = [2, 3, 0], sizes = [8, 16, 4], strides = [1, 1, 1]} : vector<12x20x4xf32> to vector<8x16x4xf32>
    %150 = vector.extract_strided_slice %54 {offsets = [2, 3, 0], sizes = [1, 1, 4], strides = [1, 1, 1]} : vector<5x5x4xf32> to vector<1x1x4xf32>
    %151 = vector.shape_cast %150 : vector<1x1x4xf32> to vector<4xf32>
    %152 = vector.shape_cast %151 : vector<4xf32> to vector<1x1x4xf32>
    %153 = vector.broadcast %152 : vector<1x1x4xf32> to vector<8x16x4xf32>
    %154 = arith.mulf %149, %153 : vector<8x16x4xf32>
    %155 = arith.addf %148, %154 : vector<8x16x4xf32>
    %156 = vector.extract_strided_slice %53 {offsets = [2, 4, 0], sizes = [8, 16, 4], strides = [1, 1, 1]} : vector<12x20x4xf32> to vector<8x16x4xf32>
    %157 = vector.extract_strided_slice %54 {offsets = [2, 4, 0], sizes = [1, 1, 4], strides = [1, 1, 1]} : vector<5x5x4xf32> to vector<1x1x4xf32>
    %158 = vector.shape_cast %157 : vector<1x1x4xf32> to vector<4xf32>
    %159 = vector.shape_cast %158 : vector<4xf32> to vector<1x1x4xf32>
    %160 = vector.broadcast %159 : vector<1x1x4xf32> to vector<8x16x4xf32>
    %161 = arith.mulf %156, %160 : vector<8x16x4xf32>
    %162 = arith.addf %155, %161 : vector<8x16x4xf32>
    %163 = vector.extract_strided_slice %53 {offsets = [3, 0, 0], sizes = [8, 16, 4], strides = [1, 1, 1]} : vector<12x20x4xf32> to vector<8x16x4xf32>
    %164 = vector.extract_strided_slice %54 {offsets = [3, 0, 0], sizes = [1, 1, 4], strides = [1, 1, 1]} : vector<5x5x4xf32> to vector<1x1x4xf32>
    %165 = vector.shape_cast %164 : vector<1x1x4xf32> to vector<4xf32>
    %166 = vector.shape_cast %165 : vector<4xf32> to vector<1x1x4xf32>
    %167 = vector.broadcast %166 : vector<1x1x4xf32> to vector<8x16x4xf32>
    %168 = arith.mulf %163, %167 : vector<8x16x4xf32>
    %169 = arith.addf %162, %168 : vector<8x16x4xf32>
    %170 = vector.extract_strided_slice %53 {offsets = [3, 1, 0], sizes = [8, 16, 4], strides = [1, 1, 1]} : vector<12x20x4xf32> to vector<8x16x4xf32>
    %171 = vector.extract_strided_slice %54 {offsets = [3, 1, 0], sizes = [1, 1, 4], strides = [1, 1, 1]} : vector<5x5x4xf32> to vector<1x1x4xf32>
    %172 = vector.shape_cast %171 : vector<1x1x4xf32> to vector<4xf32>
    %173 = vector.shape_cast %172 : vector<4xf32> to vector<1x1x4xf32>
    %174 = vector.broadcast %173 : vector<1x1x4xf32> to vector<8x16x4xf32>
    %175 = arith.mulf %170, %174 : vector<8x16x4xf32>
    %176 = arith.addf %169, %175 : vector<8x16x4xf32>
    %177 = vector.extract_strided_slice %53 {offsets = [3, 2, 0], sizes = [8, 16, 4], strides = [1, 1, 1]} : vector<12x20x4xf32> to vector<8x16x4xf32>
    %178 = vector.extract_strided_slice %54 {offsets = [3, 2, 0], sizes = [1, 1, 4], strides = [1, 1, 1]} : vector<5x5x4xf32> to vector<1x1x4xf32>
    %179 = vector.shape_cast %178 : vector<1x1x4xf32> to vector<4xf32>
    %180 = vector.shape_cast %179 : vector<4xf32> to vector<1x1x4xf32>
    %181 = vector.broadcast %180 : vector<1x1x4xf32> to vector<8x16x4xf32>
    %182 = arith.mulf %177, %181 : vector<8x16x4xf32>
    %183 = arith.addf %176, %182 : vector<8x16x4xf32>
    %184 = vector.extract_strided_slice %53 {offsets = [3, 3, 0], sizes = [8, 16, 4], strides = [1, 1, 1]} : vector<12x20x4xf32> to vector<8x16x4xf32>
    %185 = vector.extract_strided_slice %54 {offsets = [3, 3, 0], sizes = [1, 1, 4], strides = [1, 1, 1]} : vector<5x5x4xf32> to vector<1x1x4xf32>
    %186 = vector.shape_cast %185 : vector<1x1x4xf32> to vector<4xf32>
    %187 = vector.shape_cast %186 : vector<4xf32> to vector<1x1x4xf32>
    %188 = vector.broadcast %187 : vector<1x1x4xf32> to vector<8x16x4xf32>
    %189 = arith.mulf %184, %188 : vector<8x16x4xf32>
    %190 = arith.addf %183, %189 : vector<8x16x4xf32>
    %191 = vector.extract_strided_slice %53 {offsets = [3, 4, 0], sizes = [8, 16, 4], strides = [1, 1, 1]} : vector<12x20x4xf32> to vector<8x16x4xf32>
    %192 = vector.extract_strided_slice %54 {offsets = [3, 4, 0], sizes = [1, 1, 4], strides = [1, 1, 1]} : vector<5x5x4xf32> to vector<1x1x4xf32>
    %193 = vector.shape_cast %192 : vector<1x1x4xf32> to vector<4xf32>
    %194 = vector.shape_cast %193 : vector<4xf32> to vector<1x1x4xf32>
    %195 = vector.broadcast %194 : vector<1x1x4xf32> to vector<8x16x4xf32>
    %196 = arith.mulf %191, %195 : vector<8x16x4xf32>
    %197 = arith.addf %190, %196 : vector<8x16x4xf32>
    %198 = vector.extract_strided_slice %53 {offsets = [4, 0, 0], sizes = [8, 16, 4], strides = [1, 1, 1]} : vector<12x20x4xf32> to vector<8x16x4xf32>
    %199 = vector.extract_strided_slice %54 {offsets = [4, 0, 0], sizes = [1, 1, 4], strides = [1, 1, 1]} : vector<5x5x4xf32> to vector<1x1x4xf32>
    %200 = vector.shape_cast %199 : vector<1x1x4xf32> to vector<4xf32>
    %201 = vector.shape_cast %200 : vector<4xf32> to vector<1x1x4xf32>
    %202 = vector.broadcast %201 : vector<1x1x4xf32> to vector<8x16x4xf32>
    %203 = arith.mulf %198, %202 : vector<8x16x4xf32>
    %204 = arith.addf %197, %203 : vector<8x16x4xf32>
    %205 = vector.extract_strided_slice %53 {offsets = [4, 1, 0], sizes = [8, 16, 4], strides = [1, 1, 1]} : vector<12x20x4xf32> to vector<8x16x4xf32>
    %206 = vector.extract_strided_slice %54 {offsets = [4, 1, 0], sizes = [1, 1, 4], strides = [1, 1, 1]} : vector<5x5x4xf32> to vector<1x1x4xf32>
    %207 = vector.shape_cast %206 : vector<1x1x4xf32> to vector<4xf32>
    %208 = vector.shape_cast %207 : vector<4xf32> to vector<1x1x4xf32>
    %209 = vector.broadcast %208 : vector<1x1x4xf32> to vector<8x16x4xf32>
    %210 = arith.mulf %205, %209 : vector<8x16x4xf32>
    %211 = arith.addf %204, %210 : vector<8x16x4xf32>
    %212 = vector.extract_strided_slice %53 {offsets = [4, 2, 0], sizes = [8, 16, 4], strides = [1, 1, 1]} : vector<12x20x4xf32> to vector<8x16x4xf32>
    %213 = vector.extract_strided_slice %54 {offsets = [4, 2, 0], sizes = [1, 1, 4], strides = [1, 1, 1]} : vector<5x5x4xf32> to vector<1x1x4xf32>
    %214 = vector.shape_cast %213 : vector<1x1x4xf32> to vector<4xf32>
    %215 = vector.shape_cast %214 : vector<4xf32> to vector<1x1x4xf32>
    %216 = vector.broadcast %215 : vector<1x1x4xf32> to vector<8x16x4xf32>
    %217 = arith.mulf %212, %216 : vector<8x16x4xf32>
    %218 = arith.addf %211, %217 : vector<8x16x4xf32>
    %219 = vector.extract_strided_slice %53 {offsets = [4, 3, 0], sizes = [8, 16, 4], strides = [1, 1, 1]} : vector<12x20x4xf32> to vector<8x16x4xf32>
    %220 = vector.extract_strided_slice %54 {offsets = [4, 3, 0], sizes = [1, 1, 4], strides = [1, 1, 1]} : vector<5x5x4xf32> to vector<1x1x4xf32>
    %221 = vector.shape_cast %220 : vector<1x1x4xf32> to vector<4xf32>
    %222 = vector.shape_cast %221 : vector<4xf32> to vector<1x1x4xf32>
    %223 = vector.broadcast %222 : vector<1x1x4xf32> to vector<8x16x4xf32>
    %224 = arith.mulf %219, %223 : vector<8x16x4xf32>
    %225 = arith.addf %218, %224 : vector<8x16x4xf32>
    %226 = vector.extract_strided_slice %53 {offsets = [4, 4, 0], sizes = [8, 16, 4], strides = [1, 1, 1]} : vector<12x20x4xf32> to vector<8x16x4xf32>
    %227 = vector.extract_strided_slice %54 {offsets = [4, 4, 0], sizes = [1, 1, 4], strides = [1, 1, 1]} : vector<5x5x4xf32> to vector<1x1x4xf32>
    %228 = vector.shape_cast %227 : vector<1x1x4xf32> to vector<4xf32>
    %229 = vector.shape_cast %228 : vector<4xf32> to vector<1x1x4xf32>
    %230 = vector.broadcast %229 : vector<1x1x4xf32> to vector<8x16x4xf32>
    %231 = arith.mulf %226, %230 : vector<8x16x4xf32>
    %232 = arith.addf %225, %231 : vector<8x16x4xf32>
    %233 = vector.broadcast %56 : vector<1x1x4xf32> to vector<8x16x4xf32>
    %234 = arith.addf %232, %233 : vector<8x16x4xf32>
    %235 = arith.negf %234 : vector<8x16x4xf32>
    %236 = math.exp %235 : vector<8x16x4xf32>
    %cst_44 = arith.constant 1.000000e+00 : f32
    %237 = vector.broadcast %cst_44 : f32 to vector<8x16x4xf32>
    %238 = arith.addf %237, %236 : vector<8x16x4xf32>
    %239 = arith.divf %237, %238 : vector<8x16x4xf32>
    %240 = arith.mulf %234, %239 : vector<8x16x4xf32>
    %241 = vector.extract_strided_slice %14 {offsets = [0, 0, 0], sizes = [8, 16, 2], strides = [1, 1, 1]} : vector<8x16x4xf32> to vector<8x16x2xf32>
    %242 = vector.shape_cast %241 : vector<8x16x2xf32> to vector<1x8x16x2xf32>
    %c0_45 = arith.constant 0 : index
    %c0_46 = arith.constant 0 : index
    %c0_47 = arith.constant 0 : index
    %c0_48 = arith.constant 0 : index
    %243 = vector.load %arg9[%c0_45, %c0_46, %c0_47, %c0_48] : memref<1x8x16x8xf32, #tpu.memory_space<vmem>>, vector<1x8x16x2xf32>
    tpu.vector_store %arg9[%c0_45, %c0_46, %c0_47, %c0_48], %242 {strides = array<i32>} : memref<1x8x16x8xf32, #tpu.memory_space<vmem>>, vector<1x8x16x2xf32>,
    %244 = vector.extract_strided_slice %240 {offsets = [0, 0, 0], sizes = [8, 16, 2], strides = [1, 1, 1]} : vector<8x16x4xf32> to vector<8x16x2xf32>
    %245 = vector.shape_cast %244 : vector<8x16x2xf32> to vector<1x8x16x2xf32>
    %c0_49 = arith.constant 0 : index
    %c0_50 = arith.constant 0 : index
    %c0_51 = arith.constant 0 : index
    %c2_52 = arith.constant 2 : index
    %246 = vector.load %arg9[%c0_49, %c0_50, %c0_51, %c2_52] : memref<1x8x16x8xf32, #tpu.memory_space<vmem>>, vector<1x8x16x2xf32>
    tpu.vector_store %arg9[%c0_49, %c0_50, %c0_51, %c2_52], %245 {strides = array<i32>} : memref<1x8x16x8xf32, #tpu.memory_space<vmem>>, vector<1x8x16x2xf32>,
    %247 = vector.extract_strided_slice %14 {offsets = [0, 0, 2], sizes = [8, 16, 2], strides = [1, 1, 1]} : vector<8x16x4xf32> to vector<8x16x2xf32>
    %248 = vector.shape_cast %247 : vector<8x16x2xf32> to vector<1x8x16x2xf32>
    %c0_53 = arith.constant 0 : index
    %c0_54 = arith.constant 0 : index
    %c0_55 = arith.constant 0 : index
    %c4 = arith.constant 4 : index
    %249 = vector.load %arg9[%c0_53, %c0_54, %c0_55, %c4] : memref<1x8x16x8xf32, #tpu.memory_space<vmem>>, vector<1x8x16x2xf32>
    tpu.vector_store %arg9[%c0_53, %c0_54, %c0_55, %c4], %248 {strides = array<i32>} : memref<1x8x16x8xf32, #tpu.memory_space<vmem>>, vector<1x8x16x2xf32>,
    %250 = vector.extract_strided_slice %240 {offsets = [0, 0, 2], sizes = [8, 16, 2], strides = [1, 1, 1]} : vector<8x16x4xf32> to vector<8x16x2xf32>
    %251 = vector.shape_cast %250 : vector<8x16x2xf32> to vector<1x8x16x2xf32>
    %c0_56 = arith.constant 0 : index
    %c0_57 = arith.constant 0 : index
    %c0_58 = arith.constant 0 : index
    %c6 = arith.constant 6 : index
    %252 = vector.load %arg9[%c0_56, %c0_57, %c0_58, %c6] : memref<1x8x16x8xf32, #tpu.memory_space<vmem>>, vector<1x8x16x2xf32>
    tpu.vector_store %arg9[%c0_56, %c0_57, %c0_58, %c6], %251 {strides = array<i32>} : memref<1x8x16x8xf32, #tpu.memory_space<vmem>>, vector<1x8x16x2xf32>,
    return
  }
  func.func @transform_0(%arg0: i32, %arg1: i32) -> (i32, i32, i32, i32) {
    %c0_i32 = arith.constant 0 : i32
    %c0_i32_0 = arith.constant 0 : i32
    %c0_i32_1 = arith.constant 0 : i32
    return %arg0, %arg1, %c0_i32, %c0_i32_0 : i32, i32, i32, i32
  }
  func.func @transform_1(%arg0: i32, %arg1: i32) -> (i32, i32, i32, i32) {
    %c4_i32 = arith.constant 4 : i32
    %0 = arith.muli %arg1, %c4_i32 : i32
    %c1_i32 = arith.constant 1 : i32
    %1 = arith.subi %0, %c1_i32 : i32
    %c0_i32 = arith.constant 0 : i32
    %2 = arith.maxsi %1, %c0_i32 : i32
    %c0_i32_0 = arith.constant 0 : i32
    %c0_i32_1 = arith.constant 0 : i32
    %c0_i32_2 = arith.constant 0 : i32
    return %arg0, %2, %c0_i32_0, %c0_i32_1 : i32, i32, i32, i32
  }
  func.func @transform_2(%arg0: i32, %arg1: i32) -> (i32, i32, i32, i32) {
    %c1_i32 = arith.constant 1 : i32
    %0 = arith.addi %arg1, %c1_i32 : i32
    %c4_i32 = arith.constant 4 : i32
    %1 = arith.muli %0, %c4_i32 : i32
    %c7_i32 = arith.constant 7 : i32
    %2 = arith.minsi %1, %c7_i32 : i32
    %c0_i32 = arith.constant 0 : i32
    %c0_i32_0 = arith.constant 0 : i32
    %c0_i32_1 = arith.constant 0 : i32
    return %arg0, %2, %c0_i32, %c0_i32_0 : i32, i32, i32, i32
  }
  func.func @transform_3(%arg0: i32, %arg1: i32) -> (i32, i32) {
    %c0_i32 = arith.constant 0 : i32
    %c0_i32_0 = arith.constant 0 : i32
    %c0_i32_1 = arith.constant 0 : i32
    return %c0_i32, %c0_i32_0 : i32, i32
  }
  func.func @transform_4(%arg0: i32, %arg1: i32) -> (i32, i32) {
    %c0_i32 = arith.constant 0 : i32
    %c0_i32_0 = arith.constant 0 : i32
    %c0_i32_1 = arith.constant 0 : i32
    return %c0_i32, %c0_i32_0 : i32, i32
  }
  func.func @transform_5(%arg0: i32, %arg1: i32) -> (i32, i32, i32) {
    %c0_i32 = arith.constant 0 : i32
    %c0_i32_0 = arith.constant 0 : i32
    %c0_i32_1 = arith.constant 0 : i32
    %c0_i32_2 = arith.constant 0 : i32
    return %c0_i32, %c0_i32_0, %c0_i32_1 : i32, i32, i32
  }
  func.func @transform_6(%arg0: i32, %arg1: i32) -> (i32, i32) {
    %c0_i32 = arith.constant 0 : i32
    %c0_i32_0 = arith.constant 0 : i32
    %c0_i32_1 = arith.constant 0 : i32
    return %c0_i32, %c0_i32_0 : i32, i32
  }
  func.func @transform_7(%arg0: i32, %arg1: i32) -> (i32, i32, i32, i32) {
    %c0_i32 = arith.constant 0 : i32
    %c0_i32_0 = arith.constant 0 : i32
    %c0_i32_1 = arith.constant 0 : i32
    return %arg0, %arg1, %c0_i32, %c0_i32_0 : i32, i32, i32, i32
  }
}

</mosaic_0001>

<llo_original>
// kernel: tpu_custom_call.1
$region0: #{tpu_custom_call.1}
  #allocation0 [shape = 'u32[]', space=smem, size = 0x4, offset = 0x4, fixed_abs, tag = 'smem constant byte address 0x4 - core index']
  #allocation1 [shape = 'u32[144,128]{1,0:T(1,128)}', space=vmem, size = 0x12000, scoped, tag = 'internal scratch']
  #allocation2 [shape = 'f32[12,20,4]{2,1,0:T(8,128)}', space=vmem, size = 0x24000, scoped, tag = 'scratch operand']
  %s0 = inlined_call_operand.vmem [shape: f32[2,16,16,4], index: 0, kind: input, shape index: {}]
  %s1 = inlined_call_operand.vmem [shape: f32[2,16,16,4], index: 1, kind: input, shape index: {}]
  %s2 = inlined_call_operand.vmem [shape: f32[2,16,16,4], index: 2, kind: input, shape index: {}]
  %s3 = inlined_call_operand.vmem [shape: f32[4,4], index: 3, kind: input, shape index: {}]
  %s4 = inlined_call_operand.vmem [shape: f32[1,4], index: 4, kind: input, shape index: {}]
  %s5 = inlined_call_operand.vmem [shape: f32[5,5,4], index: 5, kind: input, shape index: {}]
  %s6 = inlined_call_operand.vmem [shape: f32[1,4], index: 6, kind: input, shape index: {}]
  %s7 = inlined_call_operand.vmem [shape: f32[2,16,16,8], index: 7, kind: output, shape index: {}]
  %s8 = sld [smem:[#allocation0]]
  $region69: #{tpu_custom_call.1} parent=0
    _
  %s10 = ssub.s32 1, %s8
  %s11 = scalar_select 0, %s10, %s8
  loop: start=0, step=1, limit=6
  $region2: #{tpu_custom_call.1} parent=0 // loop_pre_header
    _
  $region3: #{tpu_custom_call.1} parent=0 // loop_header
    %s13 = sphi 0, %s17
    %p14 = scmp.ge.s32.totalorder %s13, 6
    %s20 = sphi 0, %s32
    %s21 = sphi 0, %s28
    %s22 = sphi 0, %s20
    %s23 = sphi 0, %s21
    %s24 = sphi 0, %s22
    %s25 = sphi 0, %s23
    %s37 = sphi 0, %s39
    %s40 = sphi 0, %s37
    %s41 = sphi 0, %s40
    %s57 = sphi 0, %s41
    %s73 = sphi 0, %s75
    %s76 = sphi 0, %s73
    %s77 = sphi 0, %s76
    %s93 = sphi 0, %s77
    %s109 = sphi 0, %s111
    %s112 = sphi 0, %s109
    %s113 = sphi 0, %s112
    %s129 = sphi 0, %s113
    %s133 = sphi 0, %s133
    %s135 = sphi 0, %s133
    %s136 = sphi 0, %s135
    %s150 = sphi 0, %s136
    %s154 = sphi 0, %s154
    %s156 = sphi 0, %s154
    %s157 = sphi 0, %s156
    %s171 = sphi 0, %s157
    %s175 = sphi 0, %s175
    %s177 = sphi 0, %s175
    %s178 = sphi 0, %s177
    %s192 = sphi 0, %s178
    %s196 = sphi 0, %s196
    %s198 = sphi 0, %s196
    %s199 = sphi 0, %s198
    %s213 = sphi 0, %s199
    %s221 = sphi 0, %s223
    %s224 = sphi 0, %s221
    %s225 = sphi 0, %s224
    %s241 = sphi 0, %s225
  $region4: #{tpu_custom_call.1} parent=0 // loop_header_branch
    %16 = sbr.rel (%p14) target = $region8
  $region5: #{tpu_custom_call.1} parent=0 // loop_body
    %s18 = ssub.s32 %s13, 1
    %s19 = ssub.s32 %s13, 2
    %s26 = sadd.s32 1, %s21
    %p27 = scmp.ge.s32.totalorder %s26, 2
    %s28 = scalar_select %p27, 0, %s26
    %s29 = sadd.s32 1, %s20
    %s30 = scalar_select %p27, %s29, %s20
    %p31 = scmp.ge.s32.totalorder %s30, 2
    %s32 = scalar_select %p31, 0, %s30
    %s33 = ssub.s32 %s20, %s32
    %s34 = ssub.s32 %s21, %s28
    %s35 = sor.u32 %s33, %s34
    %p36 = scmp.eq.s32.totalorder %s35, 0
    %s38 = sadd.s32 %s37, 1
    %s39 = scalar_select %p36, %s37, %s38
    %p42 = pneg %p36
    %p43 = scmp.eq.s32.totalorder %s13, 3
    %p44 = por %p42, %p43
    %p45 = scmp.ne.s32.totalorder %s37, %s40
    %p46 = scmp.eq.s32.totalorder %s13, 0
    %p47 = por %p45, %p46
    %p48 = scmp.ne.s32.totalorder %s37, %s40
    %p49 = scmp.eq.s32.totalorder %s18, 3
    %p50 = por %p48, %p49
    %p51 = scmp.ne.s32.totalorder %s40, %s41
    %p52 = scmp.eq.s32.totalorder %s18, 0
    %p53 = por %p51, %p52
    %p54 = scmp.ne.s32.totalorder %s40, %s41
    %p55 = scmp.eq.s32.totalorder %s19, 3
    %p56 = por %p54, %p55
    %p58 = scmp.ne.s32.totalorder %s41, %s57
    %p59 = scmp.eq.s32.totalorder %s19, 0
    %p60 = por %p58, %p59
    %s61 = smul.u32 %s21, 4
    %s62 = ssub.s32 %s61, 1
    %p63 = scmp.gt.s32.totalorder %s62, 0
    %s64 = scalar_select %p63, %s62, 0
    %s65 = smul.u32 %s28, 4
    %s66 = ssub.s32 %s65, 1
    %p67 = scmp.gt.s32.totalorder %s66, 0
    %s68 = scalar_select %p67, %s66, 0
    %s69 = ssub.s32 %s20, %s32
    %s70 = ssub.s32 %s64, %s68
    %s71 = sor.u32 %s69, %s70
    %p72 = scmp.eq.s32.totalorder %s71, 0
    %s74 = sadd.s32 %s73, 1
    %s75 = scalar_select %p72, %s73, %s74
    %p78 = pneg %p72
    %p79 = scmp.eq.s32.totalorder %s13, 3
    %p80 = por %p78, %p79
    %p81 = scmp.ne.s32.totalorder %s73, %s76
    %p82 = scmp.eq.s32.totalorder %s13, 0
    %p83 = por %p81, %p82
    %p84 = scmp.ne.s32.totalorder %s73, %s76
    %p85 = scmp.eq.s32.totalorder %s18, 3
    %p86 = por %p84, %p85
    %p87 = scmp.ne.s32.totalorder %s76, %s77
    %p88 = scmp.eq.s32.totalorder %s18, 0
    %p89 = por %p87, %p88
    %p90 = scmp.ne.s32.totalorder %s76, %s77
    %p91 = scmp.eq.s32.totalorder %s19, 3
    %p92 = por %p90, %p91
    %p94 = scmp.ne.s32.totalorder %s77, %s93
    %p95 = scmp.eq.s32.totalorder %s19, 0
    %p96 = por %p94, %p95
    %s97 = sadd.s32 %s21, 1
    %s98 = smul.u32 %s97, 4
    %p99 = scmp.lt.s32.totalorder %s98, 7
    %s100 = scalar_select %p99, %s98, 7
    %s101 = sadd.s32 %s28, 1
    %s102 = smul.u32 %s101, 4
    %p103 = scmp.lt.s32.totalorder %s102, 7
    %s104 = scalar_select %p103, %s102, 7
    %s105 = ssub.s32 %s20, %s32
    %s106 = ssub.s32 %s100, %s104
    %s107 = sor.u32 %s105, %s106
    %p108 = scmp.eq.s32.totalorder %s107, 0
    %s110 = sadd.s32 %s109, 1
    %s111 = scalar_select %p108, %s109, %s110
    %p114 = pneg %p108
    %p115 = scmp.eq.s32.totalorder %s13, 3
    %p116 = por %p114, %p115
    %p117 = scmp.ne.s32.totalorder %s109, %s112
    %p118 = scmp.eq.s32.totalorder %s13, 0
    %p119 = por %p117, %p118
    %p120 = scmp.ne.s32.totalorder %s109, %s112
    %p121 = scmp.eq.s32.totalorder %s18, 3
    %p122 = por %p120, %p121
    %p123 = scmp.ne.s32.totalorder %s112, %s113
    %p124 = scmp.eq.s32.totalorder %s18, 0
    %p125 = por %p123, %p124
    %p126 = scmp.ne.s32.totalorder %s112, %s113
    %p127 = scmp.eq.s32.totalorder %s19, 3
    %p128 = por %p126, %p127
    %p130 = scmp.ne.s32.totalorder %s113, %s129
    %p131 = scmp.eq.s32.totalorder %s19, 0
    %p132 = por %p130, %p131
    %s134 = sadd.s32 %s133, 1
    %p137 = scmp.eq.s32.totalorder %s13, 3
    %p138 = scmp.ne.s32.totalorder %s133, %s135
    %p139 = scmp.eq.s32.totalorder %s13, 0
    %p140 = por %p138, %p139
    %p141 = scmp.ne.s32.totalorder %s133, %s135
    %p142 = scmp.eq.s32.totalorder %s18, 3
    %p143 = por %p141, %p142
    %p144 = scmp.ne.s32.totalorder %s135, %s136
    %p145 = scmp.eq.s32.totalorder %s18, 0
    %p146 = por %p144, %p145
    %p147 = scmp.ne.s32.totalorder %s135, %s136
    %p148 = scmp.eq.s32.totalorder %s19, 3
    %p149 = por %p147, %p148
    %p151 = scmp.ne.s32.totalorder %s136, %s150
    %p152 = scmp.eq.s32.totalorder %s19, 0
    %p153 = por %p151, %p152
    %s155 = sadd.s32 %s154, 1
    %p158 = scmp.eq.s32.totalorder %s13, 3
    %p159 = scmp.ne.s32.totalorder %s154, %s156
    %p160 = scmp.eq.s32.totalorder %s13, 0
    %p161 = por %p159, %p160
    %p162 = scmp.ne.s32.totalorder %s154, %s156
    %p163 = scmp.eq.s32.totalorder %s18, 3
    %p164 = por %p162, %p163
    %p165 = scmp.ne.s32.totalorder %s156, %s157
    %p166 = scmp.eq.s32.totalorder %s18, 0
    %p167 = por %p165, %p166
    %p168 = scmp.ne.s32.totalorder %s156, %s157
    %p169 = scmp.eq.s32.totalorder %s19, 3
    %p170 = por %p168, %p169
    %p172 = scmp.ne.s32.totalorder %s157, %s171
    %p173 = scmp.eq.s32.totalorder %s19, 0
    %p174 = por %p172, %p173
    %s176 = sadd.s32 %s175, 1
    %p179 = scmp.eq.s32.totalorder %s13, 3
    %p180 = scmp.ne.s32.totalorder %s175, %s177
    %p181 = scmp.eq.s32.totalorder %s13, 0
    %p182 = por %p180, %p181
    %p183 = scmp.ne.s32.totalorder %s175, %s177
    %p184 = scmp.eq.s32.totalorder %s18, 3
    %p185 = por %p183, %p184
    %p186 = scmp.ne.s32.totalorder %s177, %s178
    %p187 = scmp.eq.s32.totalorder %s18, 0
    %p188 = por %p186, %p187
    %p189 = scmp.ne.s32.totalorder %s177, %s178
    %p190 = scmp.eq.s32.totalorder %s19, 3
    %p191 = por %p189, %p190
    %p193 = scmp.ne.s32.totalorder %s178, %s192
    %p194 = scmp.eq.s32.totalorder %s19, 0
    %p195 = por %p193, %p194
    %s197 = sadd.s32 %s196, 1
    %p200 = scmp.eq.s32.totalorder %s13, 3
    %p201 = scmp.ne.s32.totalorder %s196, %s198
    %p202 = scmp.eq.s32.totalorder %s13, 0
    %p203 = por %p201, %p202
    %p204 = scmp.ne.s32.totalorder %s196, %s198
    %p205 = scmp.eq.s32.totalorder %s18, 3
    %p206 = por %p204, %p205
    %p207 = scmp.ne.s32.totalorder %s198, %s199
    %p208 = scmp.eq.s32.totalorder %s18, 0
    %p209 = por %p207, %p208
    %p210 = scmp.ne.s32.totalorder %s198, %s199
    %p211 = scmp.eq.s32.totalorder %s19, 3
    %p212 = por %p210, %p211
    %p214 = scmp.ne.s32.totalorder %s199, %s213
    %p215 = scmp.eq.s32.totalorder %s19, 0
    %p216 = por %p214, %p215
    %s217 = ssub.s32 %s20, %s32
    %s218 = ssub.s32 %s21, %s28
    %s219 = sor.u32 %s217, %s218
    %p220 = scmp.eq.s32.totalorder %s219, 0
    %s222 = sadd.s32 %s221, 1
    %s223 = scalar_select %p220, %s221, %s222
    %p226 = pneg %p220
    %p227 = scmp.eq.s32.totalorder %s13, 3
    %p228 = por %p226, %p227
    %p229 = scmp.ne.s32.totalorder %s221, %s224
    %p230 = scmp.eq.s32.totalorder %s13, 0
    %p231 = por %p229, %p230
    %p232 = scmp.ne.s32.totalorder %s221, %s224
    %p233 = scmp.eq.s32.totalorder %s18, 3
    %p234 = por %p232, %p233
    %p235 = scmp.ne.s32.totalorder %s224, %s225
    %p236 = scmp.eq.s32.totalorder %s18, 0
    %p237 = por %p235, %p236
    %p238 = scmp.ne.s32.totalorder %s224, %s225
    %p239 = scmp.eq.s32.totalorder %s19, 3
    %p240 = por %p238, %p239
    %p242 = scmp.ne.s32.totalorder %s225, %s241
    %p243 = scmp.eq.s32.totalorder %s19, 0
    %p244 = por %p242, %p243
    %p245 = scmp.le.s32.totalorder 1, %s13
    %p246 = scmp.lt.s32.totalorder %s13, 5
    %p247 = pnand %p245, %p246
    %p248 = pneg %p247
    // Predicated region
    $region9: #{tpu_custom_call.1} parent=5 // pred_check
      _
    $region10: #{tpu_custom_call.1} parent=5 // pred_check_branch
      %250 = sbr.rel (%p247) target = $region12
    $region11: #{tpu_custom_call.1} parent=5 // pred_region
      %s251 = ssub.s32 %s13, 1
      // Predicated region
      $region13: #{tpu_custom_call.1} parent=11 // pred_check
        %p252 = pneg %p146
      $region14: #{tpu_custom_call.1} parent=11 // pred_check_branch
        %254 = sbr.rel (%p252) target = $region16
      $region15: #{tpu_custom_call.1} parent=11 // pred_region
        _
      $region16: #{tpu_custom_call.1} parent=11 // pred_fallthru
        _
      // Predicated region
      $region17: #{tpu_custom_call.1} parent=11 // pred_check
        %p255 = pneg %p167
      $region18: #{tpu_custom_call.1} parent=11 // pred_check_branch
        %257 = sbr.rel (%p255) target = $region20
      $region19: #{tpu_custom_call.1} parent=11 // pred_region
        _
      $region20: #{tpu_custom_call.1} parent=11 // pred_fallthru
        _
      // Predicated region
      $region21: #{tpu_custom_call.1} parent=11 // pred_check
        %p258 = pneg %p188
      $region22: #{tpu_custom_call.1} parent=11 // pred_check_branch
        %260 = sbr.rel (%p258) target = $region24
      $region23: #{tpu_custom_call.1} parent=11 // pred_region
        _
      $region24: #{tpu_custom_call.1} parent=11 // pred_fallthru
        _
      // Predicated region
      $region25: #{tpu_custom_call.1} parent=11 // pred_check
        %p261 = pneg %p209
      $region26: #{tpu_custom_call.1} parent=11 // pred_check_branch
        %263 = sbr.rel (%p261) target = $region28
      $region27: #{tpu_custom_call.1} parent=11 // pred_region
        _
      $region28: #{tpu_custom_call.1} parent=11 // pred_fallthru
        _
    $region12: #{tpu_custom_call.1} parent=5 // pred_fallthru
      _
    %p264 = scmp.lt.s32.totalorder %s13, 4
    // Predicated region
    $region29: #{tpu_custom_call.1} parent=5 // pred_check
      %p265 = pneg %p264
    $region30: #{tpu_custom_call.1} parent=5 // pred_check_branch
      %267 = sbr.rel (%p265) target = $region32
    $region31: #{tpu_custom_call.1} parent=5 // pred_region
      // Predicated region
      $region33: #{tpu_custom_call.1} parent=31 // pred_check
        %p268 = pneg %p47
      $region34: #{tpu_custom_call.1} parent=31 // pred_check_branch
        %270 = sbr.rel (%p268) target = $region36
      $region35: #{tpu_custom_call.1} parent=31 // pred_region
        %s271 = smul.u32 8, %s21
        %p272 = scmp.lt.s32.totalorder %s20, 1
        %s273 = scalar_select %p272, %s20, 1
        %p274 = scmp.lt.s32.totalorder %s271, 15
        %s275 = scalar_select %p274, %s271, 15
        %s276 = smul.addr %s275, 2
        %s277 = smul.addr %s273, 32
        %s278 = sadd.s32 %s276, %s277
        %s279 = smul.addr %s278, 8
        %s280 = scalar_lea.vmem %s0, %s279
        %s281 = smul.u32 8, %s21
      $region36: #{tpu_custom_call.1} parent=31 // pred_fallthru
        _
      // Predicated region
      $region37: #{tpu_custom_call.1} parent=31 // pred_check
        %p282 = pneg %p83
      $region38: #{tpu_custom_call.1} parent=31 // pred_check_branch
        %284 = sbr.rel (%p282) target = $region40
      $region39: #{tpu_custom_call.1} parent=31 // pred_region
        %s285 = smul.u32 %s21, 4
        %s286 = ssub.s32 %s285, 1
        %p287 = scmp.gt.s32.totalorder %s286, 0
        %s288 = scalar_select %p287, %s286, 0
        %s289 = smul.u32 2, %s288
        %p290 = scmp.lt.s32.totalorder %s20, 1
        %s291 = scalar_select %p290, %s20, 1
        %p292 = scmp.lt.s32.totalorder %s289, 15
        %s293 = scalar_select %p292, %s289, 15
        %s294 = smul.addr %s293, 2
        %s295 = smul.addr %s291, 32
        %s296 = sadd.s32 %s294, %s295
        %s297 = smul.addr %s296, 8
        %s298 = scalar_lea.vmem %s1, %s297
        %s299 = smul.u32 %s21, 4
        %s300 = ssub.s32 %s299, 1
        %p301 = scmp.gt.s32.totalorder %s300, 0
        %s302 = scalar_select %p301, %s300, 0
        %s303 = smul.u32 2, %s302
      $region40: #{tpu_custom_call.1} parent=31 // pred_fallthru
        _
      // Predicated region
      $region41: #{tpu_custom_call.1} parent=31 // pred_check
        %p304 = pneg %p119
      $region42: #{tpu_custom_call.1} parent=31 // pred_check_branch
        %306 = sbr.rel (%p304) target = $region44
      $region43: #{tpu_custom_call.1} parent=31 // pred_region
        %s307 = sadd.s32 %s21, 1
        %s308 = smul.u32 %s307, 4
        %p309 = scmp.lt.s32.totalorder %s308, 7
        %s310 = scalar_select %p309, %s308, 7
        %s311 = smul.u32 2, %s310
        %p312 = scmp.lt.s32.totalorder %s20, 1
        %s313 = scalar_select %p312, %s20, 1
        %p314 = scmp.lt.s32.totalorder %s311, 15
        %s315 = scalar_select %p314, %s311, 15
        %s316 = smul.addr %s315, 2
        %s317 = smul.addr %s313, 32
        %s318 = sadd.s32 %s316, %s317
        %s319 = smul.addr %s318, 8
        %s320 = scalar_lea.vmem %s2, %s319
        %s321 = sadd.s32 %s21, 1
        %s322 = smul.u32 %s321, 4
        %p323 = scmp.lt.s32.totalorder %s322, 7
        %s324 = scalar_select %p323, %s322, 7
        %s325 = smul.u32 2, %s324
      $region44: #{tpu_custom_call.1} parent=31 // pred_fallthru
        _
    $region32: #{tpu_custom_call.1} parent=5 // pred_fallthru
      _
    %p326 = scmp.le.s32.totalorder 1, %s13
    %p327 = scmp.lt.s32.totalorder %s13, 5
    %p328 = pnand %p326, %p327
    %p329 = pneg %p328
    // Predicated region
    $region45: #{tpu_custom_call.1} parent=5 // pred_check
      _
    $region46: #{tpu_custom_call.1} parent=5 // pred_check_branch
      %331 = sbr.rel (%p328) target = $region48
    $region47: #{tpu_custom_call.1} parent=5 // pred_region
      %s332 = ssub.s32 %s13, 1
      %s333 = smul.u32 8, %s23
      %p334 = scmp.lt.s32.totalorder %s22, 1
      %s335 = scalar_select %p334, %s22, 1
      %p336 = scmp.lt.s32.totalorder %s333, 15
      %s337 = scalar_select %p336, %s333, 15
      %s338 = smul.addr %s337, 2
      %s339 = smul.addr %s335, 32
      %s340 = sadd.s32 %s338, %s339
      %s341 = smul.addr %s340, 8
      %s342 = scalar_lea.vmem %s0, %s341
      %p343 = pneg %p53
      %p344 = pneg %p50
      %s345 = smul.u32 %s23, 4
      %s346 = ssub.s32 %s345, 1
      %p347 = scmp.gt.s32.totalorder %s346, 0
      %s348 = scalar_select %p347, %s346, 0
      %s349 = smul.u32 2, %s348
      %p350 = scmp.lt.s32.totalorder %s22, 1
      %s351 = scalar_select %p350, %s22, 1
      %p352 = scmp.lt.s32.totalorder %s349, 15
      %s353 = scalar_select %p352, %s349, 15
      %s354 = smul.addr %s353, 2
      %s355 = smul.addr %s351, 32
      %s356 = sadd.s32 %s354, %s355
      %s357 = smul.addr %s356, 8
      %s358 = scalar_lea.vmem %s1, %s357
      %p359 = pneg %p89
      %p360 = pneg %p86
      %s361 = sadd.s32 %s23, 1
      %s362 = smul.u32 %s361, 4
      %p363 = scmp.lt.s32.totalorder %s362, 7
      %s364 = scalar_select %p363, %s362, 7
      %s365 = smul.u32 2, %s364
      %p366 = scmp.lt.s32.totalorder %s22, 1
      %s367 = scalar_select %p366, %s22, 1
      %p368 = scmp.lt.s32.totalorder %s365, 15
      %s369 = scalar_select %p368, %s365, 15
      %s370 = smul.addr %s369, 2
      %s371 = smul.addr %s367, 32
      %s372 = sadd.s32 %s370, %s371
      %s373 = smul.addr %s372, 8
      %s374 = scalar_lea.vmem %s2, %s373
      %p375 = pneg %p125
      %p376 = pneg %p122
      %p377 = pneg %p146
      %p378 = pneg %p143
      %p379 = pneg %p167
      %p380 = pneg %p164
      %p381 = pneg %p188
      %p382 = pneg %p185
      %p383 = pneg %p209
      %p384 = pneg %p206
      %p385 = pneg %p237
      %p386 = pneg %p234
      %s387 = smul.u32 8, %s23
      %p388 = scmp.lt.s32.totalorder %s22, 1
      %s389 = scalar_select %p388, %s22, 1
      %p390 = scmp.lt.s32.totalorder %s387, 15
      %s391 = scalar_select %p390, %s387, 15
      %s392 = smul.addr %s391, 2
      %s393 = smul.addr %s389, 32
      %s394 = sadd.s32 %s392, %s393
      %s395 = smul.addr %s394, 8
      %s396 = scalar_lea.vmem %s7, %s395
      %s397 = smul.u32 8, %s23
      %p398 = scmp.lt.s32.totalorder %s22, 1
      %s399 = scalar_select %p398, %s22, 1
      %p400 = scmp.lt.s32.totalorder %s397, 15
      %s401 = scalar_select %p400, %s397, 15
      %s402 = smul.addr %s401, 2
      %s403 = smul.addr %s399, 32
      %s404 = sadd.s32 %s402, %s403
      %s405 = smul.addr %s404, 8
      %s406 = scalar_lea.vmem %s0, %s405
      %s407 = smul.u32 8, %s23
      %s408 = smul.u32 %s23, 4
      %s409 = ssub.s32 %s408, 1
      %p410 = scmp.gt.s32.totalorder %s409, 0
      %s411 = scalar_select %p410, %s409, 0
      %s412 = smul.u32 2, %s411
      %p413 = scmp.lt.s32.totalorder %s22, 1
      %s414 = scalar_select %p413, %s22, 1
      %p415 = scmp.lt.s32.totalorder %s412, 15
      %s416 = scalar_select %p415, %s412, 15
      %s417 = smul.addr %s416, 2
      %s418 = smul.addr %s414, 32
      %s419 = sadd.s32 %s417, %s418
      %s420 = smul.addr %s419, 8
      %s421 = scalar_lea.vmem %s1, %s420
      %s422 = smul.u32 %s23, 4
      %s423 = ssub.s32 %s422, 1
      %p424 = scmp.gt.s32.totalorder %s423, 0
      %s425 = scalar_select %p424, %s423, 0
      %s426 = smul.u32 2, %s425
      %s427 = sadd.s32 %s23, 1
      %s428 = smul.u32 %s427, 4
      %p429 = scmp.lt.s32.totalorder %s428, 7
      %s430 = scalar_select %p429, %s428, 7
      %s431 = smul.u32 2, %s430
      %p432 = scmp.lt.s32.totalorder %s22, 1
      %s433 = scalar_select %p432, %s22, 1
      %p434 = scmp.lt.s32.totalorder %s431, 15
      %s435 = scalar_select %p434, %s431, 15
      %s436 = smul.addr %s435, 2
      %s437 = smul.addr %s433, 32
      %s438 = sadd.s32 %s436, %s437
      %s439 = smul.addr %s438, 8
      %s440 = scalar_lea.vmem %s2, %s439
      %s441 = sadd.s32 %s23, 1
      %s442 = smul.u32 %s441, 4
      %p443 = scmp.lt.s32.totalorder %s442, 7
      %s444 = scalar_select %p443, %s442, 7
      %s445 = smul.u32 2, %s444
      %s446 = smul.u32 8, %s23
      %p447 = scmp.lt.s32.totalorder %s22, 1
      %s448 = scalar_select %p447, %s22, 1
      %p449 = scmp.lt.s32.totalorder %s446, 15
      %s450 = scalar_select %p449, %s446, 15
      %s451 = smul.addr %s450, 2
      %s452 = smul.addr %s448, 32
      %s453 = sadd.s32 %s451, %s452
      %s454 = smul.addr %s453, 8
      %s455 = scalar_lea.vmem %s7, %s454
      %s456 = smul.u32 8, %s23
      %v457 = vld [vmem:[%s3] sm:$0xf]
      %v458 = vld [vmem:[%s4] sm:$0x1]
      %v459 = vld [vmem:[%s406] sm:$0xff]
      %v460 = vld [vmem:[%s406 + $0x8] sm:$0xff]
      %v461 = vld [vmem:[%s406 + $0x10] sm:$0xff]
      %v462 = vld [vmem:[%s406 + $0x18] sm:$0xff]
      %v463 = vld [vmem:[%s406 + $0x20] sm:$0xff]
      %v464 = vld [vmem:[%s406 + $0x28] sm:$0xff]
      %v465 = vld [vmem:[%s406 + $0x30] sm:$0xff]
      %v466 = vld [vmem:[%s406 + $0x38] sm:$0xff]
      %v467 = vld [vmem:[%s406 + $0x40] sm:$0xff]
      %v468 = vld [vmem:[%s406 + $0x48] sm:$0xff]
      %v469 = vld [vmem:[%s406 + $0x50] sm:$0xff]
      %v470 = vld [vmem:[%s406 + $0x58] sm:$0xff]
      %v471 = vld [vmem:[%s406 + $0x60] sm:$0xff]
      %v472 = vld [vmem:[%s406 + $0x68] sm:$0xff]
      %v473 = vld [vmem:[%s406 + $0x70] sm:$0xff]
      %v474 = vld [vmem:[%s406 + $0x78] sm:$0xff]
      %v476 = vlaneseq
      %v477 = vshrl.u32 %v476, 7
      %v478 = vsub.s32 0, %v477
      %v479 = vrot.slane %v458, %v478
      %vm481 = vcmask 31744
      %v483 = vsel %vm481, %v459, 0
      %v486 = vsel %vm481, %v460, 0
      %v489 = vsel %vm481, %v461, 0
      %v492 = vsel %vm481, %v462, 0
      %v495 = vsel %vm481, %v463, 0
      %v498 = vsel %vm481, %v464, 0
      %v501 = vsel %vm481, %v465, 0
      %v504 = vsel %vm481, %v466, 0
      %v507 = vsel %vm481, %v467, 0
      %v510 = vsel %vm481, %v468, 0
      %v513 = vsel %vm481, %v469, 0
      %v516 = vsel %vm481, %v470, 0
      %v519 = vsel %vm481, %v471, 0
      %v522 = vsel %vm481, %v472, 0
      %v525 = vsel %vm481, %v473, 0
      %v528 = vsel %vm481, %v474, 0
      %vm530 = vcmask 1043456
      %v532 = vsel %vm530, %v457, 0
      %534 = vmatprep.subr.mxu0 0.0
      %535 = vmatpush1.msra.mxu0 0.0
      %536 = vmatprep.subr.mxu0 0.0
      %537 = vmatpush1.msra.mxu0 0.0
      %538 = vmatprep.subr.mxu0 0.0
      %539 = vmatpush1.msra.mxu0 0.0
      %540 = vmatprep.subr.mxu0 0.0
      %541 = vmatpush1.msra.mxu0 0.0
      %542 = vmatprep.subr.mxu0 0.0
      %543 = vmatpush1.msra.mxu0 0.0
      %544 = vmatprep.subr.mxu0 0.0
      %545 = vmatpush1.msra.mxu0 0.0
      %546 = vmatprep.subr.mxu0 0.0
      %547 = vmatpush1.msra.mxu0 0.0
      %548 = vmatprep.subr.mxu0 0.0
      %549 = vmatpush1.msra.mxu0 0.0
      %550 = vmatprep.subr.mxu0 0.0
      %551 = vmatpush1.msra.mxu0 0.0
      %552 = vmatprep.subr.mxu0 0.0
      %553 = vmatpush1.msra.mxu0 0.0
      %554 = vmatprep.subr.mxu0 0.0
      %555 = vmatpush1.msra.mxu0 0.0
      %556 = vmatprep.subr.mxu0 0.0
      %557 = vmatpush1.msra.mxu0 0.0
      %558 = vmatprep.subr.mxu0 0.0
      %559 = vmatpush1.msra.mxu0 0.0
      %560 = vmatprep.subr.mxu0 0.0
      %561 = vmatpush1.msra.mxu0 0.0
      %562 = vmatprep.subr.mxu0 0.0
      %563 = vmatpush1.msra.mxu0 0.0
      %564 = vmatprep.subr.mxu0 0.0
      %565 = vmatpush1.msra.mxu0 %v532
      %566 = vmatprep.subr.mxu0 0.0
      %567 = vmatpush2.msra.mxu0 0.0
      %568 = vmatprep.subr.mxu0 0.0
      %569 = vmatpush2.msra.mxu0 0.0
      %570 = vmatprep.subr.mxu0 0.0
      %571 = vmatpush2.msra.mxu0 0.0
      %572 = vmatprep.subr.mxu0 0.0
      %573 = vmatpush2.msra.mxu0 0.0
      %574 = vmatprep.subr.mxu0 0.0
      %575 = vmatpush2.msra.mxu0 0.0
      %576 = vmatprep.subr.mxu0 0.0
      %577 = vmatpush2.msra.mxu0 0.0
      %578 = vmatprep.subr.mxu0 0.0
      %579 = vmatpush2.msra.mxu0 0.0
      %580 = vmatprep.subr.mxu0 0.0
      %581 = vmatpush2.msra.mxu0 0.0
      %582 = vmatprep.subr.mxu0 0.0
      %583 = vmatpush2.msra.mxu0 0.0
      %584 = vmatprep.subr.mxu0 0.0
      %585 = vmatpush2.msra.mxu0 0.0
      %586 = vmatprep.subr.mxu0 0.0
      %587 = vmatpush2.msra.mxu0 0.0
      %588 = vmatprep.subr.mxu0 0.0
      %589 = vmatpush2.msra.mxu0 0.0
      %590 = vmatprep.subr.mxu0 0.0
      %591 = vmatpush2.msra.mxu0 0.0
      %592 = vmatprep.subr.mxu0 0.0
      %593 = vmatpush2.msra.mxu0 0.0
      %594 = vmatprep.subr.mxu0 0.0
      %595 = vmatpush2.msra.mxu0 0.0
      %596 = vmatprep.subr.mxu0 0.0
      %597 = vmatpush2.msra.mxu0 0.0
      %598 = vmatprep.mubr.f32.mxu0 0.0
      %599 = vmatmul.mubr.f32.gmra.mxu0 %v483
      %v600 = vpop.f32.mrf.mxu0
      %v601 = vadd.f32 %v479, %v600
      %v602 = vpop.f32.mrf.mxu0
      %603 = vmatprep.mubr.f32.mxu0 0.0
      %604 = vmatmul.mubr.f32.gmra.mxu0 %v486
      %v605 = vpop.f32.mrf.mxu0
      %v606 = vadd.f32 %v479, %v605
      %v607 = vpop.f32.mrf.mxu0
      %608 = vmatprep.mubr.f32.mxu0 0.0
      %609 = vmatmul.mubr.f32.gmra.mxu0 %v489
      %v610 = vpop.f32.mrf.mxu0
      %v611 = vadd.f32 %v479, %v610
      %v612 = vpop.f32.mrf.mxu0
      %613 = vmatprep.mubr.f32.mxu0 0.0
      %614 = vmatmul.mubr.f32.gmra.mxu0 %v492
      %v615 = vpop.f32.mrf.mxu0
      %v616 = vadd.f32 %v479, %v615
      %v617 = vpop.f32.mrf.mxu0
      %618 = vmatprep.mubr.f32.mxu0 0.0
      %619 = vmatmul.mubr.f32.gmra.mxu0 %v495
      %v620 = vpop.f32.mrf.mxu0
      %v621 = vadd.f32 %v479, %v620
      %v622 = vpop.f32.mrf.mxu0
      %623 = vmatprep.mubr.f32.mxu0 0.0
      %624 = vmatmul.mubr.f32.gmra.mxu0 %v498
      %v625 = vpop.f32.mrf.mxu0
      %v626 = vadd.f32 %v479, %v625
      %v627 = vpop.f32.mrf.mxu0
      %628 = vmatprep.mubr.f32.mxu0 0.0
      %629 = vmatmul.mubr.f32.gmra.mxu0 %v501
      %v630 = vpop.f32.mrf.mxu0
      %v631 = vadd.f32 %v479, %v630
      %v632 = vpop.f32.mrf.mxu0
      %633 = vmatprep.mubr.f32.mxu0 0.0
      %634 = vmatmul.mubr.f32.gmra.mxu0 %v504
      %v635 = vpop.f32.mrf.mxu0
      %v636 = vadd.f32 %v479, %v635
      %v637 = vpop.f32.mrf.mxu0
      %638 = vmatprep.mubr.f32.mxu0 0.0
      %639 = vmatmul.mubr.f32.gmra.mxu0 %v507
      %v640 = vpop.f32.mrf.mxu0
      %v641 = vadd.f32 %v479, %v640
      %v642 = vpop.f32.mrf.mxu0
      %643 = vmatprep.mubr.f32.mxu0 0.0
      %644 = vmatmul.mubr.f32.gmra.mxu0 %v510
      %v645 = vpop.f32.mrf.mxu0
      %v646 = vadd.f32 %v479, %v645
      %v647 = vpop.f32.mrf.mxu0
      %648 = vmatprep.mubr.f32.mxu0 0.0
      %649 = vmatmul.mubr.f32.gmra.mxu0 %v513
      %v650 = vpop.f32.mrf.mxu0
      %v651 = vadd.f32 %v479, %v650
      %v652 = vpop.f32.mrf.mxu0
      %653 = vmatprep.mubr.f32.mxu0 0.0
      %654 = vmatmul.mubr.f32.gmra.mxu0 %v516
      %v655 = vpop.f32.mrf.mxu0
      %v656 = vadd.f32 %v479, %v655
      %v657 = vpop.f32.mrf.mxu0
      %658 = vmatprep.mubr.f32.mxu0 0.0
      %659 = vmatmul.mubr.f32.gmra.mxu0 %v519
      %v660 = vpop.f32.mrf.mxu0
      %v661 = vadd.f32 %v479, %v660
      %v662 = vpop.f32.mrf.mxu0
      %663 = vmatprep.mubr.f32.mxu0 0.0
      %664 = vmatmul.mubr.f32.gmra.mxu0 %v522
      %v665 = vpop.f32.mrf.mxu0
      %v666 = vadd.f32 %v479, %v665
      %v667 = vpop.f32.mrf.mxu0
      %668 = vmatprep.mubr.f32.mxu0 0.0
      %669 = vmatmul.mubr.f32.gmra.mxu0 %v525
      %v670 = vpop.f32.mrf.mxu0
      %v671 = vadd.f32 %v479, %v670
      %v672 = vpop.f32.mrf.mxu0
      %673 = vmatprep.mubr.f32.mxu0 0.0
      %674 = vmatmul.mubr.f32.gmra.mxu0 %v528
      %v675 = vpop.f32.mrf.mxu0
      %v676 = vadd.f32 %v479, %v675
      %v677 = vpop.f32.mrf.mxu0
      %678 = vdwg.mxu0
      %v679 = vxor.u32 %v601, 2147483648
      %v680 = vxor.u32 %v606, 2147483648
      %v681 = vxor.u32 %v611, 2147483648
      %v682 = vxor.u32 %v616, 2147483648
      %v683 = vxor.u32 %v621, 2147483648
      %v684 = vxor.u32 %v626, 2147483648
      %v685 = vxor.u32 %v631, 2147483648
      %v686 = vxor.u32 %v636, 2147483648
      %v687 = vxor.u32 %v641, 2147483648
      %v688 = vxor.u32 %v646, 2147483648
      %v689 = vxor.u32 %v651, 2147483648
      %v690 = vxor.u32 %v656, 2147483648
      %v691 = vxor.u32 %v661, 2147483648
      %v692 = vxor.u32 %v666, 2147483648
      %v693 = vxor.u32 %v671, 2147483648
      %v694 = vxor.u32 %v676, 2147483648
      %v695 = vmul.f32 %v679, 1.442695
      %v696 = vpow.pop %v695
      %v697 = vmul.f32 %v680, 1.442695
      %v698 = vpow.pop %v697
      %v699 = vmul.f32 %v681, 1.442695
      %v700 = vpow.pop %v699
      %v701 = vmul.f32 %v682, 1.442695
      %v702 = vpow.pop %v701
      %v703 = vmul.f32 %v683, 1.442695
      %v704 = vpow.pop %v703
      %v705 = vmul.f32 %v684, 1.442695
      %v706 = vpow.pop %v705
      %v707 = vmul.f32 %v685, 1.442695
      %v708 = vpow.pop %v707
      %v709 = vmul.f32 %v686, 1.442695
      %v710 = vpow.pop %v709
      %v711 = vmul.f32 %v687, 1.442695
      %v712 = vpow.pop %v711
      %v713 = vmul.f32 %v688, 1.442695
      %v714 = vpow.pop %v713
      %v715 = vmul.f32 %v689, 1.442695
      %v716 = vpow.pop %v715
      %v717 = vmul.f32 %v690, 1.442695
      %v718 = vpow.pop %v717
      %v719 = vmul.f32 %v691, 1.442695
      %v720 = vpow.pop %v719
      %v721 = vmul.f32 %v692, 1.442695
      %v722 = vpow.pop %v721
      %v723 = vmul.f32 %v693, 1.442695
      %v724 = vpow.pop %v723
      %v725 = vmul.f32 %v694, 1.442695
      %v726 = vpow.pop %v725
      %v727 = vadd.f32 %v696, 1.0
      %v728 = vadd.f32 %v698, 1.0
      %v729 = vadd.f32 %v700, 1.0
      %v730 = vadd.f32 %v702, 1.0
      %v731 = vadd.f32 %v704, 1.0
      %v732 = vadd.f32 %v706, 1.0
      %v733 = vadd.f32 %v708, 1.0
      %v734 = vadd.f32 %v710, 1.0
      %v735 = vadd.f32 %v712, 1.0
      %v736 = vadd.f32 %v714, 1.0
      %v737 = vadd.f32 %v716, 1.0
      %v738 = vadd.f32 %v718, 1.0
      %v739 = vadd.f32 %v720, 1.0
      %v740 = vadd.f32 %v722, 1.0
      %v741 = vadd.f32 %v724, 1.0
      %v742 = vadd.f32 %v726, 1.0
      %v743 = vrcp.pop %v727
      %v744 = vmul.f32 1.0, %v743
      %v745 = vrcp.pop %v728
      %v746 = vmul.f32 1.0, %v745
      %v747 = vrcp.pop %v729
      %v748 = vmul.f32 1.0, %v747
      %v749 = vrcp.pop %v730
      %v750 = vmul.f32 1.0, %v749
      %v751 = vrcp.pop %v731
      %v752 = vmul.f32 1.0, %v751
      %v753 = vrcp.pop %v732
      %v754 = vmul.f32 1.0, %v753
      %v755 = vrcp.pop %v733
      %v756 = vmul.f32 1.0, %v755
      %v757 = vrcp.pop %v734
      %v758 = vmul.f32 1.0, %v757
      %v759 = vrcp.pop %v735
      %v760 = vmul.f32 1.0, %v759
      %v761 = vrcp.pop %v736
      %v762 = vmul.f32 1.0, %v761
      %v763 = vrcp.pop %v737
      %v764 = vmul.f32 1.0, %v763
      %v765 = vrcp.pop %v738
      %v766 = vmul.f32 1.0, %v765
      %v767 = vrcp.pop %v739
      %v768 = vmul.f32 1.0, %v767
      %v769 = vrcp.pop %v740
      %v770 = vmul.f32 1.0, %v769
      %v771 = vrcp.pop %v741
      %v772 = vmul.f32 1.0, %v771
      %v773 = vrcp.pop %v742
      %v774 = vmul.f32 1.0, %v773
      %v775 = vmul.f32 %v601, %v744
      %v776 = vmul.f32 %v606, %v746
      %v777 = vmul.f32 %v611, %v748
      %v778 = vmul.f32 %v616, %v750
      %v779 = vmul.f32 %v621, %v752
      %v780 = vmul.f32 %v626, %v754
      %v781 = vmul.f32 %v631, %v756
      %v782 = vmul.f32 %v636, %v758
      %v783 = vmul.f32 %v641, %v760
      %v784 = vmul.f32 %v646, %v762
      %v785 = vmul.f32 %v651, %v764
      %v786 = vmul.f32 %v656, %v766
      %v787 = vmul.f32 %v661, %v768
      %v788 = vmul.f32 %v666, %v770
      %v789 = vmul.f32 %v671, %v772
      %v790 = vmul.f32 %v676, %v774
      %v791 = vld [vmem:[%s421] sm:$0xff]
      %v792 = vld [vmem:[%s421 + $0x8] sm:$0xff]
      %v793 = vld [vmem:[%s421 + $0x10] sm:$0xff]
      %v794 = vld [vmem:[%s421 + $0x18] sm:$0xff]
      %v796 = vsel %vm481, %v791, 0
      %v799 = vsel %vm481, %v792, 0
      %v802 = vsel %vm481, %v793, 0
      %v805 = vsel %vm481, %v794, 0
      %807 = vmatprep.subr.mxu0 0.0
      %808 = vmatpush1.msra.mxu0 0.0
      %809 = vmatprep.subr.mxu0 0.0
      %810 = vmatpush1.msra.mxu0 0.0
      %811 = vmatprep.subr.mxu0 0.0
      %812 = vmatpush1.msra.mxu0 0.0
      %813 = vmatprep.subr.mxu0 0.0
      %814 = vmatpush1.msra.mxu0 0.0
      %815 = vmatprep.subr.mxu0 0.0
      %816 = vmatpush1.msra.mxu0 0.0
      %817 = vmatprep.subr.mxu0 0.0
      %818 = vmatpush1.msra.mxu0 0.0
      %819 = vmatprep.subr.mxu0 0.0
      %820 = vmatpush1.msra.mxu0 0.0
      %821 = vmatprep.subr.mxu0 0.0
      %822 = vmatpush1.msra.mxu0 0.0
      %823 = vmatprep.subr.mxu0 0.0
      %824 = vmatpush1.msra.mxu0 0.0
      %825 = vmatprep.subr.mxu0 0.0
      %826 = vmatpush1.msra.mxu0 0.0
      %827 = vmatprep.subr.mxu0 0.0
      %828 = vmatpush1.msra.mxu0 0.0
      %829 = vmatprep.subr.mxu0 0.0
      %830 = vmatpush1.msra.mxu0 0.0
      %831 = vmatprep.subr.mxu0 0.0
      %832 = vmatpush1.msra.mxu0 0.0
      %833 = vmatprep.subr.mxu0 0.0
      %834 = vmatpush1.msra.mxu0 0.0
      %835 = vmatprep.subr.mxu0 0.0
      %836 = vmatpush1.msra.mxu0 0.0
      %837 = vmatprep.subr.mxu0 0.0
      %838 = vmatpush1.msra.mxu0 %v532
      %839 = vmatprep.subr.mxu0 0.0
      %840 = vmatpush2.msra.mxu0 0.0
      %841 = vmatprep.subr.mxu0 0.0
      %842 = vmatpush2.msra.mxu0 0.0
      %843 = vmatprep.subr.mxu0 0.0
      %844 = vmatpush2.msra.mxu0 0.0
      %845 = vmatprep.subr.mxu0 0.0
      %846 = vmatpush2.msra.mxu0 0.0
      %847 = vmatprep.subr.mxu0 0.0
      %848 = vmatpush2.msra.mxu0 0.0
      %849 = vmatprep.subr.mxu0 0.0
      %850 = vmatpush2.msra.mxu0 0.0
      %851 = vmatprep.subr.mxu0 0.0
      %852 = vmatpush2.msra.mxu0 0.0
      %853 = vmatprep.subr.mxu0 0.0
      %854 = vmatpush2.msra.mxu0 0.0
      %855 = vmatprep.subr.mxu0 0.0
      %856 = vmatpush2.msra.mxu0 0.0
      %857 = vmatprep.subr.mxu0 0.0
      %858 = vmatpush2.msra.mxu0 0.0
      %859 = vmatprep.subr.mxu0 0.0
      %860 = vmatpush2.msra.mxu0 0.0
      %861 = vmatprep.subr.mxu0 0.0
      %862 = vmatpush2.msra.mxu0 0.0
      %863 = vmatprep.subr.mxu0 0.0
      %864 = vmatpush2.msra.mxu0 0.0
      %865 = vmatprep.subr.mxu0 0.0
      %866 = vmatpush2.msra.mxu0 0.0
      %867 = vmatprep.subr.mxu0 0.0
      %868 = vmatpush2.msra.mxu0 0.0
      %869 = vmatprep.subr.mxu0 0.0
      %870 = vmatpush2.msra.mxu0 0.0
      %871 = vmatprep.mubr.f32.mxu0 0.0
      %872 = vmatmul.mubr.f32.gmra.mxu0 %v796
      %v873 = vpop.f32.mrf.mxu0
      %v874 = vadd.f32 %v479, %v873
      %v875 = vpop.f32.mrf.mxu0
      %876 = vmatprep.mubr.f32.mxu0 0.0
      %877 = vmatmul.mubr.f32.gmra.mxu0 %v799
      %v878 = vpop.f32.mrf.mxu0
      %v879 = vadd.f32 %v479, %v878
      %v880 = vpop.f32.mrf.mxu0
      %881 = vmatprep.mubr.f32.mxu0 0.0
      %882 = vmatmul.mubr.f32.gmra.mxu0 %v802
      %v883 = vpop.f32.mrf.mxu0
      %v884 = vadd.f32 %v479, %v883
      %v885 = vpop.f32.mrf.mxu0
      %886 = vmatprep.mubr.f32.mxu0 0.0
      %887 = vmatmul.mubr.f32.gmra.mxu0 %v805
      %v888 = vpop.f32.mrf.mxu0
      %v889 = vadd.f32 %v479, %v888
      %v890 = vpop.f32.mrf.mxu0
      %891 = vdwg.mxu0
      %v892 = vxor.u32 %v874, 2147483648
      %v893 = vxor.u32 %v879, 2147483648
      %v894 = vxor.u32 %v884, 2147483648
      %v895 = vxor.u32 %v889, 2147483648
      %v896 = vmul.f32 %v892, 1.442695
      %v897 = vpow.pop %v896
      %v898 = vmul.f32 %v893, 1.442695
      %v899 = vpow.pop %v898
      %v900 = vmul.f32 %v894, 1.442695
      %v901 = vpow.pop %v900
      %v902 = vmul.f32 %v895, 1.442695
      %v903 = vpow.pop %v902
      %v904 = vadd.f32 %v897, 1.0
      %v905 = vadd.f32 %v899, 1.0
      %v906 = vadd.f32 %v901, 1.0
      %v907 = vadd.f32 %v903, 1.0
      %v908 = vrcp.pop %v904
      %v909 = vmul.f32 1.0, %v908
      %v910 = vrcp.pop %v905
      %v911 = vmul.f32 1.0, %v910
      %v912 = vrcp.pop %v906
      %v913 = vmul.f32 1.0, %v912
      %v914 = vrcp.pop %v907
      %v915 = vmul.f32 1.0, %v914
      %v916 = vmul.f32 %v874, %v909
      %v917 = vmul.f32 %v879, %v911
      %v918 = vmul.f32 %v884, %v913
      %v919 = vmul.f32 %v889, %v915
      %v920 = vld [vmem:[%s440] sm:$0xff]
      %v921 = vld [vmem:[%s440 + $0x8] sm:$0xff]
      %v922 = vld [vmem:[%s440 + $0x10] sm:$0xff]
      %v923 = vld [vmem:[%s440 + $0x18] sm:$0xff]
      %v925 = vsel %vm481, %v920, 0
      %v928 = vsel %vm481, %v921, 0
      %v931 = vsel %vm481, %v922, 0
      %v934 = vsel %vm481, %v923, 0
      %936 = vmatprep.subr.mxu0 0.0
      %937 = vmatpush1.msra.mxu0 0.0
      %938 = vmatprep.subr.mxu0 0.0
      %939 = vmatpush1.msra.mxu0 0.0
      %940 = vmatprep.subr.mxu0 0.0
      %941 = vmatpush1.msra.mxu0 0.0
      %942 = vmatprep.subr.mxu0 0.0
      %943 = vmatpush1.msra.mxu0 0.0
      %944 = vmatprep.subr.mxu0 0.0
      %945 = vmatpush1.msra.mxu0 0.0
      %946 = vmatprep.subr.mxu0 0.0
      %947 = vmatpush1.msra.mxu0 0.0
      %948 = vmatprep.subr.mxu0 0.0
      %949 = vmatpush1.msra.mxu0 0.0
      %950 = vmatprep.subr.mxu0 0.0
      %951 = vmatpush1.msra.mxu0 0.0
      %952 = vmatprep.subr.mxu0 0.0
      %953 = vmatpush1.msra.mxu0 0.0
      %954 = vmatprep.subr.mxu0 0.0
      %955 = vmatpush1.msra.mxu0 0.0
      %956 = vmatprep.subr.mxu0 0.0
      %957 = vmatpush1.msra.mxu0 0.0
      %958 = vmatprep.subr.mxu0 0.0
      %959 = vmatpush1.msra.mxu0 0.0
      %960 = vmatprep.subr.mxu0 0.0
      %961 = vmatpush1.msra.mxu0 0.0
      %962 = vmatprep.subr.mxu0 0.0
      %963 = vmatpush1.msra.mxu0 0.0
      %964 = vmatprep.subr.mxu0 0.0
      %965 = vmatpush1.msra.mxu0 0.0
      %966 = vmatprep.subr.mxu0 0.0
      %967 = vmatpush1.msra.mxu0 %v532
      %968 = vmatprep.subr.mxu0 0.0
      %969 = vmatpush2.msra.mxu0 0.0
      %970 = vmatprep.subr.mxu0 0.0
      %971 = vmatpush2.msra.mxu0 0.0
      %972 = vmatprep.subr.mxu0 0.0
      %973 = vmatpush2.msra.mxu0 0.0
      %974 = vmatprep.subr.mxu0 0.0
      %975 = vmatpush2.msra.mxu0 0.0
      %976 = vmatprep.subr.mxu0 0.0
      %977 = vmatpush2.msra.mxu0 0.0
      %978 = vmatprep.subr.mxu0 0.0
      %979 = vmatpush2.msra.mxu0 0.0
      %980 = vmatprep.subr.mxu0 0.0
      %981 = vmatpush2.msra.mxu0 0.0
      %982 = vmatprep.subr.mxu0 0.0
      %983 = vmatpush2.msra.mxu0 0.0
      %984 = vmatprep.subr.mxu0 0.0
      %985 = vmatpush2.msra.mxu0 0.0
      %986 = vmatprep.subr.mxu0 0.0
      %987 = vmatpush2.msra.mxu0 0.0
      %988 = vmatprep.subr.mxu0 0.0
      %989 = vmatpush2.msra.mxu0 0.0
      %990 = vmatprep.subr.mxu0 0.0
      %991 = vmatpush2.msra.mxu0 0.0
      %992 = vmatprep.subr.mxu0 0.0
      %993 = vmatpush2.msra.mxu0 0.0
      %994 = vmatprep.subr.mxu0 0.0
      %995 = vmatpush2.msra.mxu0 0.0
      %996 = vmatprep.subr.mxu0 0.0
      %997 = vmatpush2.msra.mxu0 0.0
      %998 = vmatprep.subr.mxu0 0.0
      %999 = vmatpush2.msra.mxu0 0.0
      %1000 = vmatprep.mubr.f32.mxu0 0.0
      %1001 = vmatmul.mubr.f32.gmra.mxu0 %v925
      %v1002 = vpop.f32.mrf.mxu0
      %v1003 = vadd.f32 %v479, %v1002
      %v1004 = vpop.f32.mrf.mxu0
      %1005 = vmatprep.mubr.f32.mxu0 0.0
      %1006 = vmatmul.mubr.f32.gmra.mxu0 %v928
      %v1007 = vpop.f32.mrf.mxu0
      %v1008 = vadd.f32 %v479, %v1007
      %v1009 = vpop.f32.mrf.mxu0
      %1010 = vmatprep.mubr.f32.mxu0 0.0
      %1011 = vmatmul.mubr.f32.gmra.mxu0 %v931
      %v1012 = vpop.f32.mrf.mxu0
      %v1013 = vadd.f32 %v479, %v1012
      %v1014 = vpop.f32.mrf.mxu0
      %1015 = vmatprep.mubr.f32.mxu0 0.0
      %1016 = vmatmul.mubr.f32.gmra.mxu0 %v934
      %v1017 = vpop.f32.mrf.mxu0
      %v1018 = vadd.f32 %v479, %v1017
      %v1019 = vpop.f32.mrf.mxu0
      %1020 = vdwg.mxu0
      %v1021 = vxor.u32 %v1003, 2147483648
      %v1022 = vxor.u32 %v1008, 2147483648
      %v1023 = vxor.u32 %v1013, 2147483648
      %v1024 = vxor.u32 %v1018, 2147483648
      %v1025 = vmul.f32 %v1021, 1.442695
      %v1026 = vpow.pop %v1025
      %v1027 = vmul.f32 %v1022, 1.442695
      %v1028 = vpow.pop %v1027
      %v1029 = vmul.f32 %v1023, 1.442695
      %v1030 = vpow.pop %v1029
      %v1031 = vmul.f32 %v1024, 1.442695
      %v1032 = vpow.pop %v1031
      %v1033 = vadd.f32 %v1026, 1.0
      %v1034 = vadd.f32 %v1028, 1.0
      %v1035 = vadd.f32 %v1030, 1.0
      %v1036 = vadd.f32 %v1032, 1.0
      %v1037 = vrcp.pop %v1033
      %v1038 = vmul.f32 1.0, %v1037
      %v1039 = vrcp.pop %v1034
      %v1040 = vmul.f32 1.0, %v1039
      %v1041 = vrcp.pop %v1035
      %v1042 = vmul.f32 1.0, %v1041
      %v1043 = vrcp.pop %v1036
      %v1044 = vmul.f32 1.0, %v1043
      %v1045 = vmul.f32 %v1003, %v1038
      %v1046 = vmul.f32 %v1008, %v1040
      %v1047 = vmul.f32 %v1013, %v1042
      %v1048 = vmul.f32 %v1018, %v1044
      %1049 = vst.msk [vmem:[#allocation2 + $0x2] sm:$0xff] %vm481, %v916
      %1050 = vst.msk [vmem:[#allocation2 + $0xa] sm:$0xff] %vm481, %v917
      %1051 = vst.msk [vmem:[#allocation2 + $0x1a] sm:$0xff] %vm481, %v918
      %1052 = vst.msk [vmem:[#allocation2 + $0x22] sm:$0xff] %vm481, %v919
      %s1053 = scalar_lea.vmem [#allocation2], 48
      %1054 = vst.msk [vmem:[%s1053 + $0x2] sm:$0xff] %vm481, %v775
      %1055 = vst.msk [vmem:[%s1053 + $0xa] sm:$0xff] %vm481, %v776
      %1056 = vst.msk [vmem:[%s1053 + $0x1a] sm:$0xff] %vm481, %v777
      %1057 = vst.msk [vmem:[%s1053 + $0x22] sm:$0xff] %vm481, %v778
      %1058 = vst.msk [vmem:[%s1053 + $0x32] sm:$0xff] %vm481, %v779
      %1059 = vst.msk [vmem:[%s1053 + $0x3a] sm:$0xff] %vm481, %v780
      %1060 = vst.msk [vmem:[%s1053 + $0x4a] sm:$0xff] %vm481, %v781
      %1061 = vst.msk [vmem:[%s1053 + $0x52] sm:$0xff] %vm481, %v782
      %1062 = vst.msk [vmem:[%s1053 + $0x62] sm:$0xff] %vm481, %v783
      %1063 = vst.msk [vmem:[%s1053 + $0x6a] sm:$0xff] %vm481, %v784
      %1064 = vst.msk [vmem:[%s1053 + $0x7a] sm:$0xff] %vm481, %v785
      %1065 = vst.msk [vmem:[%s1053 + $0x82] sm:$0xff] %vm481, %v786
      %1066 = vst.msk [vmem:[%s1053 + $0x92] sm:$0xff] %vm481, %v787
      %1067 = vst.msk [vmem:[%s1053 + $0x9a] sm:$0xff] %vm481, %v788
      %1068 = vst.msk [vmem:[%s1053 + $0xaa] sm:$0xff] %vm481, %v789
      %1069 = vst.msk [vmem:[%s1053 + $0xb2] sm:$0xff] %vm481, %v790
      %s1070 = scalar_lea.vmem [#allocation2], 240
      %1071 = vst.msk [vmem:[%s1070 + $0x2] sm:$0xff] %vm481, %v1045
      %1072 = vst.msk [vmem:[%s1070 + $0xa] sm:$0xff] %vm481, %v1046
      %1073 = vst.msk [vmem:[%s1070 + $0x1a] sm:$0xff] %vm481, %v1047
      %1074 = vst.msk [vmem:[%s1070 + $0x22] sm:$0xff] %vm481, %v1048
      %vm1075 = vcmask 25600
      %1076 = vst.msk [vmem:[#allocation2] sm:$0x3] %vm1075, 0.0
      %1077 = vst.msk [vmem:[#allocation2 + $0x18] sm:$0x3] %vm1075, 0.0
      %1078 = vst.msk [vmem:[#allocation2 + $0x30] sm:$0x3] %vm1075, 0.0
      %1079 = vst.msk [vmem:[#allocation2 + $0x48] sm:$0x3] %vm1075, 0.0
      %1080 = vst.msk [vmem:[#allocation2 + $0x60] sm:$0x3] %vm1075, 0.0
      %1081 = vst.msk [vmem:[#allocation2 + $0x78] sm:$0x3] %vm1075, 0.0
      %1082 = vst.msk [vmem:[#allocation2 + $0x90] sm:$0x3] %vm1075, 0.0
      %1083 = vst.msk [vmem:[#allocation2 + $0xa8] sm:$0x3] %vm1075, 0.0
      %1084 = vst.msk [vmem:[#allocation2 + $0xc0] sm:$0x3] %vm1075, 0.0
      %1085 = vst.msk [vmem:[#allocation2 + $0xd8] sm:$0x3] %vm1075, 0.0
      %1086 = vst.msk [vmem:[#allocation2 + $0xf0] sm:$0x3] %vm1075, 0.0
      %1087 = vst.msk [vmem:[#allocation2 + $0x108] sm:$0x3] %vm1075, 0.0
      %1088 = vst.msk [vmem:[#allocation2 + $0x12] sm:$0x3] %vm1075, 0.0
      %1089 = vst.msk [vmem:[#allocation2 + $0x2a] sm:$0x3] %vm1075, 0.0
      %1090 = vst.msk [vmem:[#allocation2 + $0x42] sm:$0x3] %vm1075, 0.0
      %1091 = vst.msk [vmem:[#allocation2 + $0x5a] sm:$0x3] %vm1075, 0.0
      %1092 = vst.msk [vmem:[#allocation2 + $0x72] sm:$0x3] %vm1075, 0.0
      %1093 = vst.msk [vmem:[#allocation2 + $0x8a] sm:$0x3] %vm1075, 0.0
      %1094 = vst.msk [vmem:[#allocation2 + $0xa2] sm:$0x3] %vm1075, 0.0
      %1095 = vst.msk [vmem:[#allocation2 + $0xba] sm:$0x3] %vm1075, 0.0
      %1096 = vst.msk [vmem:[#allocation2 + $0xd2] sm:$0x3] %vm1075, 0.0
      %1097 = vst.msk [vmem:[#allocation2 + $0xea] sm:$0x3] %vm1075, 0.0
      %1098 = vst.msk [vmem:[#allocation2 + $0x102] sm:$0x3] %vm1075, 0.0
      %1099 = vst.msk [vmem:[#allocation2 + $0x11a] sm:$0x3] %vm1075, 0.0
      %p1100 = scmp.eq.s32.totalorder %s23, 0
      // Predicated region
      $region49: #{tpu_custom_call.1} parent=47 // pred_check
        %p1101 = pneg %p1100
      $region50: #{tpu_custom_call.1} parent=47 // pred_check_branch
        %1103 = sbr.rel (%p1101) target = $region52
      $region51: #{tpu_custom_call.1} parent=47 // pred_region
        %1104 = vst.msk [vmem:[#allocation2] sm:$0xff] %vm481, 0.0
        %1105 = vst.msk [vmem:[#allocation2 + $0x8] sm:$0xff] %vm481, 0.0
        %vm1106 = vcmask 27648
        %1107 = vst.msk [vmem:[#allocation2 + $0x10] sm:$0xf] %vm1106, 0.0
        %1108 = vst.msk [vmem:[#allocation2 + $0x18] sm:$0xff] %vm481, 0.0
        %1109 = vst.msk [vmem:[#allocation2 + $0x20] sm:$0xff] %vm481, 0.0
        %1110 = vst.msk [vmem:[#allocation2 + $0x28] sm:$0xf] %vm1106, 0.0
      $region52: #{tpu_custom_call.1} parent=47 // pred_fallthru
        _
      %p1111 = scmp.eq.s32.totalorder %s23, 1
      // Predicated region
      $region53: #{tpu_custom_call.1} parent=47 // pred_check
        %p1112 = pneg %p1111
      $region54: #{tpu_custom_call.1} parent=47 // pred_check_branch
        %1114 = sbr.rel (%p1112) target = $region56
      $region55: #{tpu_custom_call.1} parent=47 // pred_region
        %1115 = vst.msk [vmem:[%s1070] sm:$0xff] %vm481, 0.0
        %1116 = vst.msk [vmem:[%s1070 + $0x8] sm:$0xff] %vm481, 0.0
        %vm1117 = vcmask 27648
        %1118 = vst.msk [vmem:[%s1070 + $0x10] sm:$0xf] %vm1117, 0.0
        %1119 = vst.msk [vmem:[%s1070 + $0x18] sm:$0xff] %vm481, 0.0
        %1120 = vst.msk [vmem:[%s1070 + $0x20] sm:$0xff] %vm481, 0.0
        %1121 = vst.msk [vmem:[%s1070 + $0x28] sm:$0xf] %vm1117, 0.0
      $region56: #{tpu_custom_call.1} parent=47 // pred_fallthru
        _
      %v1122 = vld [vmem:[#allocation2] sm:$0xff]
      %v1123 = vld [vmem:[#allocation2 + $0x8] sm:$0xff]
      %v1124 = vld [vmem:[#allocation2 + $0x10] sm:$0xf]
      %v1125 = vld [vmem:[#allocation2 + $0x18] sm:$0xff]
      %v1126 = vld [vmem:[#allocation2 + $0x20] sm:$0xff]
      %v1127 = vld [vmem:[#allocation2 + $0x28] sm:$0xf]
      %v1128 = vld [vmem:[#allocation2 + $0x30] sm:$0xff]
      %v1129 = vld [vmem:[#allocation2 + $0x38] sm:$0xff]
      %v1130 = vld [vmem:[#allocation2 + $0x40] sm:$0xf]
      %v1131 = vld [vmem:[#allocation2 + $0x48] sm:$0xff]
      %v1132 = vld [vmem:[#allocation2 + $0x50] sm:$0xff]
      %v1133 = vld [vmem:[#allocation2 + $0x58] sm:$0xf]
      %v1134 = vld [vmem:[#allocation2 + $0x60] sm:$0xff]
      %v1135 = vld [vmem:[#allocation2 + $0x68] sm:$0xff]
      %v1136 = vld [vmem:[#allocation2 + $0x70] sm:$0xf]
      %v1137 = vld [vmem:[#allocation2 + $0x78] sm:$0xff]
      %v1138 = vld [vmem:[#allocation2 + $0x80] sm:$0xff]
      %v1139 = vld [vmem:[#allocation2 + $0x88] sm:$0xf]
      %v1140 = vld [vmem:[#allocation2 + $0x90] sm:$0xff]
      %v1141 = vld [vmem:[#allocation2 + $0x98] sm:$0xff]
      %v1142 = vld [vmem:[#allocation2 + $0xa0] sm:$0xf]
      %v1143 = vld [vmem:[#allocation2 + $0xa8] sm:$0xff]
      %v1144 = vld [vmem:[#allocation2 + $0xb0] sm:$0xff]
      %v1145 = vld [vmem:[#allocation2 + $0xb8] sm:$0xf]
      %v1146 = vld [vmem:[#allocation2 + $0xc0] sm:$0xff]
      %v1147 = vld [vmem:[#allocation2 + $0xc8] sm:$0xff]
      %v1148 = vld [vmem:[#allocation2 + $0xd0] sm:$0xf]
      %v1149 = vld [vmem:[#allocation2 + $0xd8] sm:$0xff]
      %v1150 = vld [vmem:[#allocation2 + $0xe0] sm:$0xff]
      %v1151 = vld [vmem:[#allocation2 + $0xe8] sm:$0xf]
      %v1152 = vld [vmem:[#allocation2 + $0xf0] sm:$0xff]
      %v1153 = vld [vmem:[#allocation2 + $0xf8] sm:$0xff]
      %v1154 = vld [vmem:[#allocation2 + $0x100] sm:$0xf]
      %v1155 = vld [vmem:[#allocation2 + $0x108] sm:$0xff]
      %v1156 = vld [vmem:[#allocation2 + $0x110] sm:$0xff]
      %v1157 = vld [vmem:[#allocation2 + $0x118] sm:$0xf]
      %v1158 = vld [vmem:[%s5] sm:$0x1f]
      %v1159 = vld [vmem:[%s5 + $0x8] sm:$0x1f]
      %v1160 = vld [vmem:[%s5 + $0x10] sm:$0x1f]
      %v1161 = vld [vmem:[%s5 + $0x18] sm:$0x1f]
      %v1162 = vld [vmem:[%s5 + $0x20] sm:$0x1f]
      %v1163 = vld [vmem:[%s6] sm:$0x1]
      %v1164 = vlaneseq
      %v1165 = vshrl.u32 %v1164, 7
      %v1166 = vsub.s32 0, %v1165
      %v1167 = vrot.slane %v1158, %v1166
      %v1168 = vmul.f32 %v1122, %v1167
      %v1169 = vmul.f32 %v1123, %v1167
      %v1170 = vmul.f32 %v1125, %v1167
      %v1171 = vmul.f32 %v1126, %v1167
      %v1172 = vmul.f32 %v1128, %v1167
      %v1173 = vmul.f32 %v1129, %v1167
      %v1174 = vmul.f32 %v1131, %v1167
      %v1175 = vmul.f32 %v1132, %v1167
      %v1176 = vmul.f32 %v1134, %v1167
      %v1177 = vmul.f32 %v1135, %v1167
      %v1178 = vmul.f32 %v1137, %v1167
      %v1179 = vmul.f32 %v1138, %v1167
      %v1180 = vmul.f32 %v1140, %v1167
      %v1181 = vmul.f32 %v1141, %v1167
      %v1182 = vmul.f32 %v1143, %v1167
      %v1183 = vmul.f32 %v1144, %v1167
      %v1184 = vadd.f32 %v1168, 0.0
      %v1185 = vadd.f32 %v1169, 0.0
      %v1186 = vadd.f32 %v1170, 0.0
      %v1187 = vadd.f32 %v1171, 0.0
      %v1188 = vadd.f32 %v1172, 0.0
      %v1189 = vadd.f32 %v1173, 0.0
      %v1190 = vadd.f32 %v1174, 0.0
      %v1191 = vadd.f32 %v1175, 0.0
      %v1192 = vadd.f32 %v1176, 0.0
      %v1193 = vadd.f32 %v1177, 0.0
      %v1194 = vadd.f32 %v1178, 0.0
      %v1195 = vadd.f32 %v1179, 0.0
      %v1196 = vadd.f32 %v1180, 0.0
      %v1197 = vadd.f32 %v1181, 0.0
      %v1198 = vadd.f32 %v1182, 0.0
      %v1199 = vadd.f32 %v1183, 0.0
      %v1200 = vlaneseq
      %v1201 = vshrl.u32 %v1200, 7
      %v1202 = vsub.s32 1, %v1201
      %v1203 = vrot.slane %v1158, %v1202
      %v1204 = vmul.f32 %v1122, %v1203
      %v1205 = vmul.f32 %v1123, %v1203
      %v1206 = vmul.f32 %v1124, %v1203
      %v1207 = vmul.f32 %v1125, %v1203
      %v1208 = vmul.f32 %v1126, %v1203
      %v1209 = vmul.f32 %v1127, %v1203
      %v1210 = vmul.f32 %v1128, %v1203
      %v1211 = vmul.f32 %v1129, %v1203
      %v1212 = vmul.f32 %v1130, %v1203
      %v1213 = vmul.f32 %v1131, %v1203
      %v1214 = vmul.f32 %v1132, %v1203
      %v1215 = vmul.f32 %v1133, %v1203
      %v1216 = vmul.f32 %v1134, %v1203
      %v1217 = vmul.f32 %v1135, %v1203
      %v1218 = vmul.f32 %v1136, %v1203
      %v1219 = vmul.f32 %v1137, %v1203
      %v1220 = vmul.f32 %v1138, %v1203
      %v1221 = vmul.f32 %v1139, %v1203
      %v1222 = vmul.f32 %v1140, %v1203
      %v1223 = vmul.f32 %v1141, %v1203
      %v1224 = vmul.f32 %v1142, %v1203
      %v1225 = vmul.f32 %v1143, %v1203
      %v1226 = vmul.f32 %v1144, %v1203
      %v1227 = vmul.f32 %v1145, %v1203
      %vm1252 = vcmask 1046528
      %v1253 = vrot.slane %v1204, 1
      %v1254 = vrot.slane %v1205, 1
      %v1255 = vsel %vm1252, %v1253, %v1254
      %v1256 = vrot.slane %v1206, 1
      %v1257 = vsel %vm1252, %v1254, %v1256
      %v1258 = vrot.slane %v1207, 1
      %v1259 = vrot.slane %v1208, 1
      %v1260 = vsel %vm1252, %v1258, %v1259
      %v1261 = vrot.slane %v1209, 1
      %v1262 = vsel %vm1252, %v1259, %v1261
      %v1263 = vrot.slane %v1210, 1
      %v1264 = vrot.slane %v1211, 1
      %v1265 = vsel %vm1252, %v1263, %v1264
      %v1266 = vrot.slane %v1212, 1
      %v1267 = vsel %vm1252, %v1264, %v1266
      %v1268 = vrot.slane %v1213, 1
      %v1269 = vrot.slane %v1214, 1
      %v1270 = vsel %vm1252, %v1268, %v1269
      %v1271 = vrot.slane %v1215, 1
      %v1272 = vsel %vm1252, %v1269, %v1271
      %v1273 = vrot.slane %v1216, 1
      %v1274 = vrot.slane %v1217, 1
      %v1275 = vsel %vm1252, %v1273, %v1274
      %v1276 = vrot.slane %v1218, 1
      %v1277 = vsel %vm1252, %v1274, %v1276
      %v1278 = vrot.slane %v1219, 1
      %v1279 = vrot.slane %v1220, 1
      %v1280 = vsel %vm1252, %v1278, %v1279
      %v1281 = vrot.slane %v1221, 1
      %v1282 = vsel %vm1252, %v1279, %v1281
      %v1283 = vrot.slane %v1222, 1
      %v1284 = vrot.slane %v1223, 1
      %v1285 = vsel %vm1252, %v1283, %v1284
      %v1286 = vrot.slane %v1224, 1
      %v1287 = vsel %vm1252, %v1284, %v1286
      %v1288 = vrot.slane %v1225, 1
      %v1289 = vrot.slane %v1226, 1
      %v1290 = vsel %vm1252, %v1288, %v1289
      %v1291 = vrot.slane %v1227, 1
      %v1292 = vsel %vm1252, %v1289, %v1291
      %v1309 = vadd.f32 %v1184, %v1255
      %v1310 = vadd.f32 %v1185, %v1257
      %v1311 = vadd.f32 %v1186, %v1260
      %v1312 = vadd.f32 %v1187, %v1262
      %v1313 = vadd.f32 %v1188, %v1265
      %v1314 = vadd.f32 %v1189, %v1267
      %v1315 = vadd.f32 %v1190, %v1270
      %v1316 = vadd.f32 %v1191, %v1272
      %v1317 = vadd.f32 %v1192, %v1275
      %v1318 = vadd.f32 %v1193, %v1277
      %v1319 = vadd.f32 %v1194, %v1280
      %v1320 = vadd.f32 %v1195, %v1282
      %v1321 = vadd.f32 %v1196, %v1285
      %v1322 = vadd.f32 %v1197, %v1287
      %v1323 = vadd.f32 %v1198, %v1290
      %v1324 = vadd.f32 %v1199, %v1292
      %v1325 = vlaneseq
      %v1326 = vshrl.u32 %v1325, 7
      %v1327 = vsub.s32 2, %v1326
      %v1328 = vrot.slane %v1158, %v1327
      %v1329 = vmul.f32 %v1122, %v1328
      %v1330 = vmul.f32 %v1123, %v1328
      %v1331 = vmul.f32 %v1124, %v1328
      %v1332 = vmul.f32 %v1125, %v1328
      %v1333 = vmul.f32 %v1126, %v1328
      %v1334 = vmul.f32 %v1127, %v1328
      %v1335 = vmul.f32 %v1128, %v1328
      %v1336 = vmul.f32 %v1129, %v1328
      %v1337 = vmul.f32 %v1130, %v1328
      %v1338 = vmul.f32 %v1131, %v1328
      %v1339 = vmul.f32 %v1132, %v1328
      %v1340 = vmul.f32 %v1133, %v1328
      %v1341 = vmul.f32 %v1134, %v1328
      %v1342 = vmul.f32 %v1135, %v1328
      %v1343 = vmul.f32 %v1136, %v1328
      %v1344 = vmul.f32 %v1137, %v1328
      %v1345 = vmul.f32 %v1138, %v1328
      %v1346 = vmul.f32 %v1139, %v1328
      %v1347 = vmul.f32 %v1140, %v1328
      %v1348 = vmul.f32 %v1141, %v1328
      %v1349 = vmul.f32 %v1142, %v1328
      %v1350 = vmul.f32 %v1143, %v1328
      %v1351 = vmul.f32 %v1144, %v1328
      %v1352 = vmul.f32 %v1145, %v1328
      %vm1377 = vcmask 1045504
      %v1378 = vrot.slane %v1329, 2
      %v1379 = vrot.slane %v1330, 2
      %v1380 = vsel %vm1377, %v1378, %v1379
      %v1381 = vrot.slane %v1331, 2
      %v1382 = vsel %vm1377, %v1379, %v1381
      %v1383 = vrot.slane %v1332, 2
      %v1384 = vrot.slane %v1333, 2
      %v1385 = vsel %vm1377, %v1383, %v1384
      %v1386 = vrot.slane %v1334, 2
      %v1387 = vsel %vm1377, %v1384, %v1386
      %v1388 = vrot.slane %v1335, 2
      %v1389 = vrot.slane %v1336, 2
      %v1390 = vsel %vm1377, %v1388, %v1389
      %v1391 = vrot.slane %v1337, 2
      %v1392 = vsel %vm1377, %v1389, %v1391
      %v1393 = vrot.slane %v1338, 2
      %v1394 = vrot.slane %v1339, 2
      %v1395 = vsel %vm1377, %v1393, %v1394
      %v1396 = vrot.slane %v1340, 2
      %v1397 = vsel %vm1377, %v1394, %v1396
      %v1398 = vrot.slane %v1341, 2
      %v1399 = vrot.slane %v1342, 2
      %v1400 = vsel %vm1377, %v1398, %v1399
      %v1401 = vrot.slane %v1343, 2
      %v1402 = vsel %vm1377, %v1399, %v1401
      %v1403 = vrot.slane %v1344, 2
      %v1404 = vrot.slane %v1345, 2
      %v1405 = vsel %vm1377, %v1403, %v1404
      %v1406 = vrot.slane %v1346, 2
      %v1407 = vsel %vm1377, %v1404, %v1406
      %v1408 = vrot.slane %v1347, 2
      %v1409 = vrot.slane %v1348, 2
      %v1410 = vsel %vm1377, %v1408, %v1409
      %v1411 = vrot.slane %v1349, 2
      %v1412 = vsel %vm1377, %v1409, %v1411
      %v1413 = vrot.slane %v1350, 2
      %v1414 = vrot.slane %v1351, 2
      %v1415 = vsel %vm1377, %v1413, %v1414
      %v1416 = vrot.slane %v1352, 2
      %v1417 = vsel %vm1377, %v1414, %v1416
      %v1434 = vadd.f32 %v1309, %v1380
      %v1435 = vadd.f32 %v1310, %v1382
      %v1436 = vadd.f32 %v1311, %v1385
      %v1437 = vadd.f32 %v1312, %v1387
      %v1438 = vadd.f32 %v1313, %v1390
      %v1439 = vadd.f32 %v1314, %v1392
      %v1440 = vadd.f32 %v1315, %v1395
      %v1441 = vadd.f32 %v1316, %v1397
      %v1442 = vadd.f32 %v1317, %v1400
      %v1443 = vadd.f32 %v1318, %v1402
      %v1444 = vadd.f32 %v1319, %v1405
      %v1445 = vadd.f32 %v1320, %v1407
      %v1446 = vadd.f32 %v1321, %v1410
      %v1447 = vadd.f32 %v1322, %v1412
      %v1448 = vadd.f32 %v1323, %v1415
      %v1449 = vadd.f32 %v1324, %v1417
      %v1450 = vlaneseq
      %v1451 = vshrl.u32 %v1450, 7
      %v1452 = vsub.s32 3, %v1451
      %v1453 = vrot.slane %v1158, %v1452
      %v1454 = vmul.f32 %v1122, %v1453
      %v1455 = vmul.f32 %v1123, %v1453
      %v1456 = vmul.f32 %v1124, %v1453
      %v1457 = vmul.f32 %v1125, %v1453
      %v1458 = vmul.f32 %v1126, %v1453
      %v1459 = vmul.f32 %v1127, %v1453
      %v1460 = vmul.f32 %v1128, %v1453
      %v1461 = vmul.f32 %v1129, %v1453
      %v1462 = vmul.f32 %v1130, %v1453
      %v1463 = vmul.f32 %v1131, %v1453
      %v1464 = vmul.f32 %v1132, %v1453
      %v1465 = vmul.f32 %v1133, %v1453
      %v1466 = vmul.f32 %v1134, %v1453
      %v1467 = vmul.f32 %v1135, %v1453
      %v1468 = vmul.f32 %v1136, %v1453
      %v1469 = vmul.f32 %v1137, %v1453
      %v1470 = vmul.f32 %v1138, %v1453
      %v1471 = vmul.f32 %v1139, %v1453
      %v1472 = vmul.f32 %v1140, %v1453
      %v1473 = vmul.f32 %v1141, %v1453
      %v1474 = vmul.f32 %v1142, %v1453
      %v1475 = vmul.f32 %v1143, %v1453
      %v1476 = vmul.f32 %v1144, %v1453
      %v1477 = vmul.f32 %v1145, %v1453
      %vm1502 = vcmask 1044480
      %v1503 = vrot.slane %v1454, 3
      %v1504 = vrot.slane %v1455, 3
      %v1505 = vsel %vm1502, %v1503, %v1504
      %v1506 = vrot.slane %v1456, 3
      %v1507 = vsel %vm1502, %v1504, %v1506
      %v1508 = vrot.slane %v1457, 3
      %v1509 = vrot.slane %v1458, 3
      %v1510 = vsel %vm1502, %v1508, %v1509
      %v1511 = vrot.slane %v1459, 3
      %v1512 = vsel %vm1502, %v1509, %v1511
      %v1513 = vrot.slane %v1460, 3
      %v1514 = vrot.slane %v1461, 3
      %v1515 = vsel %vm1502, %v1513, %v1514
      %v1516 = vrot.slane %v1462, 3
      %v1517 = vsel %vm1502, %v1514, %v1516
      %v1518 = vrot.slane %v1463, 3
      %v1519 = vrot.slane %v1464, 3
      %v1520 = vsel %vm1502, %v1518, %v1519
      %v1521 = vrot.slane %v1465, 3
      %v1522 = vsel %vm1502, %v1519, %v1521
      %v1523 = vrot.slane %v1466, 3
      %v1524 = vrot.slane %v1467, 3
      %v1525 = vsel %vm1502, %v1523, %v1524
      %v1526 = vrot.slane %v1468, 3
      %v1527 = vsel %vm1502, %v1524, %v1526
      %v1528 = vrot.slane %v1469, 3
      %v1529 = vrot.slane %v1470, 3
      %v1530 = vsel %vm1502, %v1528, %v1529
      %v1531 = vrot.slane %v1471, 3
      %v1532 = vsel %vm1502, %v1529, %v1531
      %v1533 = vrot.slane %v1472, 3
      %v1534 = vrot.slane %v1473, 3
      %v1535 = vsel %vm1502, %v1533, %v1534
      %v1536 = vrot.slane %v1474, 3
      %v1537 = vsel %vm1502, %v1534, %v1536
      %v1538 = vrot.slane %v1475, 3
      %v1539 = vrot.slane %v1476, 3
      %v1540 = vsel %vm1502, %v1538, %v1539
      %v1541 = vrot.slane %v1477, 3
      %v1542 = vsel %vm1502, %v1539, %v1541
      %v1559 = vadd.f32 %v1434, %v1505
      %v1560 = vadd.f32 %v1435, %v1507
      %v1561 = vadd.f32 %v1436, %v1510
      %v1562 = vadd.f32 %v1437, %v1512
      %v1563 = vadd.f32 %v1438, %v1515
      %v1564 = vadd.f32 %v1439, %v1517
      %v1565 = vadd.f32 %v1440, %v1520
      %v1566 = vadd.f32 %v1441, %v1522
      %v1567 = vadd.f32 %v1442, %v1525
      %v1568 = vadd.f32 %v1443, %v1527
      %v1569 = vadd.f32 %v1444, %v1530
      %v1570 = vadd.f32 %v1445, %v1532
      %v1571 = vadd.f32 %v1446, %v1535
      %v1572 = vadd.f32 %v1447, %v1537
      %v1573 = vadd.f32 %v1448, %v1540
      %v1574 = vadd.f32 %v1449, %v1542
      %v1575 = vlaneseq
      %v1576 = vshrl.u32 %v1575, 7
      %v1577 = vsub.s32 4, %v1576
      %v1578 = vrot.slane %v1158, %v1577
      %v1579 = vmul.f32 %v1122, %v1578
      %v1580 = vmul.f32 %v1123, %v1578
      %v1581 = vmul.f32 %v1124, %v1578
      %v1582 = vmul.f32 %v1125, %v1578
      %v1583 = vmul.f32 %v1126, %v1578
      %v1584 = vmul.f32 %v1127, %v1578
      %v1585 = vmul.f32 %v1128, %v1578
      %v1586 = vmul.f32 %v1129, %v1578
      %v1587 = vmul.f32 %v1130, %v1578
      %v1588 = vmul.f32 %v1131, %v1578
      %v1589 = vmul.f32 %v1132, %v1578
      %v1590 = vmul.f32 %v1133, %v1578
      %v1591 = vmul.f32 %v1134, %v1578
      %v1592 = vmul.f32 %v1135, %v1578
      %v1593 = vmul.f32 %v1136, %v1578
      %v1594 = vmul.f32 %v1137, %v1578
      %v1595 = vmul.f32 %v1138, %v1578
      %v1596 = vmul.f32 %v1139, %v1578
      %v1597 = vmul.f32 %v1140, %v1578
      %v1598 = vmul.f32 %v1141, %v1578
      %v1599 = vmul.f32 %v1142, %v1578
      %v1600 = vmul.f32 %v1143, %v1578
      %v1601 = vmul.f32 %v1144, %v1578
      %v1602 = vmul.f32 %v1145, %v1578
      %v1627 = vrot.slane %v1579, 4
      %v1628 = vrot.slane %v1580, 4
      %v1629 = vsel %vm530, %v1627, %v1628
      %v1630 = vrot.slane %v1581, 4
      %v1631 = vsel %vm530, %v1628, %v1630
      %v1632 = vrot.slane %v1582, 4
      %v1633 = vrot.slane %v1583, 4
      %v1634 = vsel %vm530, %v1632, %v1633
      %v1635 = vrot.slane %v1584, 4
      %v1636 = vsel %vm530, %v1633, %v1635
      %v1637 = vrot.slane %v1585, 4
      %v1638 = vrot.slane %v1586, 4
      %v1639 = vsel %vm530, %v1637, %v1638
      %v1640 = vrot.slane %v1587, 4
      %v1641 = vsel %vm530, %v1638, %v1640
      %v1642 = vrot.slane %v1588, 4
      %v1643 = vrot.slane %v1589, 4
      %v1644 = vsel %vm530, %v1642, %v1643
      %v1645 = vrot.slane %v1590, 4
      %v1646 = vsel %vm530, %v1643, %v1645
      %v1647 = vrot.slane %v1591, 4
      %v1648 = vrot.slane %v1592, 4
      %v1649 = vsel %vm530, %v1647, %v1648
      %v1650 = vrot.slane %v1593, 4
      %v1651 = vsel %vm530, %v1648, %v1650
      %v1652 = vrot.slane %v1594, 4
      %v1653 = vrot.slane %v1595, 4
      %v1654 = vsel %vm530, %v1652, %v1653
      %v1655 = vrot.slane %v1596, 4
      %v1656 = vsel %vm530, %v1653, %v1655
      %v1657 = vrot.slane %v1597, 4
      %v1658 = vrot.slane %v1598, 4
      %v1659 = vsel %vm530, %v1657, %v1658
      %v1660 = vrot.slane %v1599, 4
      %v1661 = vsel %vm530, %v1658, %v1660
      %v1662 = vrot.slane %v1600, 4
      %v1663 = vrot.slane %v1601, 4
      %v1664 = vsel %vm530, %v1662, %v1663
      %v1665 = vrot.slane %v1602, 4
      %v1666 = vsel %vm530, %v1663, %v1665
      %v1683 = vadd.f32 %v1559, %v1629
      %v1684 = vadd.f32 %v1560, %v1631
      %v1685 = vadd.f32 %v1561, %v1634
      %v1686 = vadd.f32 %v1562, %v1636
      %v1687 = vadd.f32 %v1563, %v1639
      %v1688 = vadd.f32 %v1564, %v1641
      %v1689 = vadd.f32 %v1565, %v1644
      %v1690 = vadd.f32 %v1566, %v1646
      %v1691 = vadd.f32 %v1567, %v1649
      %v1692 = vadd.f32 %v1568, %v1651
      %v1693 = vadd.f32 %v1569, %v1654
      %v1694 = vadd.f32 %v1570, %v1656
      %v1695 = vadd.f32 %v1571, %v1659
      %v1696 = vadd.f32 %v1572, %v1661
      %v1697 = vadd.f32 %v1573, %v1664
      %v1698 = vadd.f32 %v1574, %v1666
      %v1699 = vlaneseq
      %v1700 = vshrl.u32 %v1699, 7
      %v1701 = vsub.s32 0, %v1700
      %v1702 = vrot.slane %v1159, %v1701
      %v1703 = vmul.f32 %v1125, %v1702
      %v1704 = vmul.f32 %v1126, %v1702
      %v1705 = vmul.f32 %v1128, %v1702
      %v1706 = vmul.f32 %v1129, %v1702
      %v1707 = vmul.f32 %v1131, %v1702
      %v1708 = vmul.f32 %v1132, %v1702
      %v1709 = vmul.f32 %v1134, %v1702
      %v1710 = vmul.f32 %v1135, %v1702
      %v1711 = vmul.f32 %v1137, %v1702
      %v1712 = vmul.f32 %v1138, %v1702
      %v1713 = vmul.f32 %v1140, %v1702
      %v1714 = vmul.f32 %v1141, %v1702
      %v1715 = vmul.f32 %v1143, %v1702
      %v1716 = vmul.f32 %v1144, %v1702
      %v1717 = vmul.f32 %v1146, %v1702
      %v1718 = vmul.f32 %v1147, %v1702
      %v1719 = vadd.f32 %v1683, %v1703
      %v1720 = vadd.f32 %v1684, %v1704
      %v1721 = vadd.f32 %v1685, %v1705
      %v1722 = vadd.f32 %v1686, %v1706
      %v1723 = vadd.f32 %v1687, %v1707
      %v1724 = vadd.f32 %v1688, %v1708
      %v1725 = vadd.f32 %v1689, %v1709
      %v1726 = vadd.f32 %v1690, %v1710
      %v1727 = vadd.f32 %v1691, %v1711
      %v1728 = vadd.f32 %v1692, %v1712
      %v1729 = vadd.f32 %v1693, %v1713
      %v1730 = vadd.f32 %v1694, %v1714
      %v1731 = vadd.f32 %v1695, %v1715
      %v1732 = vadd.f32 %v1696, %v1716
      %v1733 = vadd.f32 %v1697, %v1717
      %v1734 = vadd.f32 %v1698, %v1718
      %v1735 = vlaneseq
      %v1736 = vshrl.u32 %v1735, 7
      %v1737 = vsub.s32 1, %v1736
      %v1738 = vrot.slane %v1159, %v1737
      %v1739 = vmul.f32 %v1125, %v1738
      %v1740 = vmul.f32 %v1126, %v1738
      %v1741 = vmul.f32 %v1127, %v1738
      %v1742 = vmul.f32 %v1128, %v1738
      %v1743 = vmul.f32 %v1129, %v1738
      %v1744 = vmul.f32 %v1130, %v1738
      %v1745 = vmul.f32 %v1131, %v1738
      %v1746 = vmul.f32 %v1132, %v1738
      %v1747 = vmul.f32 %v1133, %v1738
      %v1748 = vmul.f32 %v1134, %v1738
      %v1749 = vmul.f32 %v1135, %v1738
      %v1750 = vmul.f32 %v1136, %v1738
      %v1751 = vmul.f32 %v1137, %v1738
      %v1752 = vmul.f32 %v1138, %v1738
      %v1753 = vmul.f32 %v1139, %v1738
      %v1754 = vmul.f32 %v1140, %v1738
      %v1755 = vmul.f32 %v1141, %v1738
      %v1756 = vmul.f32 %v1142, %v1738
      %v1757 = vmul.f32 %v1143, %v1738
      %v1758 = vmul.f32 %v1144, %v1738
      %v1759 = vmul.f32 %v1145, %v1738
      %v1760 = vmul.f32 %v1146, %v1738
      %v1761 = vmul.f32 %v1147, %v1738
      %v1762 = vmul.f32 %v1148, %v1738
      %v1787 = vrot.slane %v1739, 1
      %v1788 = vrot.slane %v1740, 1
      %v1789 = vsel %vm1252, %v1787, %v1788
      %v1790 = vrot.slane %v1741, 1
      %v1791 = vsel %vm1252, %v1788, %v1790
      %v1792 = vrot.slane %v1742, 1
      %v1793 = vrot.slane %v1743, 1
      %v1794 = vsel %vm1252, %v1792, %v1793
      %v1795 = vrot.slane %v1744, 1
      %v1796 = vsel %vm1252, %v1793, %v1795
      %v1797 = vrot.slane %v1745, 1
      %v1798 = vrot.slane %v1746, 1
      %v1799 = vsel %vm1252, %v1797, %v1798
      %v1800 = vrot.slane %v1747, 1
      %v1801 = vsel %vm1252, %v1798, %v1800
      %v1802 = vrot.slane %v1748, 1
      %v1803 = vrot.slane %v1749, 1
      %v1804 = vsel %vm1252, %v1802, %v1803
      %v1805 = vrot.slane %v1750, 1
      %v1806 = vsel %vm1252, %v1803, %v1805
      %v1807 = vrot.slane %v1751, 1
      %v1808 = vrot.slane %v1752, 1
      %v1809 = vsel %vm1252, %v1807, %v1808
      %v1810 = vrot.slane %v1753, 1
      %v1811 = vsel %vm1252, %v1808, %v1810
      %v1812 = vrot.slane %v1754, 1
      %v1813 = vrot.slane %v1755, 1
      %v1814 = vsel %vm1252, %v1812, %v1813
      %v1815 = vrot.slane %v1756, 1
      %v1816 = vsel %vm1252, %v1813, %v1815
      %v1817 = vrot.slane %v1757, 1
      %v1818 = vrot.slane %v1758, 1
      %v1819 = vsel %vm1252, %v1817, %v1818
      %v1820 = vrot.slane %v1759, 1
      %v1821 = vsel %vm1252, %v1818, %v1820
      %v1822 = vrot.slane %v1760, 1
      %v1823 = vrot.slane %v1761, 1
      %v1824 = vsel %vm1252, %v1822, %v1823
      %v1825 = vrot.slane %v1762, 1
      %v1826 = vsel %vm1252, %v1823, %v1825
      %v1843 = vadd.f32 %v1719, %v1789
      %v1844 = vadd.f32 %v1720, %v1791
      %v1845 = vadd.f32 %v1721, %v1794
      %v1846 = vadd.f32 %v1722, %v1796
      %v1847 = vadd.f32 %v1723, %v1799
      %v1848 = vadd.f32 %v1724, %v1801
      %v1849 = vadd.f32 %v1725, %v1804
      %v1850 = vadd.f32 %v1726, %v1806
      %v1851 = vadd.f32 %v1727, %v1809
      %v1852 = vadd.f32 %v1728, %v1811
      %v1853 = vadd.f32 %v1729, %v1814
      %v1854 = vadd.f32 %v1730, %v1816
      %v1855 = vadd.f32 %v1731, %v1819
      %v1856 = vadd.f32 %v1732, %v1821
      %v1857 = vadd.f32 %v1733, %v1824
      %v1858 = vadd.f32 %v1734, %v1826
      %v1859 = vlaneseq
      %v1860 = vshrl.u32 %v1859, 7
      %v1861 = vsub.s32 2, %v1860
      %v1862 = vrot.slane %v1159, %v1861
      %v1863 = vmul.f32 %v1125, %v1862
      %v1864 = vmul.f32 %v1126, %v1862
      %v1865 = vmul.f32 %v1127, %v1862
      %v1866 = vmul.f32 %v1128, %v1862
      %v1867 = vmul.f32 %v1129, %v1862
      %v1868 = vmul.f32 %v1130, %v1862
      %v1869 = vmul.f32 %v1131, %v1862
      %v1870 = vmul.f32 %v1132, %v1862
      %v1871 = vmul.f32 %v1133, %v1862
      %v1872 = vmul.f32 %v1134, %v1862
      %v1873 = vmul.f32 %v1135, %v1862
      %v1874 = vmul.f32 %v1136, %v1862
      %v1875 = vmul.f32 %v1137, %v1862
      %v1876 = vmul.f32 %v1138, %v1862
      %v1877 = vmul.f32 %v1139, %v1862
      %v1878 = vmul.f32 %v1140, %v1862
      %v1879 = vmul.f32 %v1141, %v1862
      %v1880 = vmul.f32 %v1142, %v1862
      %v1881 = vmul.f32 %v1143, %v1862
      %v1882 = vmul.f32 %v1144, %v1862
      %v1883 = vmul.f32 %v1145, %v1862
      %v1884 = vmul.f32 %v1146, %v1862
      %v1885 = vmul.f32 %v1147, %v1862
      %v1886 = vmul.f32 %v1148, %v1862
      %v1911 = vrot.slane %v1863, 2
      %v1912 = vrot.slane %v1864, 2
      %v1913 = vsel %vm1377, %v1911, %v1912
      %v1914 = vrot.slane %v1865, 2
      %v1915 = vsel %vm1377, %v1912, %v1914
      %v1916 = vrot.slane %v1866, 2
      %v1917 = vrot.slane %v1867, 2
      %v1918 = vsel %vm1377, %v1916, %v1917
      %v1919 = vrot.slane %v1868, 2
      %v1920 = vsel %vm1377, %v1917, %v1919
      %v1921 = vrot.slane %v1869, 2
      %v1922 = vrot.slane %v1870, 2
      %v1923 = vsel %vm1377, %v1921, %v1922
      %v1924 = vrot.slane %v1871, 2
      %v1925 = vsel %vm1377, %v1922, %v1924
      %v1926 = vrot.slane %v1872, 2
      %v1927 = vrot.slane %v1873, 2
      %v1928 = vsel %vm1377, %v1926, %v1927
      %v1929 = vrot.slane %v1874, 2
      %v1930 = vsel %vm1377, %v1927, %v1929
      %v1931 = vrot.slane %v1875, 2
      %v1932 = vrot.slane %v1876, 2
      %v1933 = vsel %vm1377, %v1931, %v1932
      %v1934 = vrot.slane %v1877, 2
      %v1935 = vsel %vm1377, %v1932, %v1934
      %v1936 = vrot.slane %v1878, 2
      %v1937 = vrot.slane %v1879, 2
      %v1938 = vsel %vm1377, %v1936, %v1937
      %v1939 = vrot.slane %v1880, 2
      %v1940 = vsel %vm1377, %v1937, %v1939
      %v1941 = vrot.slane %v1881, 2
      %v1942 = vrot.slane %v1882, 2
      %v1943 = vsel %vm1377, %v1941, %v1942
      %v1944 = vrot.slane %v1883, 2
      %v1945 = vsel %vm1377, %v1942, %v1944
      %v1946 = vrot.slane %v1884, 2
      %v1947 = vrot.slane %v1885, 2
      %v1948 = vsel %vm1377, %v1946, %v1947
      %v1949 = vrot.slane %v1886, 2
      %v1950 = vsel %vm1377, %v1947, %v1949
      %v1967 = vadd.f32 %v1843, %v1913
      %v1968 = vadd.f32 %v1844, %v1915
      %v1969 = vadd.f32 %v1845, %v1918
      %v1970 = vadd.f32 %v1846, %v1920
      %v1971 = vadd.f32 %v1847, %v1923
      %v1972 = vadd.f32 %v1848, %v1925
      %v1973 = vadd.f32 %v1849, %v1928
      %v1974 = vadd.f32 %v1850, %v1930
      %v1975 = vadd.f32 %v1851, %v1933
      %v1976 = vadd.f32 %v1852, %v1935
      %v1977 = vadd.f32 %v1853, %v1938
      %v1978 = vadd.f32 %v1854, %v1940
      %v1979 = vadd.f32 %v1855, %v1943
      %v1980 = vadd.f32 %v1856, %v1945
      %v1981 = vadd.f32 %v1857, %v1948
      %v1982 = vadd.f32 %v1858, %v1950
      %v1983 = vlaneseq
      %v1984 = vshrl.u32 %v1983, 7
      %v1985 = vsub.s32 3, %v1984
      %v1986 = vrot.slane %v1159, %v1985
      %v1987 = vmul.f32 %v1125, %v1986
      %v1988 = vmul.f32 %v1126, %v1986
      %v1989 = vmul.f32 %v1127, %v1986
      %v1990 = vmul.f32 %v1128, %v1986
      %v1991 = vmul.f32 %v1129, %v1986
      %v1992 = vmul.f32 %v1130, %v1986
      %v1993 = vmul.f32 %v1131, %v1986
      %v1994 = vmul.f32 %v1132, %v1986
      %v1995 = vmul.f32 %v1133, %v1986
      %v1996 = vmul.f32 %v1134, %v1986
      %v1997 = vmul.f32 %v1135, %v1986
      %v1998 = vmul.f32 %v1136, %v1986
      %v1999 = vmul.f32 %v1137, %v1986
      %v2000 = vmul.f32 %v1138, %v1986
      %v2001 = vmul.f32 %v1139, %v1986
      %v2002 = vmul.f32 %v1140, %v1986
      %v2003 = vmul.f32 %v1141, %v1986
      %v2004 = vmul.f32 %v1142, %v1986
      %v2005 = vmul.f32 %v1143, %v1986
      %v2006 = vmul.f32 %v1144, %v1986
      %v2007 = vmul.f32 %v1145, %v1986
      %v2008 = vmul.f32 %v1146, %v1986
      %v2009 = vmul.f32 %v1147, %v1986
      %v2010 = vmul.f32 %v1148, %v1986
      %v2035 = vrot.slane %v1987, 3
      %v2036 = vrot.slane %v1988, 3
      %v2037 = vsel %vm1502, %v2035, %v2036
      %v2038 = vrot.slane %v1989, 3
      %v2039 = vsel %vm1502, %v2036, %v2038
      %v2040 = vrot.slane %v1990, 3
      %v2041 = vrot.slane %v1991, 3
      %v2042 = vsel %vm1502, %v2040, %v2041
      %v2043 = vrot.slane %v1992, 3
      %v2044 = vsel %vm1502, %v2041, %v2043
      %v2045 = vrot.slane %v1993, 3
      %v2046 = vrot.slane %v1994, 3
      %v2047 = vsel %vm1502, %v2045, %v2046
      %v2048 = vrot.slane %v1995, 3
      %v2049 = vsel %vm1502, %v2046, %v2048
      %v2050 = vrot.slane %v1996, 3
      %v2051 = vrot.slane %v1997, 3
      %v2052 = vsel %vm1502, %v2050, %v2051
      %v2053 = vrot.slane %v1998, 3
      %v2054 = vsel %vm1502, %v2051, %v2053
      %v2055 = vrot.slane %v1999, 3
      %v2056 = vrot.slane %v2000, 3
      %v2057 = vsel %vm1502, %v2055, %v2056
      %v2058 = vrot.slane %v2001, 3
      %v2059 = vsel %vm1502, %v2056, %v2058
      %v2060 = vrot.slane %v2002, 3
      %v2061 = vrot.slane %v2003, 3
      %v2062 = vsel %vm1502, %v2060, %v2061
      %v2063 = vrot.slane %v2004, 3
      %v2064 = vsel %vm1502, %v2061, %v2063
      %v2065 = vrot.slane %v2005, 3
      %v2066 = vrot.slane %v2006, 3
      %v2067 = vsel %vm1502, %v2065, %v2066
      %v2068 = vrot.slane %v2007, 3
      %v2069 = vsel %vm1502, %v2066, %v2068
      %v2070 = vrot.slane %v2008, 3
      %v2071 = vrot.slane %v2009, 3
      %v2072 = vsel %vm1502, %v2070, %v2071
      %v2073 = vrot.slane %v2010, 3
      %v2074 = vsel %vm1502, %v2071, %v2073
      %v2091 = vadd.f32 %v1967, %v2037
      %v2092 = vadd.f32 %v1968, %v2039
      %v2093 = vadd.f32 %v1969, %v2042
      %v2094 = vadd.f32 %v1970, %v2044
      %v2095 = vadd.f32 %v1971, %v2047
      %v2096 = vadd.f32 %v1972, %v2049
      %v2097 = vadd.f32 %v1973, %v2052
      %v2098 = vadd.f32 %v1974, %v2054
      %v2099 = vadd.f32 %v1975, %v2057
      %v2100 = vadd.f32 %v1976, %v2059
      %v2101 = vadd.f32 %v1977, %v2062
      %v2102 = vadd.f32 %v1978, %v2064
      %v2103 = vadd.f32 %v1979, %v2067
      %v2104 = vadd.f32 %v1980, %v2069
      %v2105 = vadd.f32 %v1981, %v2072
      %v2106 = vadd.f32 %v1982, %v2074
      %v2107 = vlaneseq
      %v2108 = vshrl.u32 %v2107, 7
      %v2109 = vsub.s32 4, %v2108
      %v2110 = vrot.slane %v1159, %v2109
      %v2111 = vmul.f32 %v1125, %v2110
      %v2112 = vmul.f32 %v1126, %v2110
      %v2113 = vmul.f32 %v1127, %v2110
      %v2114 = vmul.f32 %v1128, %v2110
      %v2115 = vmul.f32 %v1129, %v2110
      %v2116 = vmul.f32 %v1130, %v2110
      %v2117 = vmul.f32 %v1131, %v2110
      %v2118 = vmul.f32 %v1132, %v2110
      %v2119 = vmul.f32 %v1133, %v2110
      %v2120 = vmul.f32 %v1134, %v2110
      %v2121 = vmul.f32 %v1135, %v2110
      %v2122 = vmul.f32 %v1136, %v2110
      %v2123 = vmul.f32 %v1137, %v2110
      %v2124 = vmul.f32 %v1138, %v2110
      %v2125 = vmul.f32 %v1139, %v2110
      %v2126 = vmul.f32 %v1140, %v2110
      %v2127 = vmul.f32 %v1141, %v2110
      %v2128 = vmul.f32 %v1142, %v2110
      %v2129 = vmul.f32 %v1143, %v2110
      %v2130 = vmul.f32 %v1144, %v2110
      %v2131 = vmul.f32 %v1145, %v2110
      %v2132 = vmul.f32 %v1146, %v2110
      %v2133 = vmul.f32 %v1147, %v2110
      %v2134 = vmul.f32 %v1148, %v2110
      %v2159 = vrot.slane %v2111, 4
      %v2160 = vrot.slane %v2112, 4
      %v2161 = vsel %vm530, %v2159, %v2160
      %v2162 = vrot.slane %v2113, 4
      %v2163 = vsel %vm530, %v2160, %v2162
      %v2164 = vrot.slane %v2114, 4
      %v2165 = vrot.slane %v2115, 4
      %v2166 = vsel %vm530, %v2164, %v2165
      %v2167 = vrot.slane %v2116, 4
      %v2168 = vsel %vm530, %v2165, %v2167
      %v2169 = vrot.slane %v2117, 4
      %v2170 = vrot.slane %v2118, 4
      %v2171 = vsel %vm530, %v2169, %v2170
      %v2172 = vrot.slane %v2119, 4
      %v2173 = vsel %vm530, %v2170, %v2172
      %v2174 = vrot.slane %v2120, 4
      %v2175 = vrot.slane %v2121, 4
      %v2176 = vsel %vm530, %v2174, %v2175
      %v2177 = vrot.slane %v2122, 4
      %v2178 = vsel %vm530, %v2175, %v2177
      %v2179 = vrot.slane %v2123, 4
      %v2180 = vrot.slane %v2124, 4
      %v2181 = vsel %vm530, %v2179, %v2180
      %v2182 = vrot.slane %v2125, 4
      %v2183 = vsel %vm530, %v2180, %v2182
      %v2184 = vrot.slane %v2126, 4
      %v2185 = vrot.slane %v2127, 4
      %v2186 = vsel %vm530, %v2184, %v2185
      %v2187 = vrot.slane %v2128, 4
      %v2188 = vsel %vm530, %v2185, %v2187
      %v2189 = vrot.slane %v2129, 4
      %v2190 = vrot.slane %v2130, 4
      %v2191 = vsel %vm530, %v2189, %v2190
      %v2192 = vrot.slane %v2131, 4
      %v2193 = vsel %vm530, %v2190, %v2192
      %v2194 = vrot.slane %v2132, 4
      %v2195 = vrot.slane %v2133, 4
      %v2196 = vsel %vm530, %v2194, %v2195
      %v2197 = vrot.slane %v2134, 4
      %v2198 = vsel %vm530, %v2195, %v2197
      %v2215 = vadd.f32 %v2091, %v2161
      %v2216 = vadd.f32 %v2092, %v2163
      %v2217 = vadd.f32 %v2093, %v2166
      %v2218 = vadd.f32 %v2094, %v2168
      %v2219 = vadd.f32 %v2095, %v2171
      %v2220 = vadd.f32 %v2096, %v2173
      %v2221 = vadd.f32 %v2097, %v2176
      %v2222 = vadd.f32 %v2098, %v2178
      %v2223 = vadd.f32 %v2099, %v2181
      %v2224 = vadd.f32 %v2100, %v2183
      %v2225 = vadd.f32 %v2101, %v2186
      %v2226 = vadd.f32 %v2102, %v2188
      %v2227 = vadd.f32 %v2103, %v2191
      %v2228 = vadd.f32 %v2104, %v2193
      %v2229 = vadd.f32 %v2105, %v2196
      %v2230 = vadd.f32 %v2106, %v2198
      %v2231 = vlaneseq
      %v2232 = vshrl.u32 %v2231, 7
      %v2233 = vsub.s32 0, %v2232
      %v2234 = vrot.slane %v1160, %v2233
      %v2235 = vmul.f32 %v1128, %v2234
      %v2236 = vmul.f32 %v1129, %v2234
      %v2237 = vmul.f32 %v1131, %v2234
      %v2238 = vmul.f32 %v1132, %v2234
      %v2239 = vmul.f32 %v1134, %v2234
      %v2240 = vmul.f32 %v1135, %v2234
      %v2241 = vmul.f32 %v1137, %v2234
      %v2242 = vmul.f32 %v1138, %v2234
      %v2243 = vmul.f32 %v1140, %v2234
      %v2244 = vmul.f32 %v1141, %v2234
      %v2245 = vmul.f32 %v1143, %v2234
      %v2246 = vmul.f32 %v1144, %v2234
      %v2247 = vmul.f32 %v1146, %v2234
      %v2248 = vmul.f32 %v1147, %v2234
      %v2249 = vmul.f32 %v1149, %v2234
      %v2250 = vmul.f32 %v1150, %v2234
      %v2251 = vadd.f32 %v2215, %v2235
      %v2252 = vadd.f32 %v2216, %v2236
      %v2253 = vadd.f32 %v2217, %v2237
      %v2254 = vadd.f32 %v2218, %v2238
      %v2255 = vadd.f32 %v2219, %v2239
      %v2256 = vadd.f32 %v2220, %v2240
      %v2257 = vadd.f32 %v2221, %v2241
      %v2258 = vadd.f32 %v2222, %v2242
      %v2259 = vadd.f32 %v2223, %v2243
      %v2260 = vadd.f32 %v2224, %v2244
      %v2261 = vadd.f32 %v2225, %v2245
      %v2262 = vadd.f32 %v2226, %v2246
      %v2263 = vadd.f32 %v2227, %v2247
      %v2264 = vadd.f32 %v2228, %v2248
      %v2265 = vadd.f32 %v2229, %v2249
      %v2266 = vadd.f32 %v2230, %v2250
      %v2267 = vlaneseq
      %v2268 = vshrl.u32 %v2267, 7
      %v2269 = vsub.s32 1, %v2268
      %v2270 = vrot.slane %v1160, %v2269
      %v2271 = vmul.f32 %v1128, %v2270
      %v2272 = vmul.f32 %v1129, %v2270
      %v2273 = vmul.f32 %v1130, %v2270
      %v2274 = vmul.f32 %v1131, %v2270
      %v2275 = vmul.f32 %v1132, %v2270
      %v2276 = vmul.f32 %v1133, %v2270
      %v2277 = vmul.f32 %v1134, %v2270
      %v2278 = vmul.f32 %v1135, %v2270
      %v2279 = vmul.f32 %v1136, %v2270
      %v2280 = vmul.f32 %v1137, %v2270
      %v2281 = vmul.f32 %v1138, %v2270
      %v2282 = vmul.f32 %v1139, %v2270
      %v2283 = vmul.f32 %v1140, %v2270
      %v2284 = vmul.f32 %v1141, %v2270
      %v2285 = vmul.f32 %v1142, %v2270
      %v2286 = vmul.f32 %v1143, %v2270
      %v2287 = vmul.f32 %v1144, %v2270
      %v2288 = vmul.f32 %v1145, %v2270
      %v2289 = vmul.f32 %v1146, %v2270
      %v2290 = vmul.f32 %v1147, %v2270
      %v2291 = vmul.f32 %v1148, %v2270
      %v2292 = vmul.f32 %v1149, %v2270
      %v2293 = vmul.f32 %v1150, %v2270
      %v2294 = vmul.f32 %v1151, %v2270
      %v2319 = vrot.slane %v2271, 1
      %v2320 = vrot.slane %v2272, 1
      %v2321 = vsel %vm1252, %v2319, %v2320
      %v2322 = vrot.slane %v2273, 1
      %v2323 = vsel %vm1252, %v2320, %v2322
      %v2324 = vrot.slane %v2274, 1
      %v2325 = vrot.slane %v2275, 1
      %v2326 = vsel %vm1252, %v2324, %v2325
      %v2327 = vrot.slane %v2276, 1
      %v2328 = vsel %vm1252, %v2325, %v2327
      %v2329 = vrot.slane %v2277, 1
      %v2330 = vrot.slane %v2278, 1
      %v2331 = vsel %vm1252, %v2329, %v2330
      %v2332 = vrot.slane %v2279, 1
      %v2333 = vsel %vm1252, %v2330, %v2332
      %v2334 = vrot.slane %v2280, 1
      %v2335 = vrot.slane %v2281, 1
      %v2336 = vsel %vm1252, %v2334, %v2335
      %v2337 = vrot.slane %v2282, 1
      %v2338 = vsel %vm1252, %v2335, %v2337
      %v2339 = vrot.slane %v2283, 1
      %v2340 = vrot.slane %v2284, 1
      %v2341 = vsel %vm1252, %v2339, %v2340
      %v2342 = vrot.slane %v2285, 1
      %v2343 = vsel %vm1252, %v2340, %v2342
      %v2344 = vrot.slane %v2286, 1
      %v2345 = vrot.slane %v2287, 1
      %v2346 = vsel %vm1252, %v2344, %v2345
      %v2347 = vrot.slane %v2288, 1
      %v2348 = vsel %vm1252, %v2345, %v2347
      %v2349 = vrot.slane %v2289, 1
      %v2350 = vrot.slane %v2290, 1
      %v2351 = vsel %vm1252, %v2349, %v2350
      %v2352 = vrot.slane %v2291, 1
      %v2353 = vsel %vm1252, %v2350, %v2352
      %v2354 = vrot.slane %v2292, 1
      %v2355 = vrot.slane %v2293, 1
      %v2356 = vsel %vm1252, %v2354, %v2355
      %v2357 = vrot.slane %v2294, 1
      %v2358 = vsel %vm1252, %v2355, %v2357
      %v2375 = vadd.f32 %v2251, %v2321
      %v2376 = vadd.f32 %v2252, %v2323
      %v2377 = vadd.f32 %v2253, %v2326
      %v2378 = vadd.f32 %v2254, %v2328
      %v2379 = vadd.f32 %v2255, %v2331
      %v2380 = vadd.f32 %v2256, %v2333
      %v2381 = vadd.f32 %v2257, %v2336
      %v2382 = vadd.f32 %v2258, %v2338
      %v2383 = vadd.f32 %v2259, %v2341
      %v2384 = vadd.f32 %v2260, %v2343
      %v2385 = vadd.f32 %v2261, %v2346
      %v2386 = vadd.f32 %v2262, %v2348
      %v2387 = vadd.f32 %v2263, %v2351
      %v2388 = vadd.f32 %v2264, %v2353
      %v2389 = vadd.f32 %v2265, %v2356
      %v2390 = vadd.f32 %v2266, %v2358
      %v2391 = vlaneseq
      %v2392 = vshrl.u32 %v2391, 7
      %v2393 = vsub.s32 2, %v2392
      %v2394 = vrot.slane %v1160, %v2393
      %v2395 = vmul.f32 %v1128, %v2394
      %v2396 = vmul.f32 %v1129, %v2394
      %v2397 = vmul.f32 %v1130, %v2394
      %v2398 = vmul.f32 %v1131, %v2394
      %v2399 = vmul.f32 %v1132, %v2394
      %v2400 = vmul.f32 %v1133, %v2394
      %v2401 = vmul.f32 %v1134, %v2394
      %v2402 = vmul.f32 %v1135, %v2394
      %v2403 = vmul.f32 %v1136, %v2394
      %v2404 = vmul.f32 %v1137, %v2394
      %v2405 = vmul.f32 %v1138, %v2394
      %v2406 = vmul.f32 %v1139, %v2394
      %v2407 = vmul.f32 %v1140, %v2394
      %v2408 = vmul.f32 %v1141, %v2394
      %v2409 = vmul.f32 %v1142, %v2394
      %v2410 = vmul.f32 %v1143, %v2394
      %v2411 = vmul.f32 %v1144, %v2394
      %v2412 = vmul.f32 %v1145, %v2394
      %v2413 = vmul.f32 %v1146, %v2394
      %v2414 = vmul.f32 %v1147, %v2394
      %v2415 = vmul.f32 %v1148, %v2394
      %v2416 = vmul.f32 %v1149, %v2394
      %v2417 = vmul.f32 %v1150, %v2394
      %v2418 = vmul.f32 %v1151, %v2394
      %v2443 = vrot.slane %v2395, 2
      %v2444 = vrot.slane %v2396, 2
      %v2445 = vsel %vm1377, %v2443, %v2444
      %v2446 = vrot.slane %v2397, 2
      %v2447 = vsel %vm1377, %v2444, %v2446
      %v2448 = vrot.slane %v2398, 2
      %v2449 = vrot.slane %v2399, 2
      %v2450 = vsel %vm1377, %v2448, %v2449
      %v2451 = vrot.slane %v2400, 2
      %v2452 = vsel %vm1377, %v2449, %v2451
      %v2453 = vrot.slane %v2401, 2
      %v2454 = vrot.slane %v2402, 2
      %v2455 = vsel %vm1377, %v2453, %v2454
      %v2456 = vrot.slane %v2403, 2
      %v2457 = vsel %vm1377, %v2454, %v2456
      %v2458 = vrot.slane %v2404, 2
      %v2459 = vrot.slane %v2405, 2
      %v2460 = vsel %vm1377, %v2458, %v2459
      %v2461 = vrot.slane %v2406, 2
      %v2462 = vsel %vm1377, %v2459, %v2461
      %v2463 = vrot.slane %v2407, 2
      %v2464 = vrot.slane %v2408, 2
      %v2465 = vsel %vm1377, %v2463, %v2464
      %v2466 = vrot.slane %v2409, 2
      %v2467 = vsel %vm1377, %v2464, %v2466
      %v2468 = vrot.slane %v2410, 2
      %v2469 = vrot.slane %v2411, 2
      %v2470 = vsel %vm1377, %v2468, %v2469
      %v2471 = vrot.slane %v2412, 2
      %v2472 = vsel %vm1377, %v2469, %v2471
      %v2473 = vrot.slane %v2413, 2
      %v2474 = vrot.slane %v2414, 2
      %v2475 = vsel %vm1377, %v2473, %v2474
      %v2476 = vrot.slane %v2415, 2
      %v2477 = vsel %vm1377, %v2474, %v2476
      %v2478 = vrot.slane %v2416, 2
      %v2479 = vrot.slane %v2417, 2
      %v2480 = vsel %vm1377, %v2478, %v2479
      %v2481 = vrot.slane %v2418, 2
      %v2482 = vsel %vm1377, %v2479, %v2481
      %v2499 = vadd.f32 %v2375, %v2445
      %v2500 = vadd.f32 %v2376, %v2447
      %v2501 = vadd.f32 %v2377, %v2450
      %v2502 = vadd.f32 %v2378, %v2452
      %v2503 = vadd.f32 %v2379, %v2455
      %v2504 = vadd.f32 %v2380, %v2457
      %v2505 = vadd.f32 %v2381, %v2460
      %v2506 = vadd.f32 %v2382, %v2462
      %v2507 = vadd.f32 %v2383, %v2465
      %v2508 = vadd.f32 %v2384, %v2467
      %v2509 = vadd.f32 %v2385, %v2470
      %v2510 = vadd.f32 %v2386, %v2472
      %v2511 = vadd.f32 %v2387, %v2475
      %v2512 = vadd.f32 %v2388, %v2477
      %v2513 = vadd.f32 %v2389, %v2480
      %v2514 = vadd.f32 %v2390, %v2482
      %v2515 = vlaneseq
      %v2516 = vshrl.u32 %v2515, 7
      %v2517 = vsub.s32 3, %v2516
      %v2518 = vrot.slane %v1160, %v2517
      %v2519 = vmul.f32 %v1128, %v2518
      %v2520 = vmul.f32 %v1129, %v2518
      %v2521 = vmul.f32 %v1130, %v2518
      %v2522 = vmul.f32 %v1131, %v2518
      %v2523 = vmul.f32 %v1132, %v2518
      %v2524 = vmul.f32 %v1133, %v2518
      %v2525 = vmul.f32 %v1134, %v2518
      %v2526 = vmul.f32 %v1135, %v2518
      %v2527 = vmul.f32 %v1136, %v2518
      %v2528 = vmul.f32 %v1137, %v2518
      %v2529 = vmul.f32 %v1138, %v2518
      %v2530 = vmul.f32 %v1139, %v2518
      %v2531 = vmul.f32 %v1140, %v2518
      %v2532 = vmul.f32 %v1141, %v2518
      %v2533 = vmul.f32 %v1142, %v2518
      %v2534 = vmul.f32 %v1143, %v2518
      %v2535 = vmul.f32 %v1144, %v2518
      %v2536 = vmul.f32 %v1145, %v2518
      %v2537 = vmul.f32 %v1146, %v2518
      %v2538 = vmul.f32 %v1147, %v2518
      %v2539 = vmul.f32 %v1148, %v2518
      %v2540 = vmul.f32 %v1149, %v2518
      %v2541 = vmul.f32 %v1150, %v2518
      %v2542 = vmul.f32 %v1151, %v2518
      %v2567 = vrot.slane %v2519, 3
      %v2568 = vrot.slane %v2520, 3
      %v2569 = vsel %vm1502, %v2567, %v2568
      %v2570 = vrot.slane %v2521, 3
      %v2571 = vsel %vm1502, %v2568, %v2570
      %v2572 = vrot.slane %v2522, 3
      %v2573 = vrot.slane %v2523, 3
      %v2574 = vsel %vm1502, %v2572, %v2573
      %v2575 = vrot.slane %v2524, 3
      %v2576 = vsel %vm1502, %v2573, %v2575
      %v2577 = vrot.slane %v2525, 3
      %v2578 = vrot.slane %v2526, 3
      %v2579 = vsel %vm1502, %v2577, %v2578
      %v2580 = vrot.slane %v2527, 3
      %v2581 = vsel %vm1502, %v2578, %v2580
      %v2582 = vrot.slane %v2528, 3
      %v2583 = vrot.slane %v2529, 3
      %v2584 = vsel %vm1502, %v2582, %v2583
      %v2585 = vrot.slane %v2530, 3
      %v2586 = vsel %vm1502, %v2583, %v2585
      %v2587 = vrot.slane %v2531, 3
      %v2588 = vrot.slane %v2532, 3
      %v2589 = vsel %vm1502, %v2587, %v2588
      %v2590 = vrot.slane %v2533, 3
      %v2591 = vsel %vm1502, %v2588, %v2590
      %v2592 = vrot.slane %v2534, 3
      %v2593 = vrot.slane %v2535, 3
      %v2594 = vsel %vm1502, %v2592, %v2593
      %v2595 = vrot.slane %v2536, 3
      %v2596 = vsel %vm1502, %v2593, %v2595
      %v2597 = vrot.slane %v2537, 3
      %v2598 = vrot.slane %v2538, 3
      %v2599 = vsel %vm1502, %v2597, %v2598
      %v2600 = vrot.slane %v2539, 3
      %v2601 = vsel %vm1502, %v2598, %v2600
      %v2602 = vrot.slane %v2540, 3
      %v2603 = vrot.slane %v2541, 3
      %v2604 = vsel %vm1502, %v2602, %v2603
      %v2605 = vrot.slane %v2542, 3
      %v2606 = vsel %vm1502, %v2603, %v2605
      %v2623 = vadd.f32 %v2499, %v2569
      %v2624 = vadd.f32 %v2500, %v2571
      %v2625 = vadd.f32 %v2501, %v2574
      %v2626 = vadd.f32 %v2502, %v2576
      %v2627 = vadd.f32 %v2503, %v2579
      %v2628 = vadd.f32 %v2504, %v2581
      %v2629 = vadd.f32 %v2505, %v2584
      %v2630 = vadd.f32 %v2506, %v2586
      %v2631 = vadd.f32 %v2507, %v2589
      %v2632 = vadd.f32 %v2508, %v2591
      %v2633 = vadd.f32 %v2509, %v2594
      %v2634 = vadd.f32 %v2510, %v2596
      %v2635 = vadd.f32 %v2511, %v2599
      %v2636 = vadd.f32 %v2512, %v2601
      %v2637 = vadd.f32 %v2513, %v2604
      %v2638 = vadd.f32 %v2514, %v2606
      %v2639 = vlaneseq
      %v2640 = vshrl.u32 %v2639, 7
      %v2641 = vsub.s32 4, %v2640
      %v2642 = vrot.slane %v1160, %v2641
      %v2643 = vmul.f32 %v1128, %v2642
      %v2644 = vmul.f32 %v1129, %v2642
      %v2645 = vmul.f32 %v1130, %v2642
      %v2646 = vmul.f32 %v1131, %v2642
      %v2647 = vmul.f32 %v1132, %v2642
      %v2648 = vmul.f32 %v1133, %v2642
      %v2649 = vmul.f32 %v1134, %v2642
      %v2650 = vmul.f32 %v1135, %v2642
      %v2651 = vmul.f32 %v1136, %v2642
      %v2652 = vmul.f32 %v1137, %v2642
      %v2653 = vmul.f32 %v1138, %v2642
      %v2654 = vmul.f32 %v1139, %v2642
      %v2655 = vmul.f32 %v1140, %v2642
      %v2656 = vmul.f32 %v1141, %v2642
      %v2657 = vmul.f32 %v1142, %v2642
      %v2658 = vmul.f32 %v1143, %v2642
      %v2659 = vmul.f32 %v1144, %v2642
      %v2660 = vmul.f32 %v1145, %v2642
      %v2661 = vmul.f32 %v1146, %v2642
      %v2662 = vmul.f32 %v1147, %v2642
      %v2663 = vmul.f32 %v1148, %v2642
      %v2664 = vmul.f32 %v1149, %v2642
      %v2665 = vmul.f32 %v1150, %v2642
      %v2666 = vmul.f32 %v1151, %v2642
      %v2691 = vrot.slane %v2643, 4
      %v2692 = vrot.slane %v2644, 4
      %v2693 = vsel %vm530, %v2691, %v2692
      %v2694 = vrot.slane %v2645, 4
      %v2695 = vsel %vm530, %v2692, %v2694
      %v2696 = vrot.slane %v2646, 4
      %v2697 = vrot.slane %v2647, 4
      %v2698 = vsel %vm530, %v2696, %v2697
      %v2699 = vrot.slane %v2648, 4
      %v2700 = vsel %vm530, %v2697, %v2699
      %v2701 = vrot.slane %v2649, 4
      %v2702 = vrot.slane %v2650, 4
      %v2703 = vsel %vm530, %v2701, %v2702
      %v2704 = vrot.slane %v2651, 4
      %v2705 = vsel %vm530, %v2702, %v2704
      %v2706 = vrot.slane %v2652, 4
      %v2707 = vrot.slane %v2653, 4
      %v2708 = vsel %vm530, %v2706, %v2707
      %v2709 = vrot.slane %v2654, 4
      %v2710 = vsel %vm530, %v2707, %v2709
      %v2711 = vrot.slane %v2655, 4
      %v2712 = vrot.slane %v2656, 4
      %v2713 = vsel %vm530, %v2711, %v2712
      %v2714 = vrot.slane %v2657, 4
      %v2715 = vsel %vm530, %v2712, %v2714
      %v2716 = vrot.slane %v2658, 4
      %v2717 = vrot.slane %v2659, 4
      %v2718 = vsel %vm530, %v2716, %v2717
      %v2719 = vrot.slane %v2660, 4
      %v2720 = vsel %vm530, %v2717, %v2719
      %v2721 = vrot.slane %v2661, 4
      %v2722 = vrot.slane %v2662, 4
      %v2723 = vsel %vm530, %v2721, %v2722
      %v2724 = vrot.slane %v2663, 4
      %v2725 = vsel %vm530, %v2722, %v2724
      %v2726 = vrot.slane %v2664, 4
      %v2727 = vrot.slane %v2665, 4
      %v2728 = vsel %vm530, %v2726, %v2727
      %v2729 = vrot.slane %v2666, 4
      %v2730 = vsel %vm530, %v2727, %v2729
      %v2747 = vadd.f32 %v2623, %v2693
      %v2748 = vadd.f32 %v2624, %v2695
      %v2749 = vadd.f32 %v2625, %v2698
      %v2750 = vadd.f32 %v2626, %v2700
      %v2751 = vadd.f32 %v2627, %v2703
      %v2752 = vadd.f32 %v2628, %v2705
      %v2753 = vadd.f32 %v2629, %v2708
      %v2754 = vadd.f32 %v2630, %v2710
      %v2755 = vadd.f32 %v2631, %v2713
      %v2756 = vadd.f32 %v2632, %v2715
      %v2757 = vadd.f32 %v2633, %v2718
      %v2758 = vadd.f32 %v2634, %v2720
      %v2759 = vadd.f32 %v2635, %v2723
      %v2760 = vadd.f32 %v2636, %v2725
      %v2761 = vadd.f32 %v2637, %v2728
      %v2762 = vadd.f32 %v2638, %v2730
      %v2763 = vlaneseq
      %v2764 = vshrl.u32 %v2763, 7
      %v2765 = vsub.s32 0, %v2764
      %v2766 = vrot.slane %v1161, %v2765
      %v2767 = vmul.f32 %v1131, %v2766
      %v2768 = vmul.f32 %v1132, %v2766
      %v2769 = vmul.f32 %v1134, %v2766
      %v2770 = vmul.f32 %v1135, %v2766
      %v2771 = vmul.f32 %v1137, %v2766
      %v2772 = vmul.f32 %v1138, %v2766
      %v2773 = vmul.f32 %v1140, %v2766
      %v2774 = vmul.f32 %v1141, %v2766
      %v2775 = vmul.f32 %v1143, %v2766
      %v2776 = vmul.f32 %v1144, %v2766
      %v2777 = vmul.f32 %v1146, %v2766
      %v2778 = vmul.f32 %v1147, %v2766
      %v2779 = vmul.f32 %v1149, %v2766
      %v2780 = vmul.f32 %v1150, %v2766
      %v2781 = vmul.f32 %v1152, %v2766
      %v2782 = vmul.f32 %v1153, %v2766
      %v2783 = vadd.f32 %v2747, %v2767
      %v2784 = vadd.f32 %v2748, %v2768
      %v2785 = vadd.f32 %v2749, %v2769
      %v2786 = vadd.f32 %v2750, %v2770
      %v2787 = vadd.f32 %v2751, %v2771
      %v2788 = vadd.f32 %v2752, %v2772
      %v2789 = vadd.f32 %v2753, %v2773
      %v2790 = vadd.f32 %v2754, %v2774
      %v2791 = vadd.f32 %v2755, %v2775
      %v2792 = vadd.f32 %v2756, %v2776
      %v2793 = vadd.f32 %v2757, %v2777
      %v2794 = vadd.f32 %v2758, %v2778
      %v2795 = vadd.f32 %v2759, %v2779
      %v2796 = vadd.f32 %v2760, %v2780
      %v2797 = vadd.f32 %v2761, %v2781
      %v2798 = vadd.f32 %v2762, %v2782
      %v2799 = vlaneseq
      %v2800 = vshrl.u32 %v2799, 7
      %v2801 = vsub.s32 1, %v2800
      %v2802 = vrot.slane %v1161, %v2801
      %v2803 = vmul.f32 %v1131, %v2802
      %v2804 = vmul.f32 %v1132, %v2802
      %v2805 = vmul.f32 %v1133, %v2802
      %v2806 = vmul.f32 %v1134, %v2802
      %v2807 = vmul.f32 %v1135, %v2802
      %v2808 = vmul.f32 %v1136, %v2802
      %v2809 = vmul.f32 %v1137, %v2802
      %v2810 = vmul.f32 %v1138, %v2802
      %v2811 = vmul.f32 %v1139, %v2802
      %v2812 = vmul.f32 %v1140, %v2802
      %v2813 = vmul.f32 %v1141, %v2802
      %v2814 = vmul.f32 %v1142, %v2802
      %v2815 = vmul.f32 %v1143, %v2802
      %v2816 = vmul.f32 %v1144, %v2802
      %v2817 = vmul.f32 %v1145, %v2802
      %v2818 = vmul.f32 %v1146, %v2802
      %v2819 = vmul.f32 %v1147, %v2802
      %v2820 = vmul.f32 %v1148, %v2802
      %v2821 = vmul.f32 %v1149, %v2802
      %v2822 = vmul.f32 %v1150, %v2802
      %v2823 = vmul.f32 %v1151, %v2802
      %v2824 = vmul.f32 %v1152, %v2802
      %v2825 = vmul.f32 %v1153, %v2802
      %v2826 = vmul.f32 %v1154, %v2802
      %v2851 = vrot.slane %v2803, 1
      %v2852 = vrot.slane %v2804, 1
      %v2853 = vsel %vm1252, %v2851, %v2852
      %v2854 = vrot.slane %v2805, 1
      %v2855 = vsel %vm1252, %v2852, %v2854
      %v2856 = vrot.slane %v2806, 1
      %v2857 = vrot.slane %v2807, 1
      %v2858 = vsel %vm1252, %v2856, %v2857
      %v2859 = vrot.slane %v2808, 1
      %v2860 = vsel %vm1252, %v2857, %v2859
      %v2861 = vrot.slane %v2809, 1
      %v2862 = vrot.slane %v2810, 1
      %v2863 = vsel %vm1252, %v2861, %v2862
      %v2864 = vrot.slane %v2811, 1
      %v2865 = vsel %vm1252, %v2862, %v2864
      %v2866 = vrot.slane %v2812, 1
      %v2867 = vrot.slane %v2813, 1
      %v2868 = vsel %vm1252, %v2866, %v2867
      %v2869 = vrot.slane %v2814, 1
      %v2870 = vsel %vm1252, %v2867, %v2869
      %v2871 = vrot.slane %v2815, 1
      %v2872 = vrot.slane %v2816, 1
      %v2873 = vsel %vm1252, %v2871, %v2872
      %v2874 = vrot.slane %v2817, 1
      %v2875 = vsel %vm1252, %v2872, %v2874
      %v2876 = vrot.slane %v2818, 1
      %v2877 = vrot.slane %v2819, 1
      %v2878 = vsel %vm1252, %v2876, %v2877
      %v2879 = vrot.slane %v2820, 1
      %v2880 = vsel %vm1252, %v2877, %v2879
      %v2881 = vrot.slane %v2821, 1
      %v2882 = vrot.slane %v2822, 1
      %v2883 = vsel %vm1252, %v2881, %v2882
      %v2884 = vrot.slane %v2823, 1
      %v2885 = vsel %vm1252, %v2882, %v2884
      %v2886 = vrot.slane %v2824, 1
      %v2887 = vrot.slane %v2825, 1
      %v2888 = vsel %vm1252, %v2886, %v2887
      %v2889 = vrot.slane %v2826, 1
      %v2890 = vsel %vm1252, %v2887, %v2889
      %v2907 = vadd.f32 %v2783, %v2853
      %v2908 = vadd.f32 %v2784, %v2855
      %v2909 = vadd.f32 %v2785, %v2858
      %v2910 = vadd.f32 %v2786, %v2860
      %v2911 = vadd.f32 %v2787, %v2863
      %v2912 = vadd.f32 %v2788, %v2865
      %v2913 = vadd.f32 %v2789, %v2868
      %v2914 = vadd.f32 %v2790, %v2870
      %v2915 = vadd.f32 %v2791, %v2873
      %v2916 = vadd.f32 %v2792, %v2875
      %v2917 = vadd.f32 %v2793, %v2878
      %v2918 = vadd.f32 %v2794, %v2880
      %v2919 = vadd.f32 %v2795, %v2883
      %v2920 = vadd.f32 %v2796, %v2885
      %v2921 = vadd.f32 %v2797, %v2888
      %v2922 = vadd.f32 %v2798, %v2890
      %v2923 = vlaneseq
      %v2924 = vshrl.u32 %v2923, 7
      %v2925 = vsub.s32 2, %v2924
      %v2926 = vrot.slane %v1161, %v2925
      %v2927 = vmul.f32 %v1131, %v2926
      %v2928 = vmul.f32 %v1132, %v2926
      %v2929 = vmul.f32 %v1133, %v2926
      %v2930 = vmul.f32 %v1134, %v2926
      %v2931 = vmul.f32 %v1135, %v2926
      %v2932 = vmul.f32 %v1136, %v2926
      %v2933 = vmul.f32 %v1137, %v2926
      %v2934 = vmul.f32 %v1138, %v2926
      %v2935 = vmul.f32 %v1139, %v2926
      %v2936 = vmul.f32 %v1140, %v2926
      %v2937 = vmul.f32 %v1141, %v2926
      %v2938 = vmul.f32 %v1142, %v2926
      %v2939 = vmul.f32 %v1143, %v2926
      %v2940 = vmul.f32 %v1144, %v2926
      %v2941 = vmul.f32 %v1145, %v2926
      %v2942 = vmul.f32 %v1146, %v2926
      %v2943 = vmul.f32 %v1147, %v2926
      %v2944 = vmul.f32 %v1148, %v2926
      %v2945 = vmul.f32 %v1149, %v2926
      %v2946 = vmul.f32 %v1150, %v2926
      %v2947 = vmul.f32 %v1151, %v2926
      %v2948 = vmul.f32 %v1152, %v2926
      %v2949 = vmul.f32 %v1153, %v2926
      %v2950 = vmul.f32 %v1154, %v2926
      %v2975 = vrot.slane %v2927, 2
      %v2976 = vrot.slane %v2928, 2
      %v2977 = vsel %vm1377, %v2975, %v2976
      %v2978 = vrot.slane %v2929, 2
      %v2979 = vsel %vm1377, %v2976, %v2978
      %v2980 = vrot.slane %v2930, 2
      %v2981 = vrot.slane %v2931, 2
      %v2982 = vsel %vm1377, %v2980, %v2981
      %v2983 = vrot.slane %v2932, 2
      %v2984 = vsel %vm1377, %v2981, %v2983
      %v2985 = vrot.slane %v2933, 2
      %v2986 = vrot.slane %v2934, 2
      %v2987 = vsel %vm1377, %v2985, %v2986
      %v2988 = vrot.slane %v2935, 2
      %v2989 = vsel %vm1377, %v2986, %v2988
      %v2990 = vrot.slane %v2936, 2
      %v2991 = vrot.slane %v2937, 2
      %v2992 = vsel %vm1377, %v2990, %v2991
      %v2993 = vrot.slane %v2938, 2
      %v2994 = vsel %vm1377, %v2991, %v2993
      %v2995 = vrot.slane %v2939, 2
      %v2996 = vrot.slane %v2940, 2
      %v2997 = vsel %vm1377, %v2995, %v2996
      %v2998 = vrot.slane %v2941, 2
      %v2999 = vsel %vm1377, %v2996, %v2998
      %v3000 = vrot.slane %v2942, 2
      %v3001 = vrot.slane %v2943, 2
      %v3002 = vsel %vm1377, %v3000, %v3001
      %v3003 = vrot.slane %v2944, 2
      %v3004 = vsel %vm1377, %v3001, %v3003
      %v3005 = vrot.slane %v2945, 2
      %v3006 = vrot.slane %v2946, 2
      %v3007 = vsel %vm1377, %v3005, %v3006
      %v3008 = vrot.slane %v2947, 2
      %v3009 = vsel %vm1377, %v3006, %v3008
      %v3010 = vrot.slane %v2948, 2
      %v3011 = vrot.slane %v2949, 2
      %v3012 = vsel %vm1377, %v3010, %v3011
      %v3013 = vrot.slane %v2950, 2
      %v3014 = vsel %vm1377, %v3011, %v3013
      %v3031 = vadd.f32 %v2907, %v2977
      %v3032 = vadd.f32 %v2908, %v2979
      %v3033 = vadd.f32 %v2909, %v2982
      %v3034 = vadd.f32 %v2910, %v2984
      %v3035 = vadd.f32 %v2911, %v2987
      %v3036 = vadd.f32 %v2912, %v2989
      %v3037 = vadd.f32 %v2913, %v2992
      %v3038 = vadd.f32 %v2914, %v2994
      %v3039 = vadd.f32 %v2915, %v2997
      %v3040 = vadd.f32 %v2916, %v2999
      %v3041 = vadd.f32 %v2917, %v3002
      %v3042 = vadd.f32 %v2918, %v3004
      %v3043 = vadd.f32 %v2919, %v3007
      %v3044 = vadd.f32 %v2920, %v3009
      %v3045 = vadd.f32 %v2921, %v3012
      %v3046 = vadd.f32 %v2922, %v3014
      %v3047 = vlaneseq
      %v3048 = vshrl.u32 %v3047, 7
      %v3049 = vsub.s32 3, %v3048
      %v3050 = vrot.slane %v1161, %v3049
      %v3051 = vmul.f32 %v1131, %v3050
      %v3052 = vmul.f32 %v1132, %v3050
      %v3053 = vmul.f32 %v1133, %v3050
      %v3054 = vmul.f32 %v1134, %v3050
      %v3055 = vmul.f32 %v1135, %v3050
      %v3056 = vmul.f32 %v1136, %v3050
      %v3057 = vmul.f32 %v1137, %v3050
      %v3058 = vmul.f32 %v1138, %v3050
      %v3059 = vmul.f32 %v1139, %v3050
      %v3060 = vmul.f32 %v1140, %v3050
      %v3061 = vmul.f32 %v1141, %v3050
      %v3062 = vmul.f32 %v1142, %v3050
      %v3063 = vmul.f32 %v1143, %v3050
      %v3064 = vmul.f32 %v1144, %v3050
      %v3065 = vmul.f32 %v1145, %v3050
      %v3066 = vmul.f32 %v1146, %v3050
      %v3067 = vmul.f32 %v1147, %v3050
      %v3068 = vmul.f32 %v1148, %v3050
      %v3069 = vmul.f32 %v1149, %v3050
      %v3070 = vmul.f32 %v1150, %v3050
      %v3071 = vmul.f32 %v1151, %v3050
      %v3072 = vmul.f32 %v1152, %v3050
      %v3073 = vmul.f32 %v1153, %v3050
      %v3074 = vmul.f32 %v1154, %v3050
      %v3099 = vrot.slane %v3051, 3
      %v3100 = vrot.slane %v3052, 3
      %v3101 = vsel %vm1502, %v3099, %v3100
      %v3102 = vrot.slane %v3053, 3
      %v3103 = vsel %vm1502, %v3100, %v3102
      %v3104 = vrot.slane %v3054, 3
      %v3105 = vrot.slane %v3055, 3
      %v3106 = vsel %vm1502, %v3104, %v3105
      %v3107 = vrot.slane %v3056, 3
      %v3108 = vsel %vm1502, %v3105, %v3107
      %v3109 = vrot.slane %v3057, 3
      %v3110 = vrot.slane %v3058, 3
      %v3111 = vsel %vm1502, %v3109, %v3110
      %v3112 = vrot.slane %v3059, 3
      %v3113 = vsel %vm1502, %v3110, %v3112
      %v3114 = vrot.slane %v3060, 3
      %v3115 = vrot.slane %v3061, 3
      %v3116 = vsel %vm1502, %v3114, %v3115
      %v3117 = vrot.slane %v3062, 3
      %v3118 = vsel %vm1502, %v3115, %v3117
      %v3119 = vrot.slane %v3063, 3
      %v3120 = vrot.slane %v3064, 3
      %v3121 = vsel %vm1502, %v3119, %v3120
      %v3122 = vrot.slane %v3065, 3
      %v3123 = vsel %vm1502, %v3120, %v3122
      %v3124 = vrot.slane %v3066, 3
      %v3125 = vrot.slane %v3067, 3
      %v3126 = vsel %vm1502, %v3124, %v3125
      %v3127 = vrot.slane %v3068, 3
      %v3128 = vsel %vm1502, %v3125, %v3127
      %v3129 = vrot.slane %v3069, 3
      %v3130 = vrot.slane %v3070, 3
      %v3131 = vsel %vm1502, %v3129, %v3130
      %v3132 = vrot.slane %v3071, 3
      %v3133 = vsel %vm1502, %v3130, %v3132
      %v3134 = vrot.slane %v3072, 3
      %v3135 = vrot.slane %v3073, 3
      %v3136 = vsel %vm1502, %v3134, %v3135
      %v3137 = vrot.slane %v3074, 3
      %v3138 = vsel %vm1502, %v3135, %v3137
      %v3155 = vadd.f32 %v3031, %v3101
      %v3156 = vadd.f32 %v3032, %v3103
      %v3157 = vadd.f32 %v3033, %v3106
      %v3158 = vadd.f32 %v3034, %v3108
      %v3159 = vadd.f32 %v3035, %v3111
      %v3160 = vadd.f32 %v3036, %v3113
      %v3161 = vadd.f32 %v3037, %v3116
      %v3162 = vadd.f32 %v3038, %v3118
      %v3163 = vadd.f32 %v3039, %v3121
      %v3164 = vadd.f32 %v3040, %v3123
      %v3165 = vadd.f32 %v3041, %v3126
      %v3166 = vadd.f32 %v3042, %v3128
      %v3167 = vadd.f32 %v3043, %v3131
      %v3168 = vadd.f32 %v3044, %v3133
      %v3169 = vadd.f32 %v3045, %v3136
      %v3170 = vadd.f32 %v3046, %v3138
      %v3171 = vlaneseq
      %v3172 = vshrl.u32 %v3171, 7
      %v3173 = vsub.s32 4, %v3172
      %v3174 = vrot.slane %v1161, %v3173
      %v3175 = vmul.f32 %v1131, %v3174
      %v3176 = vmul.f32 %v1132, %v3174
      %v3177 = vmul.f32 %v1133, %v3174
      %v3178 = vmul.f32 %v1134, %v3174
      %v3179 = vmul.f32 %v1135, %v3174
      %v3180 = vmul.f32 %v1136, %v3174
      %v3181 = vmul.f32 %v1137, %v3174
      %v3182 = vmul.f32 %v1138, %v3174
      %v3183 = vmul.f32 %v1139, %v3174
      %v3184 = vmul.f32 %v1140, %v3174
      %v3185 = vmul.f32 %v1141, %v3174
      %v3186 = vmul.f32 %v1142, %v3174
      %v3187 = vmul.f32 %v1143, %v3174
      %v3188 = vmul.f32 %v1144, %v3174
      %v3189 = vmul.f32 %v1145, %v3174
      %v3190 = vmul.f32 %v1146, %v3174
      %v3191 = vmul.f32 %v1147, %v3174
      %v3192 = vmul.f32 %v1148, %v3174
      %v3193 = vmul.f32 %v1149, %v3174
      %v3194 = vmul.f32 %v1150, %v3174
      %v3195 = vmul.f32 %v1151, %v3174
      %v3196 = vmul.f32 %v1152, %v3174
      %v3197 = vmul.f32 %v1153, %v3174
      %v3198 = vmul.f32 %v1154, %v3174
      %v3223 = vrot.slane %v3175, 4
      %v3224 = vrot.slane %v3176, 4
      %v3225 = vsel %vm530, %v3223, %v3224
      %v3226 = vrot.slane %v3177, 4
      %v3227 = vsel %vm530, %v3224, %v3226
      %v3228 = vrot.slane %v3178, 4
      %v3229 = vrot.slane %v3179, 4
      %v3230 = vsel %vm530, %v3228, %v3229
      %v3231 = vrot.slane %v3180, 4
      %v3232 = vsel %vm530, %v3229, %v3231
      %v3233 = vrot.slane %v3181, 4
      %v3234 = vrot.slane %v3182, 4
      %v3235 = vsel %vm530, %v3233, %v3234
      %v3236 = vrot.slane %v3183, 4
      %v3237 = vsel %vm530, %v3234, %v3236
      %v3238 = vrot.slane %v3184, 4
      %v3239 = vrot.slane %v3185, 4
      %v3240 = vsel %vm530, %v3238, %v3239
      %v3241 = vrot.slane %v3186, 4
      %v3242 = vsel %vm530, %v3239, %v3241
      %v3243 = vrot.slane %v3187, 4
      %v3244 = vrot.slane %v3188, 4
      %v3245 = vsel %vm530, %v3243, %v3244
      %v3246 = vrot.slane %v3189, 4
      %v3247 = vsel %vm530, %v3244, %v3246
      %v3248 = vrot.slane %v3190, 4
      %v3249 = vrot.slane %v3191, 4
      %v3250 = vsel %vm530, %v3248, %v3249
      %v3251 = vrot.slane %v3192, 4
      %v3252 = vsel %vm530, %v3249, %v3251
      %v3253 = vrot.slane %v3193, 4
      %v3254 = vrot.slane %v3194, 4
      %v3255 = vsel %vm530, %v3253, %v3254
      %v3256 = vrot.slane %v3195, 4
      %v3257 = vsel %vm530, %v3254, %v3256
      %v3258 = vrot.slane %v3196, 4
      %v3259 = vrot.slane %v3197, 4
      %v3260 = vsel %vm530, %v3258, %v3259
      %v3261 = vrot.slane %v3198, 4
      %v3262 = vsel %vm530, %v3259, %v3261
      %v3279 = vadd.f32 %v3155, %v3225
      %v3280 = vadd.f32 %v3156, %v3227
      %v3281 = vadd.f32 %v3157, %v3230
      %v3282 = vadd.f32 %v3158, %v3232
      %v3283 = vadd.f32 %v3159, %v3235
      %v3284 = vadd.f32 %v3160, %v3237
      %v3285 = vadd.f32 %v3161, %v3240
      %v3286 = vadd.f32 %v3162, %v3242
      %v3287 = vadd.f32 %v3163, %v3245
      %v3288 = vadd.f32 %v3164, %v3247
      %v3289 = vadd.f32 %v3165, %v3250
      %v3290 = vadd.f32 %v3166, %v3252
      %v3291 = vadd.f32 %v3167, %v3255
      %v3292 = vadd.f32 %v3168, %v3257
      %v3293 = vadd.f32 %v3169, %v3260
      %v3294 = vadd.f32 %v3170, %v3262
      %v3295 = vlaneseq
      %v3296 = vshrl.u32 %v3295, 7
      %v3297 = vsub.s32 0, %v3296
      %v3298 = vrot.slane %v1162, %v3297
      %v3299 = vmul.f32 %v1134, %v3298
      %v3300 = vmul.f32 %v1135, %v3298
      %v3301 = vmul.f32 %v1137, %v3298
      %v3302 = vmul.f32 %v1138, %v3298
      %v3303 = vmul.f32 %v1140, %v3298
      %v3304 = vmul.f32 %v1141, %v3298
      %v3305 = vmul.f32 %v1143, %v3298
      %v3306 = vmul.f32 %v1144, %v3298
      %v3307 = vmul.f32 %v1146, %v3298
      %v3308 = vmul.f32 %v1147, %v3298
      %v3309 = vmul.f32 %v1149, %v3298
      %v3310 = vmul.f32 %v1150, %v3298
      %v3311 = vmul.f32 %v1152, %v3298
      %v3312 = vmul.f32 %v1153, %v3298
      %v3313 = vmul.f32 %v1155, %v3298
      %v3314 = vmul.f32 %v1156, %v3298
      %v3315 = vadd.f32 %v3279, %v3299
      %v3316 = vadd.f32 %v3280, %v3300
      %v3317 = vadd.f32 %v3281, %v3301
      %v3318 = vadd.f32 %v3282, %v3302
      %v3319 = vadd.f32 %v3283, %v3303
      %v3320 = vadd.f32 %v3284, %v3304
      %v3321 = vadd.f32 %v3285, %v3305
      %v3322 = vadd.f32 %v3286, %v3306
      %v3323 = vadd.f32 %v3287, %v3307
      %v3324 = vadd.f32 %v3288, %v3308
      %v3325 = vadd.f32 %v3289, %v3309
      %v3326 = vadd.f32 %v3290, %v3310
      %v3327 = vadd.f32 %v3291, %v3311
      %v3328 = vadd.f32 %v3292, %v3312
      %v3329 = vadd.f32 %v3293, %v3313
      %v3330 = vadd.f32 %v3294, %v3314
      %v3331 = vlaneseq
      %v3332 = vshrl.u32 %v3331, 7
      %v3333 = vsub.s32 1, %v3332
      %v3334 = vrot.slane %v1162, %v3333
      %v3335 = vmul.f32 %v1134, %v3334
      %v3336 = vmul.f32 %v1135, %v3334
      %v3337 = vmul.f32 %v1136, %v3334
      %v3338 = vmul.f32 %v1137, %v3334
      %v3339 = vmul.f32 %v1138, %v3334
      %v3340 = vmul.f32 %v1139, %v3334
      %v3341 = vmul.f32 %v1140, %v3334
      %v3342 = vmul.f32 %v1141, %v3334
      %v3343 = vmul.f32 %v1142, %v3334
      %v3344 = vmul.f32 %v1143, %v3334
      %v3345 = vmul.f32 %v1144, %v3334
      %v3346 = vmul.f32 %v1145, %v3334
      %v3347 = vmul.f32 %v1146, %v3334
      %v3348 = vmul.f32 %v1147, %v3334
      %v3349 = vmul.f32 %v1148, %v3334
      %v3350 = vmul.f32 %v1149, %v3334
      %v3351 = vmul.f32 %v1150, %v3334
      %v3352 = vmul.f32 %v1151, %v3334
      %v3353 = vmul.f32 %v1152, %v3334
      %v3354 = vmul.f32 %v1153, %v3334
      %v3355 = vmul.f32 %v1154, %v3334
      %v3356 = vmul.f32 %v1155, %v3334
      %v3357 = vmul.f32 %v1156, %v3334
      %v3358 = vmul.f32 %v1157, %v3334
      %v3383 = vrot.slane %v3335, 1
      %v3384 = vrot.slane %v3336, 1
      %v3385 = vsel %vm1252, %v3383, %v3384
      %v3386 = vrot.slane %v3337, 1
      %v3387 = vsel %vm1252, %v3384, %v3386
      %v3388 = vrot.slane %v3338, 1
      %v3389 = vrot.slane %v3339, 1
      %v3390 = vsel %vm1252, %v3388, %v3389
      %v3391 = vrot.slane %v3340, 1
      %v3392 = vsel %vm1252, %v3389, %v3391
      %v3393 = vrot.slane %v3341, 1
      %v3394 = vrot.slane %v3342, 1
      %v3395 = vsel %vm1252, %v3393, %v3394
      %v3396 = vrot.slane %v3343, 1
      %v3397 = vsel %vm1252, %v3394, %v3396
      %v3398 = vrot.slane %v3344, 1
      %v3399 = vrot.slane %v3345, 1
      %v3400 = vsel %vm1252, %v3398, %v3399
      %v3401 = vrot.slane %v3346, 1
      %v3402 = vsel %vm1252, %v3399, %v3401
      %v3403 = vrot.slane %v3347, 1
      %v3404 = vrot.slane %v3348, 1
      %v3405 = vsel %vm1252, %v3403, %v3404
      %v3406 = vrot.slane %v3349, 1
      %v3407 = vsel %vm1252, %v3404, %v3406
      %v3408 = vrot.slane %v3350, 1
      %v3409 = vrot.slane %v3351, 1
      %v3410 = vsel %vm1252, %v3408, %v3409
      %v3411 = vrot.slane %v3352, 1
      %v3412 = vsel %vm1252, %v3409, %v3411
      %v3413 = vrot.slane %v3353, 1
      %v3414 = vrot.slane %v3354, 1
      %v3415 = vsel %vm1252, %v3413, %v3414
      %v3416 = vrot.slane %v3355, 1
      %v3417 = vsel %vm1252, %v3414, %v3416
      %v3418 = vrot.slane %v3356, 1
      %v3419 = vrot.slane %v3357, 1
      %v3420 = vsel %vm1252, %v3418, %v3419
      %v3421 = vrot.slane %v3358, 1
      %v3422 = vsel %vm1252, %v3419, %v3421
      %v3439 = vadd.f32 %v3315, %v3385
      %v3440 = vadd.f32 %v3316, %v3387
      %v3441 = vadd.f32 %v3317, %v3390
      %v3442 = vadd.f32 %v3318, %v3392
      %v3443 = vadd.f32 %v3319, %v3395
      %v3444 = vadd.f32 %v3320, %v3397
      %v3445 = vadd.f32 %v3321, %v3400
      %v3446 = vadd.f32 %v3322, %v3402
      %v3447 = vadd.f32 %v3323, %v3405
      %v3448 = vadd.f32 %v3324, %v3407
      %v3449 = vadd.f32 %v3325, %v3410
      %v3450 = vadd.f32 %v3326, %v3412
      %v3451 = vadd.f32 %v3327, %v3415
      %v3452 = vadd.f32 %v3328, %v3417
      %v3453 = vadd.f32 %v3329, %v3420
      %v3454 = vadd.f32 %v3330, %v3422
      %v3455 = vlaneseq
      %v3456 = vshrl.u32 %v3455, 7
      %v3457 = vsub.s32 2, %v3456
      %v3458 = vrot.slane %v1162, %v3457
      %v3459 = vmul.f32 %v1134, %v3458
      %v3460 = vmul.f32 %v1135, %v3458
      %v3461 = vmul.f32 %v1136, %v3458
      %v3462 = vmul.f32 %v1137, %v3458
      %v3463 = vmul.f32 %v1138, %v3458
      %v3464 = vmul.f32 %v1139, %v3458
      %v3465 = vmul.f32 %v1140, %v3458
      %v3466 = vmul.f32 %v1141, %v3458
      %v3467 = vmul.f32 %v1142, %v3458
      %v3468 = vmul.f32 %v1143, %v3458
      %v3469 = vmul.f32 %v1144, %v3458
      %v3470 = vmul.f32 %v1145, %v3458
      %v3471 = vmul.f32 %v1146, %v3458
      %v3472 = vmul.f32 %v1147, %v3458
      %v3473 = vmul.f32 %v1148, %v3458
      %v3474 = vmul.f32 %v1149, %v3458
      %v3475 = vmul.f32 %v1150, %v3458
      %v3476 = vmul.f32 %v1151, %v3458
      %v3477 = vmul.f32 %v1152, %v3458
      %v3478 = vmul.f32 %v1153, %v3458
      %v3479 = vmul.f32 %v1154, %v3458
      %v3480 = vmul.f32 %v1155, %v3458
      %v3481 = vmul.f32 %v1156, %v3458
      %v3482 = vmul.f32 %v1157, %v3458
      %v3507 = vrot.slane %v3459, 2
      %v3508 = vrot.slane %v3460, 2
      %v3509 = vsel %vm1377, %v3507, %v3508
      %v3510 = vrot.slane %v3461, 2
      %v3511 = vsel %vm1377, %v3508, %v3510
      %v3512 = vrot.slane %v3462, 2
      %v3513 = vrot.slane %v3463, 2
      %v3514 = vsel %vm1377, %v3512, %v3513
      %v3515 = vrot.slane %v3464, 2
      %v3516 = vsel %vm1377, %v3513, %v3515
      %v3517 = vrot.slane %v3465, 2
      %v3518 = vrot.slane %v3466, 2
      %v3519 = vsel %vm1377, %v3517, %v3518
      %v3520 = vrot.slane %v3467, 2
      %v3521 = vsel %vm1377, %v3518, %v3520
      %v3522 = vrot.slane %v3468, 2
      %v3523 = vrot.slane %v3469, 2
      %v3524 = vsel %vm1377, %v3522, %v3523
      %v3525 = vrot.slane %v3470, 2
      %v3526 = vsel %vm1377, %v3523, %v3525
      %v3527 = vrot.slane %v3471, 2
      %v3528 = vrot.slane %v3472, 2
      %v3529 = vsel %vm1377, %v3527, %v3528
      %v3530 = vrot.slane %v3473, 2
      %v3531 = vsel %vm1377, %v3528, %v3530
      %v3532 = vrot.slane %v3474, 2
      %v3533 = vrot.slane %v3475, 2
      %v3534 = vsel %vm1377, %v3532, %v3533
      %v3535 = vrot.slane %v3476, 2
      %v3536 = vsel %vm1377, %v3533, %v3535
      %v3537 = vrot.slane %v3477, 2
      %v3538 = vrot.slane %v3478, 2
      %v3539 = vsel %vm1377, %v3537, %v3538
      %v3540 = vrot.slane %v3479, 2
      %v3541 = vsel %vm1377, %v3538, %v3540
      %v3542 = vrot.slane %v3480, 2
      %v3543 = vrot.slane %v3481, 2
      %v3544 = vsel %vm1377, %v3542, %v3543
      %v3545 = vrot.slane %v3482, 2
      %v3546 = vsel %vm1377, %v3543, %v3545
      %v3563 = vadd.f32 %v3439, %v3509
      %v3564 = vadd.f32 %v3440, %v3511
      %v3565 = vadd.f32 %v3441, %v3514
      %v3566 = vadd.f32 %v3442, %v3516
      %v3567 = vadd.f32 %v3443, %v3519
      %v3568 = vadd.f32 %v3444, %v3521
      %v3569 = vadd.f32 %v3445, %v3524
      %v3570 = vadd.f32 %v3446, %v3526
      %v3571 = vadd.f32 %v3447, %v3529
      %v3572 = vadd.f32 %v3448, %v3531
      %v3573 = vadd.f32 %v3449, %v3534
      %v3574 = vadd.f32 %v3450, %v3536
      %v3575 = vadd.f32 %v3451, %v3539
      %v3576 = vadd.f32 %v3452, %v3541
      %v3577 = vadd.f32 %v3453, %v3544
      %v3578 = vadd.f32 %v3454, %v3546
      %v3579 = vlaneseq
      %v3580 = vshrl.u32 %v3579, 7
      %v3581 = vsub.s32 3, %v3580
      %v3582 = vrot.slane %v1162, %v3581
      %v3583 = vmul.f32 %v1134, %v3582
      %v3584 = vmul.f32 %v1135, %v3582
      %v3585 = vmul.f32 %v1136, %v3582
      %v3586 = vmul.f32 %v1137, %v3582
      %v3587 = vmul.f32 %v1138, %v3582
      %v3588 = vmul.f32 %v1139, %v3582
      %v3589 = vmul.f32 %v1140, %v3582
      %v3590 = vmul.f32 %v1141, %v3582
      %v3591 = vmul.f32 %v1142, %v3582
      %v3592 = vmul.f32 %v1143, %v3582
      %v3593 = vmul.f32 %v1144, %v3582
      %v3594 = vmul.f32 %v1145, %v3582
      %v3595 = vmul.f32 %v1146, %v3582
      %v3596 = vmul.f32 %v1147, %v3582
      %v3597 = vmul.f32 %v1148, %v3582
      %v3598 = vmul.f32 %v1149, %v3582
      %v3599 = vmul.f32 %v1150, %v3582
      %v3600 = vmul.f32 %v1151, %v3582
      %v3601 = vmul.f32 %v1152, %v3582
      %v3602 = vmul.f32 %v1153, %v3582
      %v3603 = vmul.f32 %v1154, %v3582
      %v3604 = vmul.f32 %v1155, %v3582
      %v3605 = vmul.f32 %v1156, %v3582
      %v3606 = vmul.f32 %v1157, %v3582
      %v3631 = vrot.slane %v3583, 3
      %v3632 = vrot.slane %v3584, 3
      %v3633 = vsel %vm1502, %v3631, %v3632
      %v3634 = vrot.slane %v3585, 3
      %v3635 = vsel %vm1502, %v3632, %v3634
      %v3636 = vrot.slane %v3586, 3
      %v3637 = vrot.slane %v3587, 3
      %v3638 = vsel %vm1502, %v3636, %v3637
      %v3639 = vrot.slane %v3588, 3
      %v3640 = vsel %vm1502, %v3637, %v3639
      %v3641 = vrot.slane %v3589, 3
      %v3642 = vrot.slane %v3590, 3
      %v3643 = vsel %vm1502, %v3641, %v3642
      %v3644 = vrot.slane %v3591, 3
      %v3645 = vsel %vm1502, %v3642, %v3644
      %v3646 = vrot.slane %v3592, 3
      %v3647 = vrot.slane %v3593, 3
      %v3648 = vsel %vm1502, %v3646, %v3647
      %v3649 = vrot.slane %v3594, 3
      %v3650 = vsel %vm1502, %v3647, %v3649
      %v3651 = vrot.slane %v3595, 3
      %v3652 = vrot.slane %v3596, 3
      %v3653 = vsel %vm1502, %v3651, %v3652
      %v3654 = vrot.slane %v3597, 3
      %v3655 = vsel %vm1502, %v3652, %v3654
      %v3656 = vrot.slane %v3598, 3
      %v3657 = vrot.slane %v3599, 3
      %v3658 = vsel %vm1502, %v3656, %v3657
      %v3659 = vrot.slane %v3600, 3
      %v3660 = vsel %vm1502, %v3657, %v3659
      %v3661 = vrot.slane %v3601, 3
      %v3662 = vrot.slane %v3602, 3
      %v3663 = vsel %vm1502, %v3661, %v3662
      %v3664 = vrot.slane %v3603, 3
      %v3665 = vsel %vm1502, %v3662, %v3664
      %v3666 = vrot.slane %v3604, 3
      %v3667 = vrot.slane %v3605, 3
      %v3668 = vsel %vm1502, %v3666, %v3667
      %v3669 = vrot.slane %v3606, 3
      %v3670 = vsel %vm1502, %v3667, %v3669
      %v3687 = vadd.f32 %v3563, %v3633
      %v3688 = vadd.f32 %v3564, %v3635
      %v3689 = vadd.f32 %v3565, %v3638
      %v3690 = vadd.f32 %v3566, %v3640
      %v3691 = vadd.f32 %v3567, %v3643
      %v3692 = vadd.f32 %v3568, %v3645
      %v3693 = vadd.f32 %v3569, %v3648
      %v3694 = vadd.f32 %v3570, %v3650
      %v3695 = vadd.f32 %v3571, %v3653
      %v3696 = vadd.f32 %v3572, %v3655
      %v3697 = vadd.f32 %v3573, %v3658
      %v3698 = vadd.f32 %v3574, %v3660
      %v3699 = vadd.f32 %v3575, %v3663
      %v3700 = vadd.f32 %v3576, %v3665
      %v3701 = vadd.f32 %v3577, %v3668
      %v3702 = vadd.f32 %v3578, %v3670
      %v3703 = vlaneseq
      %v3704 = vshrl.u32 %v3703, 7
      %v3705 = vsub.s32 4, %v3704
      %v3706 = vrot.slane %v1162, %v3705
      %v3707 = vmul.f32 %v1134, %v3706
      %v3708 = vmul.f32 %v1135, %v3706
      %v3709 = vmul.f32 %v1136, %v3706
      %v3710 = vmul.f32 %v1137, %v3706
      %v3711 = vmul.f32 %v1138, %v3706
      %v3712 = vmul.f32 %v1139, %v3706
      %v3713 = vmul.f32 %v1140, %v3706
      %v3714 = vmul.f32 %v1141, %v3706
      %v3715 = vmul.f32 %v1142, %v3706
      %v3716 = vmul.f32 %v1143, %v3706
      %v3717 = vmul.f32 %v1144, %v3706
      %v3718 = vmul.f32 %v1145, %v3706
      %v3719 = vmul.f32 %v1146, %v3706
      %v3720 = vmul.f32 %v1147, %v3706
      %v3721 = vmul.f32 %v1148, %v3706
      %v3722 = vmul.f32 %v1149, %v3706
      %v3723 = vmul.f32 %v1150, %v3706
      %v3724 = vmul.f32 %v1151, %v3706
      %v3725 = vmul.f32 %v1152, %v3706
      %v3726 = vmul.f32 %v1153, %v3706
      %v3727 = vmul.f32 %v1154, %v3706
      %v3728 = vmul.f32 %v1155, %v3706
      %v3729 = vmul.f32 %v1156, %v3706
      %v3730 = vmul.f32 %v1157, %v3706
      %v3755 = vrot.slane %v3707, 4
      %v3756 = vrot.slane %v3708, 4
      %v3757 = vsel %vm530, %v3755, %v3756
      %v3758 = vrot.slane %v3709, 4
      %v3759 = vsel %vm530, %v3756, %v3758
      %v3760 = vrot.slane %v3710, 4
      %v3761 = vrot.slane %v3711, 4
      %v3762 = vsel %vm530, %v3760, %v3761
      %v3763 = vrot.slane %v3712, 4
      %v3764 = vsel %vm530, %v3761, %v3763
      %v3765 = vrot.slane %v3713, 4
      %v3766 = vrot.slane %v3714, 4
      %v3767 = vsel %vm530, %v3765, %v3766
      %v3768 = vrot.slane %v3715, 4
      %v3769 = vsel %vm530, %v3766, %v3768
      %v3770 = vrot.slane %v3716, 4
      %v3771 = vrot.slane %v3717, 4
      %v3772 = vsel %vm530, %v3770, %v3771
      %v3773 = vrot.slane %v3718, 4
      %v3774 = vsel %vm530, %v3771, %v3773
      %v3775 = vrot.slane %v3719, 4
      %v3776 = vrot.slane %v3720, 4
      %v3777 = vsel %vm530, %v3775, %v3776
      %v3778 = vrot.slane %v3721, 4
      %v3779 = vsel %vm530, %v3776, %v3778
      %v3780 = vrot.slane %v3722, 4
      %v3781 = vrot.slane %v3723, 4
      %v3782 = vsel %vm530, %v3780, %v3781
      %v3783 = vrot.slane %v3724, 4
      %v3784 = vsel %vm530, %v3781, %v3783
      %v3785 = vrot.slane %v3725, 4
      %v3786 = vrot.slane %v3726, 4
      %v3787 = vsel %vm530, %v3785, %v3786
      %v3788 = vrot.slane %v3727, 4
      %v3789 = vsel %vm530, %v3786, %v3788
      %v3790 = vrot.slane %v3728, 4
      %v3791 = vrot.slane %v3729, 4
      %v3792 = vsel %vm530, %v3790, %v3791
      %v3793 = vrot.slane %v3730, 4
      %v3794 = vsel %vm530, %v3791, %v3793
      %v3811 = vadd.f32 %v3687, %v3757
      %v3812 = vadd.f32 %v3688, %v3759
      %v3813 = vadd.f32 %v3689, %v3762
      %v3814 = vadd.f32 %v3690, %v3764
      %v3815 = vadd.f32 %v3691, %v3767
      %v3816 = vadd.f32 %v3692, %v3769
      %v3817 = vadd.f32 %v3693, %v3772
      %v3818 = vadd.f32 %v3694, %v3774
      %v3819 = vadd.f32 %v3695, %v3777
      %v3820 = vadd.f32 %v3696, %v3779
      %v3821 = vadd.f32 %v3697, %v3782
      %v3822 = vadd.f32 %v3698, %v3784
      %v3823 = vadd.f32 %v3699, %v3787
      %v3824 = vadd.f32 %v3700, %v3789
      %v3825 = vadd.f32 %v3701, %v3792
      %v3826 = vadd.f32 %v3702, %v3794
      %v3828 = vlaneseq
      %v3829 = vshrl.u32 %v3828, 7
      %v3830 = vsub.s32 0, %v3829
      %v3831 = vrot.slane %v1163, %v3830
      %v3833 = vadd.f32 %v3811, %v3831
      %v3834 = vadd.f32 %v3812, %v3831
      %v3835 = vadd.f32 %v3813, %v3831
      %v3836 = vadd.f32 %v3814, %v3831
      %v3837 = vadd.f32 %v3815, %v3831
      %v3838 = vadd.f32 %v3816, %v3831
      %v3839 = vadd.f32 %v3817, %v3831
      %v3840 = vadd.f32 %v3818, %v3831
      %v3841 = vadd.f32 %v3819, %v3831
      %v3842 = vadd.f32 %v3820, %v3831
      %v3843 = vadd.f32 %v3821, %v3831
      %v3844 = vadd.f32 %v3822, %v3831
      %v3845 = vadd.f32 %v3823, %v3831
      %v3846 = vadd.f32 %v3824, %v3831
      %v3847 = vadd.f32 %v3825, %v3831
      %v3848 = vadd.f32 %v3826, %v3831
      %v3849 = vxor.u32 %v3833, 2147483648
      %v3850 = vxor.u32 %v3834, 2147483648
      %v3851 = vxor.u32 %v3835, 2147483648
      %v3852 = vxor.u32 %v3836, 2147483648
      %v3853 = vxor.u32 %v3837, 2147483648
      %v3854 = vxor.u32 %v3838, 2147483648
      %v3855 = vxor.u32 %v3839, 2147483648
      %v3856 = vxor.u32 %v3840, 2147483648
      %v3857 = vxor.u32 %v3841, 2147483648
      %v3858 = vxor.u32 %v3842, 2147483648
      %v3859 = vxor.u32 %v3843, 2147483648
      %v3860 = vxor.u32 %v3844, 2147483648
      %v3861 = vxor.u32 %v3845, 2147483648
      %v3862 = vxor.u32 %v3846, 2147483648
      %v3863 = vxor.u32 %v3847, 2147483648
      %v3864 = vxor.u32 %v3848, 2147483648
      %v3865 = vmul.f32 %v3849, 1.442695
      %v3866 = vpow.pop %v3865
      %v3867 = vmul.f32 %v3850, 1.442695
      %v3868 = vpow.pop %v3867
      %v3869 = vmul.f32 %v3851, 1.442695
      %v3870 = vpow.pop %v3869
      %v3871 = vmul.f32 %v3852, 1.442695
      %v3872 = vpow.pop %v3871
      %v3873 = vmul.f32 %v3853, 1.442695
      %v3874 = vpow.pop %v3873
      %v3875 = vmul.f32 %v3854, 1.442695
      %v3876 = vpow.pop %v3875
      %v3877 = vmul.f32 %v3855, 1.442695
      %v3878 = vpow.pop %v3877
      %v3879 = vmul.f32 %v3856, 1.442695
      %v3880 = vpow.pop %v3879
      %v3881 = vmul.f32 %v3857, 1.442695
      %v3882 = vpow.pop %v3881
      %v3883 = vmul.f32 %v3858, 1.442695
      %v3884 = vpow.pop %v3883
      %v3885 = vmul.f32 %v3859, 1.442695
      %v3886 = vpow.pop %v3885
      %v3887 = vmul.f32 %v3860, 1.442695
      %v3888 = vpow.pop %v3887
      %v3889 = vmul.f32 %v3861, 1.442695
      %v3890 = vpow.pop %v3889
      %v3891 = vmul.f32 %v3862, 1.442695
      %v3892 = vpow.pop %v3891
      %v3893 = vmul.f32 %v3863, 1.442695
      %v3894 = vpow.pop %v3893
      %v3895 = vmul.f32 %v3864, 1.442695
      %v3896 = vpow.pop %v3895
      %v3897 = vadd.f32 %v3866, 1.0
      %v3898 = vadd.f32 %v3868, 1.0
      %v3899 = vadd.f32 %v3870, 1.0
      %v3900 = vadd.f32 %v3872, 1.0
      %v3901 = vadd.f32 %v3874, 1.0
      %v3902 = vadd.f32 %v3876, 1.0
      %v3903 = vadd.f32 %v3878, 1.0
      %v3904 = vadd.f32 %v3880, 1.0
      %v3905 = vadd.f32 %v3882, 1.0
      %v3906 = vadd.f32 %v3884, 1.0
      %v3907 = vadd.f32 %v3886, 1.0
      %v3908 = vadd.f32 %v3888, 1.0
      %v3909 = vadd.f32 %v3890, 1.0
      %v3910 = vadd.f32 %v3892, 1.0
      %v3911 = vadd.f32 %v3894, 1.0
      %v3912 = vadd.f32 %v3896, 1.0
      %v3913 = vrcp.pop %v3897
      %v3914 = vmul.f32 1.0, %v3913
      %v3915 = vrcp.pop %v3898
      %v3916 = vmul.f32 1.0, %v3915
      %v3917 = vrcp.pop %v3899
      %v3918 = vmul.f32 1.0, %v3917
      %v3919 = vrcp.pop %v3900
      %v3920 = vmul.f32 1.0, %v3919
      %v3921 = vrcp.pop %v3901
      %v3922 = vmul.f32 1.0, %v3921
      %v3923 = vrcp.pop %v3902
      %v3924 = vmul.f32 1.0, %v3923
      %v3925 = vrcp.pop %v3903
      %v3926 = vmul.f32 1.0, %v3925
      %v3927 = vrcp.pop %v3904
      %v3928 = vmul.f32 1.0, %v3927
      %v3929 = vrcp.pop %v3905
      %v3930 = vmul.f32 1.0, %v3929
      %v3931 = vrcp.pop %v3906
      %v3932 = vmul.f32 1.0, %v3931
      %v3933 = vrcp.pop %v3907
      %v3934 = vmul.f32 1.0, %v3933
      %v3935 = vrcp.pop %v3908
      %v3936 = vmul.f32 1.0, %v3935
      %v3937 = vrcp.pop %v3909
      %v3938 = vmul.f32 1.0, %v3937
      %v3939 = vrcp.pop %v3910
      %v3940 = vmul.f32 1.0, %v3939
      %v3941 = vrcp.pop %v3911
      %v3942 = vmul.f32 1.0, %v3941
      %v3943 = vrcp.pop %v3912
      %v3944 = vmul.f32 1.0, %v3943
      %v3945 = vmul.f32 %v3833, %v3914
      %v3946 = vmul.f32 %v3834, %v3916
      %v3947 = vmul.f32 %v3835, %v3918
      %v3948 = vmul.f32 %v3836, %v3920
      %v3949 = vmul.f32 %v3837, %v3922
      %v3950 = vmul.f32 %v3838, %v3924
      %v3951 = vmul.f32 %v3839, %v3926
      %v3952 = vmul.f32 %v3840, %v3928
      %v3953 = vmul.f32 %v3841, %v3930
      %v3954 = vmul.f32 %v3842, %v3932
      %v3955 = vmul.f32 %v3843, %v3934
      %v3956 = vmul.f32 %v3844, %v3936
      %v3957 = vmul.f32 %v3845, %v3938
      %v3958 = vmul.f32 %v3846, %v3940
      %v3959 = vmul.f32 %v3847, %v3942
      %v3960 = vmul.f32 %v3848, %v3944
      %vm3961 = vcmask 15360
      %3962 = vst.msk [vmem:[%s455] sm:$0xff] %vm3961, %v775
      %3963 = vst.msk [vmem:[%s455 + $0x8] sm:$0xff] %vm3961, %v776
      %3964 = vst.msk [vmem:[%s455 + $0x10] sm:$0xff] %vm3961, %v777
      %3965 = vst.msk [vmem:[%s455 + $0x18] sm:$0xff] %vm3961, %v778
      %3966 = vst.msk [vmem:[%s455 + $0x20] sm:$0xff] %vm3961, %v779
      %3967 = vst.msk [vmem:[%s455 + $0x28] sm:$0xff] %vm3961, %v780
      %3968 = vst.msk [vmem:[%s455 + $0x30] sm:$0xff] %vm3961, %v781
      %3969 = vst.msk [vmem:[%s455 + $0x38] sm:$0xff] %vm3961, %v782
      %3970 = vst.msk [vmem:[%s455 + $0x40] sm:$0xff] %vm3961, %v783
      %3971 = vst.msk [vmem:[%s455 + $0x48] sm:$0xff] %vm3961, %v784
      %3972 = vst.msk [vmem:[%s455 + $0x50] sm:$0xff] %vm3961, %v785
      %3973 = vst.msk [vmem:[%s455 + $0x58] sm:$0xff] %vm3961, %v786
      %3974 = vst.msk [vmem:[%s455 + $0x60] sm:$0xff] %vm3961, %v787
      %3975 = vst.msk [vmem:[%s455 + $0x68] sm:$0xff] %vm3961, %v788
      %3976 = vst.msk [vmem:[%s455 + $0x70] sm:$0xff] %vm3961, %v789
      %3977 = vst.msk [vmem:[%s455 + $0x78] sm:$0xff] %vm3961, %v790
      %3994 = vrot.lane.b32.xlu0 %v3945, 2
      %v3995 = vpop.permute.xlu0 %3994
      %3996 = vrot.lane.b32.xlu0 %v3946, 2
      %v3997 = vpop.permute.xlu0 %3996
      %3998 = vrot.lane.b32.xlu0 %v3947, 2
      %v3999 = vpop.permute.xlu0 %3998
      %4000 = vrot.lane.b32.xlu0 %v3948, 2
      %v4001 = vpop.permute.xlu0 %4000
      %4002 = vrot.lane.b32.xlu0 %v3949, 2
      %v4003 = vpop.permute.xlu0 %4002
      %4004 = vrot.lane.b32.xlu0 %v3950, 2
      %v4005 = vpop.permute.xlu0 %4004
      %4006 = vrot.lane.b32.xlu0 %v3951, 2
      %v4007 = vpop.permute.xlu0 %4006
      %4008 = vrot.lane.b32.xlu0 %v3952, 2
      %v4009 = vpop.permute.xlu0 %4008
      %4010 = vrot.lane.b32.xlu0 %v3953, 2
      %v4011 = vpop.permute.xlu0 %4010
      %4012 = vrot.lane.b32.xlu0 %v3954, 2
      %v4013 = vpop.permute.xlu0 %4012
      %4014 = vrot.lane.b32.xlu0 %v3955, 2
      %v4015 = vpop.permute.xlu0 %4014
      %4016 = vrot.lane.b32.xlu0 %v3956, 2
      %v4017 = vpop.permute.xlu0 %4016
      %4018 = vrot.lane.b32.xlu0 %v3957, 2
      %v4019 = vpop.permute.xlu0 %4018
      %4020 = vrot.lane.b32.xlu0 %v3958, 2
      %v4021 = vpop.permute.xlu0 %4020
      %4022 = vrot.lane.b32.xlu0 %v3959, 2
      %v4023 = vpop.permute.xlu0 %4022
      %4024 = vrot.lane.b32.xlu0 %v3960, 2
      %v4025 = vpop.permute.xlu0 %4024
      %vm4042 = vcmask 31760
      %4043 = vst.msk [vmem:[%s455] sm:$0xff] %vm4042, %v3995
      %4044 = vst.msk [vmem:[%s455 + $0x8] sm:$0xff] %vm4042, %v3997
      %4045 = vst.msk [vmem:[%s455 + $0x10] sm:$0xff] %vm4042, %v3999
      %4046 = vst.msk [vmem:[%s455 + $0x18] sm:$0xff] %vm4042, %v4001
      %4047 = vst.msk [vmem:[%s455 + $0x20] sm:$0xff] %vm4042, %v4003
      %4048 = vst.msk [vmem:[%s455 + $0x28] sm:$0xff] %vm4042, %v4005
      %4049 = vst.msk [vmem:[%s455 + $0x30] sm:$0xff] %vm4042, %v4007
      %4050 = vst.msk [vmem:[%s455 + $0x38] sm:$0xff] %vm4042, %v4009
      %4051 = vst.msk [vmem:[%s455 + $0x40] sm:$0xff] %vm4042, %v4011
      %4052 = vst.msk [vmem:[%s455 + $0x48] sm:$0xff] %vm4042, %v4013
      %4053 = vst.msk [vmem:[%s455 + $0x50] sm:$0xff] %vm4042, %v4015
      %4054 = vst.msk [vmem:[%s455 + $0x58] sm:$0xff] %vm4042, %v4017
      %4055 = vst.msk [vmem:[%s455 + $0x60] sm:$0xff] %vm4042, %v4019
      %4056 = vst.msk [vmem:[%s455 + $0x68] sm:$0xff] %vm4042, %v4021
      %4057 = vst.msk [vmem:[%s455 + $0x70] sm:$0xff] %vm4042, %v4023
      %4058 = vst.msk [vmem:[%s455 + $0x78] sm:$0xff] %vm4042, %v4025
      %4075 = vrot.lane.b32.xlu0 %v775, 2
      %v4076 = vpop.permute.xlu0 %4075
      %4077 = vrot.lane.b32.xlu0 %v776, 2
      %v4078 = vpop.permute.xlu0 %4077
      %4079 = vrot.lane.b32.xlu0 %v777, 2
      %v4080 = vpop.permute.xlu0 %4079
      %4081 = vrot.lane.b32.xlu0 %v778, 2
      %v4082 = vpop.permute.xlu0 %4081
      %4083 = vrot.lane.b32.xlu0 %v779, 2
      %v4084 = vpop.permute.xlu0 %4083
      %4085 = vrot.lane.b32.xlu0 %v780, 2
      %v4086 = vpop.permute.xlu0 %4085
      %4087 = vrot.lane.b32.xlu0 %v781, 2
      %v4088 = vpop.permute.xlu0 %4087
      %4089 = vrot.lane.b32.xlu0 %v782, 2
      %v4090 = vpop.permute.xlu0 %4089
      %4091 = vrot.lane.b32.xlu0 %v783, 2
      %v4092 = vpop.permute.xlu0 %4091
      %4093 = vrot.lane.b32.xlu0 %v784, 2
      %v4094 = vpop.permute.xlu0 %4093
      %4095 = vrot.lane.b32.xlu0 %v785, 2
      %v4096 = vpop.permute.xlu0 %4095
      %4097 = vrot.lane.b32.xlu0 %v786, 2
      %v4098 = vpop.permute.xlu0 %4097
      %4099 = vrot.lane.b32.xlu0 %v787, 2
      %v4100 = vpop.permute.xlu0 %4099
      %4101 = vrot.lane.b32.xlu0 %v788, 2
      %v4102 = vpop.permute.xlu0 %4101
      %4103 = vrot.lane.b32.xlu0 %v789, 2
      %v4104 = vpop.permute.xlu0 %4103
      %4105 = vrot.lane.b32.xlu0 %v790, 2
      %v4106 = vpop.permute.xlu0 %4105
      %vm4123 = vcmask 48160
      %4124 = vst.msk [vmem:[%s455] sm:$0xff] %vm4123, %v4076
      %4125 = vst.msk [vmem:[%s455 + $0x8] sm:$0xff] %vm4123, %v4078
      %4126 = vst.msk [vmem:[%s455 + $0x10] sm:$0xff] %vm4123, %v4080
      %4127 = vst.msk [vmem:[%s455 + $0x18] sm:$0xff] %vm4123, %v4082
      %4128 = vst.msk [vmem:[%s455 + $0x20] sm:$0xff] %vm4123, %v4084
      %4129 = vst.msk [vmem:[%s455 + $0x28] sm:$0xff] %vm4123, %v4086
      %4130 = vst.msk [vmem:[%s455 + $0x30] sm:$0xff] %vm4123, %v4088
      %4131 = vst.msk [vmem:[%s455 + $0x38] sm:$0xff] %vm4123, %v4090
      %4132 = vst.msk [vmem:[%s455 + $0x40] sm:$0xff] %vm4123, %v4092
      %4133 = vst.msk [vmem:[%s455 + $0x48] sm:$0xff] %vm4123, %v4094
      %4134 = vst.msk [vmem:[%s455 + $0x50] sm:$0xff] %vm4123, %v4096
      %4135 = vst.msk [vmem:[%s455 + $0x58] sm:$0xff] %vm4123, %v4098
      %4136 = vst.msk [vmem:[%s455 + $0x60] sm:$0xff] %vm4123, %v4100
      %4137 = vst.msk [vmem:[%s455 + $0x68] sm:$0xff] %vm4123, %v4102
      %4138 = vst.msk [vmem:[%s455 + $0x70] sm:$0xff] %vm4123, %v4104
      %4139 = vst.msk [vmem:[%s455 + $0x78] sm:$0xff] %vm4123, %v4106
      %4140 = vrot.lane.b32.xlu0 %v3945, 4
      %v4141 = vpop.permute.xlu0 %4140
      %4142 = vrot.lane.b32.xlu0 %v3946, 4
      %v4143 = vpop.permute.xlu0 %4142
      %4144 = vrot.lane.b32.xlu0 %v3947, 4
      %v4145 = vpop.permute.xlu0 %4144
      %4146 = vrot.lane.b32.xlu0 %v3948, 4
      %v4147 = vpop.permute.xlu0 %4146
      %4148 = vrot.lane.b32.xlu0 %v3949, 4
      %v4149 = vpop.permute.xlu0 %4148
      %4150 = vrot.lane.b32.xlu0 %v3950, 4
      %v4151 = vpop.permute.xlu0 %4150
      %4152 = vrot.lane.b32.xlu0 %v3951, 4
      %v4153 = vpop.permute.xlu0 %4152
      %4154 = vrot.lane.b32.xlu0 %v3952, 4
      %v4155 = vpop.permute.xlu0 %4154
      %4156 = vrot.lane.b32.xlu0 %v3953, 4
      %v4157 = vpop.permute.xlu0 %4156
      %4158 = vrot.lane.b32.xlu0 %v3954, 4
      %v4159 = vpop.permute.xlu0 %4158
      %4160 = vrot.lane.b32.xlu0 %v3955, 4
      %v4161 = vpop.permute.xlu0 %4160
      %4162 = vrot.lane.b32.xlu0 %v3956, 4
      %v4163 = vpop.permute.xlu0 %4162
      %4164 = vrot.lane.b32.xlu0 %v3957, 4
      %v4165 = vpop.permute.xlu0 %4164
      %4166 = vrot.lane.b32.xlu0 %v3958, 4
      %v4167 = vpop.permute.xlu0 %4166
      %4168 = vrot.lane.b32.xlu0 %v3959, 4
      %v4169 = vpop.permute.xlu0 %4168
      %4170 = vrot.lane.b32.xlu0 %v3960, 4
      %v4171 = vpop.permute.xlu0 %4170
      %vm4188 = vcmask 64560
      %4189 = vst.msk [vmem:[%s455] sm:$0xff] %vm4188, %v4141
      %4190 = vst.msk [vmem:[%s455 + $0x8] sm:$0xff] %vm4188, %v4143
      %4191 = vst.msk [vmem:[%s455 + $0x10] sm:$0xff] %vm4188, %v4145
      %4192 = vst.msk [vmem:[%s455 + $0x18] sm:$0xff] %vm4188, %v4147
      %4193 = vst.msk [vmem:[%s455 + $0x20] sm:$0xff] %vm4188, %v4149
      %4194 = vst.msk [vmem:[%s455 + $0x28] sm:$0xff] %vm4188, %v4151
      %4195 = vst.msk [vmem:[%s455 + $0x30] sm:$0xff] %vm4188, %v4153
      %4196 = vst.msk [vmem:[%s455 + $0x38] sm:$0xff] %vm4188, %v4155
      %4197 = vst.msk [vmem:[%s455 + $0x40] sm:$0xff] %vm4188, %v4157
      %4198 = vst.msk [vmem:[%s455 + $0x48] sm:$0xff] %vm4188, %v4159
      %4199 = vst.msk [vmem:[%s455 + $0x50] sm:$0xff] %vm4188, %v4161
      %4200 = vst.msk [vmem:[%s455 + $0x58] sm:$0xff] %vm4188, %v4163
      %4201 = vst.msk [vmem:[%s455 + $0x60] sm:$0xff] %vm4188, %v4165
      %4202 = vst.msk [vmem:[%s455 + $0x68] sm:$0xff] %vm4188, %v4167
      %4203 = vst.msk [vmem:[%s455 + $0x70] sm:$0xff] %vm4188, %v4169
      %4204 = vst.msk [vmem:[%s455 + $0x78] sm:$0xff] %vm4188, %v4171
      %s4205 = smul.u32 8, %s23
      %p4206 = scmp.lt.s32.totalorder %s22, 1
      %s4207 = scalar_select %p4206, %s22, 1
      %p4208 = scmp.lt.s32.totalorder %s4205, 15
      %s4209 = scalar_select %p4208, %s4205, 15
      %s4210 = smul.addr %s4209, 2
      %s4211 = smul.addr %s4207, 32
      %s4212 = sadd.s32 %s4210, %s4211
      %s4213 = smul.addr %s4212, 8
      %s4214 = scalar_lea.vmem %s7, %s4213
      // Predicated region
      $region57: #{tpu_custom_call.1} parent=47 // pred_check
        %p4215 = pneg %p234
      $region58: #{tpu_custom_call.1} parent=47 // pred_check_branch
        %4217 = sbr.rel (%p4215) target = $region60
      $region59: #{tpu_custom_call.1} parent=47 // pred_region
        %s4218 = smul.u32 8, %s23
      $region60: #{tpu_custom_call.1} parent=47 // pred_fallthru
        _
    $region48: #{tpu_custom_call.1} parent=5 // pred_fallthru
      _
    %p4219 = scmp.le.s32.totalorder 2, %s13
    // Predicated region
    $region61: #{tpu_custom_call.1} parent=5 // pred_check
      %p4220 = pneg %p4219
    $region62: #{tpu_custom_call.1} parent=5 // pred_check_branch
      %4222 = sbr.rel (%p4220) target = $region64
    $region63: #{tpu_custom_call.1} parent=5 // pred_region
      %s4223 = ssub.s32 %s13, 2
      // Predicated region
      $region65: #{tpu_custom_call.1} parent=63 // pred_check
        %p4224 = pneg %p240
      $region66: #{tpu_custom_call.1} parent=63 // pred_check_branch
        %4226 = sbr.rel (%p4224) target = $region68
      $region67: #{tpu_custom_call.1} parent=63 // pred_region
        %s4227 = smul.u32 8, %s25
        %p4228 = scmp.lt.s32.totalorder %s24, 1
        %s4229 = scalar_select %p4228, %s24, 1
        %p4230 = scmp.lt.s32.totalorder %s4227, 15
        %s4231 = scalar_select %p4230, %s4227, 15
        %s4232 = smul.addr %s4231, 2
        %s4233 = smul.addr %s4229, 32
        %s4234 = sadd.s32 %s4232, %s4233
        %s4235 = smul.addr %s4234, 8
        %s4236 = scalar_lea.vmem %s7, %s4235
      $region68: #{tpu_custom_call.1} parent=63 // pred_fallthru
        _
    $region64: #{tpu_custom_call.1} parent=5 // pred_fallthru
      _
  $region6: #{tpu_custom_call.1} parent=0 // loop_footer
    %s17 = sadd.s32 1, %s13
  $region7: #{tpu_custom_call.1} parent=0 // loop_footer_branch
    %12 = sbr.rel target = $region3
  $region8: #{tpu_custom_call.1} parent=0 // loop_exit
    _

</llo_original>
